<compile_context>
chip_gen: v7x
topology: tpu7x:2x2x1
jax: 0.10.0
libtpu: 0.0.40
codegen_flags: <defaults>
</compile_context>

<pallas_src>
import functools

import jax
import jax.numpy as jnp
from jax.experimental import pallas as pl
from jax.experimental.pallas import tpu as pltpu


def _s2c_kernel(re_ref, im_ref, ore_ref, oim_ref, *, kf, d, center):
    """One (TM, N) row-tile: Fout = Fin * exp(i * kf * (X^2 + Y^2)).

    Separable form:
      cos(a+b) = cos(a)cos(b) - sin(a)sin(b)
      sin(a+b) = sin(a)cos(b) + cos(a)sin(b)
    with a = kf*Y^2 (per row, (TM,1)) and b = kf*X^2 (per column, (1,N)), so
    only O(TM + N) transcendentals are issued per tile; the (TM, N) plane work
    is pure VPU broadcast mul/add.
    """
    tm, n = re_ref.shape
    i = pl.program_id(0)                       # row-tile index (grid = (tiles, B))

    # Narrow coordinate vectors (match torch.meshgrid(..., indexing='ij')).
    row = jax.lax.broadcasted_iota(jnp.int32, (tm, 1), 0) + i * tm   # Y index
    col = jax.lax.broadcasted_iota(jnp.int32, (1, n), 1)             # X index
    y = (row.astype(jnp.float32) - center) * d           # (TM, 1)
    x = (col.astype(jnp.float32) - center) * d            # (1, N)

    ph_y = kf * (y * y)                                    # (TM, 1)
    ph_x = kf * (x * x)                                    # (1, N)
    cos_y, sin_y = jnp.cos(ph_y), jnp.sin(ph_y)
    cos_x, sin_x = jnp.cos(ph_x), jnp.sin(ph_x)

    # Full-tile phase factors via broadcasts (VPU only, no plane-wide EUP work).
    c = cos_y * cos_x - sin_y * sin_x                      # cos(Fi), (TM, N)
    s = sin_y * cos_x + cos_y * sin_x                      # sin(Fi), (TM, N)

    re = re_ref[...]
    im = im_ref[...]
    # (re + i*im) * (c + i*s)
    ore_ref[...] = re * c - im * s
    oim_ref[...] = re * s + im * c


def _round_down8(x):
    return max((x // 8) * 8, 8)


def _round_up8(x):
    return -(-x // 8) * 8


def _pick_tile_rows(n, batch, budget_bytes=22 << 20, min_dma_bytes=256 << 10,
                    min_steps=8):
    """Pick TM (row-tile height).

    Constraints / goals:
      * double-buffered footprint of 4 f32 planes (2 in + 2 out) stays under
        `budget_bytes` (safe w.r.t. the 32 MiB vmem_limit on every generation),
      * >= ceil(min_steps / batch) row tiles so megacore (v7x) and the
        double-buffer pipeline stay busy even at B == 1,
      * each per-plane DMA >= ~min_dma_bytes when the plane allows it,
      * TM is a multiple of 8 (or the full plane height) -- the lane dim is
        always the full array width, so any N is legal; ragged last tiles are
        masked by Pallas via pl.cdiv grids.
    """
    plane_rows = _round_up8(n)
    # VMEM ceiling: 4 f32 planes, double-buffered by the pipeline.
    cap = min(_round_down8(budget_bytes // (4 * 2 * n * 4)), plane_rows)
    # Enough grid steps for megacore + pipelining, mostly matters at B == 1.
    want_tiles = max(-(-min_steps // batch), 1)
    tm = _round_down8(n // want_tiles) if n >= 8 * want_tiles else 8
    # Keep each per-plane DMA reasonably large when the plane allows it.
    dma_rows = _round_up8(-(-min_dma_bytes // (n * 4)))
    tm = max(tm, min(dma_rows, plane_rows))
    tm = max(min(tm, cap), 8)
    if tm >= n:
        tm = n          # full plane: always a legal block (equals the array dim)
    return tm


def spherer2cartesian_planar(re, im, gridsize, curvature, wavelength):
    """Planar-f32 fast path (recommended interface for the enclosing pipeline).

    re, im: float32 arrays of shape (B, N, N) or (N, N) -- the real/imag planes.
    Returns (re_out, im_out, gridsize, curvature).  No complex<->planar HBM
    round trips are performed.
    """
    if curvature == 0.0:
        return re, im, gridsize, curvature

    squeeze = False
    if re.ndim == 2:
        re, im = re[None], im[None]
        squeeze = True
    B, H, N = re.shape
    assert H == N, "Spherer2Cartesian assumes a square field (N x N)."

    f = -1.0 / float(curvature)
    k = 2.0 * float(jnp.pi) / float(wavelength)
    kf = float(k / (2.0 * f))
    d = float(gridsize) / N
    center = float(N // 2)

    tm = _pick_tile_rows(N, B)
    n_row_tiles = pl.cdiv(N, tm)

    kernel = functools.partial(_s2c_kernel, kf=kf, d=d, center=center)

    # Row tiles keep the lane dim at full width N (lane-dense stores, legal for
    # any N); the row-tile axis leads the grid so it is the core-sharded axis
    # when B == 1.
    spec = pl.BlockSpec((None, tm, N), lambda i, b: (b, i, 0))

    cost = pl.CostEstimate(
        flops=12 * B * N * N,                              # VPU mul/adds per element
        transcendentals=4 * B * n_row_tiles * (tm + N),    # separable cos/sin
        bytes_accessed=16 * B * N * N,                     # 4 f32 planes
    )

    ore, oim = pl.pallas_call(
        kernel,
        grid=(n_row_tiles, B),
        in_specs=[spec, spec],
        out_specs=(spec, spec),
        out_shape=(
            jax.ShapeDtypeStruct((B, N, N), jnp.float32),
            jax.ShapeDtypeStruct((B, N, N), jnp.float32),
        ),
        input_output_aliases={0: 0, 1: 1},                 # re->ore, im->oim
        compiler_params=pltpu.CompilerParams(
            dimension_semantics=("parallel", "parallel"),
            vmem_limit_bytes=32 * 1024 * 1024,
        ),
        cost_estimate=cost,
    )(re, im)

    if squeeze:
        ore, oim = ore[0], oim[0]
    return ore, oim, gridsize, curvature


def spherer2cartesian(Fin, gridsize, curvature, wavelength):
    """Module-equivalent wrapper: complex64 in / complex64 out.

    Converts to/from planar f32 only at this boundary; use
    `spherer2cartesian_planar` directly inside a larger optics pipeline to
    avoid the extra HBM traffic of the split/join.
    """
    if curvature == 0.0:
        # Convert_forward returns just `field` for curvature==0 (which would break
        # the module's tuple unpack); we return the unmodified field consistently.
        return Fin, gridsize, curvature

    re = jnp.real(Fin).astype(jnp.float32)
    im = jnp.imag(Fin).astype(jnp.float32)
    ore, oim, size, curv = spherer2cartesian_planar(
        re, im, gridsize, curvature, wavelength)
    return jax.lax.complex(ore, oim), size, curv


def _reference(Fin, gridsize, curvature, wavelength):
    """Plain-JAX reference mirroring the PyTorch code (for sanity checking)."""
    N = Fin.shape[-1]
    f = -1.0 / curvature
    k = 2.0 * jnp.pi / wavelength
    kf = k / (2.0 * f)
    dx = dy = gridsize / N
    cy = cx = N // 2
    Y, X = jnp.meshgrid(jnp.arange(N), jnp.arange(N), indexing="ij")
    Y = (Y - cy) * dy
    X = (X - cx) * dx
    Fi = kf * (X * X + Y * Y)
    return (Fin * jnp.exp(1j * Fi.astype(jnp.float32))).astype(jnp.complex64)


if __name__ == "__main__":
    key = jax.random.PRNGKey(0)
    B, N = 2, 128
    k1, k2 = jax.random.split(key)
    re = jax.random.normal(k1, (B, N, N), dtype=jnp.float32)
    im = jax.random.normal(k2, (B, N, N), dtype=jnp.float32)
    Fin = (re + 1j * im).astype(jnp.complex64)

    wavelength = 1.064e-6   # typical laser wavelength [m]
    gridsize = 2.0e-3       # physical extent [m]
    curvature = 0.5         # 1/m

    ref = _reference(Fin, gridsize, curvature, wavelength)

    # Planar fast path (no complex<->planar conversion around the kernel).
    ore, oim, size_p, curv_p = spherer2cartesian_planar(
        re, im, gridsize, curvature, wavelength)
    ore, oim = jax.block_until_ready((ore, oim))
    assert jnp.allclose(ore, jnp.real(ref), atol=1e-4, rtol=1e-4), "planar re mismatch"
    assert jnp.allclose(oim, jnp.imag(ref), atol=1e-4, rtol=1e-4), "planar im mismatch"
    assert size_p == gridsize and curv_p == curvature

    # Module-equivalent complex-boundary wrapper.
    Fout, size_out, curv_out = spherer2cartesian(Fin, gridsize, curvature, wavelength)
    Fout = jax.block_until_ready(Fout)
    assert jnp.allclose(Fout, ref, atol=1e-4, rtol=1e-4), "mismatch vs reference"
    assert size_out == gridsize and curv_out == curvature

    print("KERNEL_OK")
</pallas_src>

<mosaic_0001>
module attributes {stable_mosaic.version = 11 : i64} {
  func.func @_s2c_kernel(%arg0: i32, %arg1: i32, %arg2: memref<1x128x128xf32, #tpu.memory_space<vmem>>, %arg3: memref<1x128x128xf32, #tpu.memory_space<vmem>>, %arg4: memref<1x128x128xf32, #tpu.memory_space<vmem>>, %arg5: memref<1x128x128xf32, #tpu.memory_space<vmem>>) attributes {dimension_semantics = [#tpu.dimension_semantics<parallel>, #tpu.dimension_semantics<parallel>], iteration_bounds = array<i64: 1, 2>, scalar_prefetch = 0 : i64, scratch_operands = 0 : i64, tpu.core_type = #tpu.core_type<tc>, window_params = [{transform_indices = @transform_0, window_bounds = array<i64: 1, 128, 128>}, {transform_indices = @transform_1, window_bounds = array<i64: 1, 128, 128>}, {transform_indices = @transform_2, window_bounds = array<i64: 1, 128, 128>}, {transform_indices = @transform_3, window_bounds = array<i64: 1, 128, 128>}]} {
    %0 = tpu.iota {dimensions = array<i32: 0>} : vector<128x1xi32>
    %c128_i32 = arith.constant 128 : i32
    %1 = arith.muli %arg0, %c128_i32 : i32
    %2 = vector.broadcast %1 : i32 to vector<128x1xi32>
    %3 = arith.addi %0, %2 : vector<128x1xi32>
    %4 = tpu.iota {dimensions = array<i32: 1>} : vector<1x128xi32>
    %5 = arith.sitofp %3 : vector<128x1xi32> to vector<128x1xf32>
    %cst = arith.constant 6.400000e+01 : f32
    %6 = vector.broadcast %cst : f32 to vector<128x1xf32>
    %7 = arith.subf %5, %6 : vector<128x1xf32>
    %cst_0 = arith.constant 1.562500e-05 : f32
    %8 = vector.broadcast %cst_0 : f32 to vector<128x1xf32>
    %9 = arith.mulf %7, %8 : vector<128x1xf32>
    %10 = arith.sitofp %4 : vector<1x128xi32> to vector<1x128xf32>
    %cst_1 = arith.constant 6.400000e+01 : f32
    %11 = vector.broadcast %cst_1 : f32 to vector<1x128xf32>
    %12 = arith.subf %10, %11 : vector<1x128xf32>
    %cst_2 = arith.constant 1.562500e-05 : f32
    %13 = vector.broadcast %cst_2 : f32 to vector<1x128xf32>
    %14 = arith.mulf %12, %13 : vector<1x128xf32>
    %15 = arith.mulf %9, %9 : vector<128x1xf32>
    %cst_3 = arith.constant -1476312.38 : f32
    %16 = vector.broadcast %cst_3 : f32 to vector<128x1xf32>
    %17 = arith.mulf %16, %15 : vector<128x1xf32>
    %18 = arith.mulf %14, %14 : vector<1x128xf32>
    %cst_4 = arith.constant -1476312.38 : f32
    %19 = vector.broadcast %cst_4 : f32 to vector<1x128xf32>
    %20 = arith.mulf %19, %18 : vector<1x128xf32>
    %21 = math.cos %17 : vector<128x1xf32>
    %22 = math.sin %17 : vector<128x1xf32>
    %23 = math.cos %20 : vector<1x128xf32>
    %24 = math.sin %20 : vector<1x128xf32>
    %25 = vector.broadcast %21 : vector<128x1xf32> to vector<128x128xf32>
    %26 = vector.broadcast %23 : vector<1x128xf32> to vector<128x128xf32>
    %27 = arith.mulf %25, %26 : vector<128x128xf32>
    %28 = vector.broadcast %22 : vector<128x1xf32> to vector<128x128xf32>
    %29 = vector.broadcast %24 : vector<1x128xf32> to vector<128x128xf32>
    %30 = arith.mulf %28, %29 : vector<128x128xf32>
    %31 = arith.subf %27, %30 : vector<128x128xf32>
    %32 = vector.broadcast %22 : vector<128x1xf32> to vector<128x128xf32>
    %33 = vector.broadcast %23 : vector<1x128xf32> to vector<128x128xf32>
    %34 = arith.mulf %32, %33 : vector<128x128xf32>
    %35 = vector.broadcast %21 : vector<128x1xf32> to vector<128x128xf32>
    %36 = vector.broadcast %24 : vector<1x128xf32> to vector<128x128xf32>
    %37 = arith.mulf %35, %36 : vector<128x128xf32>
    %38 = arith.addf %34, %37 : vector<128x128xf32>
    %c0 = arith.constant 0 : index
    %c0_5 = arith.constant 0 : index
    %c0_6 = arith.constant 0 : index
    %39 = vector.load %arg2[%c0, %c0_5, %c0_6] : memref<1x128x128xf32, #tpu.memory_space<vmem>>, vector<1x128x128xf32>
    %40 = vector.shape_cast %39 : vector<1x128x128xf32> to vector<128x128xf32>
    %c0_7 = arith.constant 0 : index
    %c0_8 = arith.constant 0 : index
    %c0_9 = arith.constant 0 : index
    %41 = vector.load %arg3[%c0_7, %c0_8, %c0_9] : memref<1x128x128xf32, #tpu.memory_space<vmem>>, vector<1x128x128xf32>
    %42 = vector.shape_cast %41 : vector<1x128x128xf32> to vector<128x128xf32>
    %43 = arith.mulf %40, %31 : vector<128x128xf32>
    %44 = arith.mulf %42, %38 : vector<128x128xf32>
    %45 = arith.subf %43, %44 : vector<128x128xf32>
    %c0_10 = arith.constant 0 : index
    %c0_11 = arith.constant 0 : index
    %c0_12 = arith.constant 0 : index
    %46 = vector.load %arg4[%c0_10, %c0_11, %c0_12] : memref<1x128x128xf32, #tpu.memory_space<vmem>>, vector<1x128x128xf32>
    %47 = vector.shape_cast %46 : vector<1x128x128xf32> to vector<128x128xf32>
    %48 = vector.shape_cast %45 : vector<128x128xf32> to vector<1x128x128xf32>
    tpu.vector_store %arg4[%c0_10, %c0_11, %c0_12], %48 {strides = array<i32>} : memref<1x128x128xf32, #tpu.memory_space<vmem>>, vector<1x128x128xf32>,
    %49 = arith.mulf %40, %38 : vector<128x128xf32>
    %50 = arith.mulf %42, %31 : vector<128x128xf32>
    %51 = arith.addf %49, %50 : vector<128x128xf32>
    %c0_13 = arith.constant 0 : index
    %c0_14 = arith.constant 0 : index
    %c0_15 = arith.constant 0 : index
    %52 = vector.load %arg5[%c0_13, %c0_14, %c0_15] : memref<1x128x128xf32, #tpu.memory_space<vmem>>, vector<1x128x128xf32>
    %53 = vector.shape_cast %52 : vector<1x128x128xf32> to vector<128x128xf32>
    %54 = vector.shape_cast %51 : vector<128x128xf32> to vector<1x128x128xf32>
    tpu.vector_store %arg5[%c0_13, %c0_14, %c0_15], %54 {strides = array<i32>} : memref<1x128x128xf32, #tpu.memory_space<vmem>>, vector<1x128x128xf32>,
    return
  }
  func.func @transform_0(%arg0: i32, %arg1: i32) -> (i32, i32, i32) {
    %c0_i32 = arith.constant 0 : i32
    %c0_i32_0 = arith.constant 0 : i32
    return %arg1, %arg0, %c0_i32 : i32, i32, i32
  }
  func.func @transform_1(%arg0: i32, %arg1: i32) -> (i32, i32, i32) {
    %c0_i32 = arith.constant 0 : i32
    %c0_i32_0 = arith.constant 0 : i32
    return %arg1, %arg0, %c0_i32 : i32, i32, i32
  }
  func.func @transform_2(%arg0: i32, %arg1: i32) -> (i32, i32, i32) {
    %c0_i32 = arith.constant 0 : i32
    %c0_i32_0 = arith.constant 0 : i32
    return %arg1, %arg0, %c0_i32 : i32, i32, i32
  }
  func.func @transform_3(%arg0: i32, %arg1: i32) -> (i32, i32, i32) {
    %c0_i32 = arith.constant 0 : i32
    %c0_i32_0 = arith.constant 0 : i32
    return %arg1, %arg0, %c0_i32 : i32, i32, i32
  }
}

</mosaic_0001>

<llo_original>
// kernel: tpu_custom_call.1
$region0: #{tpu_custom_call.1}
  #allocation0 [shape = 'u32[]', space=smem, size = 0x4, offset = 0x4, fixed_abs, tag = 'smem constant byte address 0x4 - core index']
  #allocation1 [shape = 'u32[144,128]{1,0:T(1,128)}', space=vmem, size = 0x12000, scoped, tag = 'internal scratch']
  %s0 = inlined_call_operand.hbm [shape: f32[2,128,128], index: 0, kind: input, shape index: {}, may-alias: {0,2}]
  %s1 = inlined_call_operand.hbm [shape: f32[2,128,128], index: 1, kind: input, shape index: {}, may-alias: {1,3}]
  %s2 = inlined_call_operand.hbm [shape: f32[2,128,128], index: 2, kind: output, shape index: {0}, may-alias: {0,2}]
  %s3 = inlined_call_operand.hbm [shape: f32[2,128,128], index: 3, kind: output, shape index: {1}, may-alias: {1,3}]
  %4 = xla_tuple %s2, %s3
  %s5 = sld [smem:[#allocation0]]
  $region57: #{tpu_custom_call.1} parent=0
    _
  %s7 = ssub.s32 1, %s5
  %s8 = scalar_select 0, %s7, %s5
  $region1: #{tpu_custom_call.1} parent=0
    #allocation2 [shape = 'u8[131072]{0}', space=vmem, size = 0x20000, scoped, tag = 'input window, operand 0']
    #allocation3 [shape = 's32[2]{0}', space=sflag, size = 0x8, scoped, tag = 'scoped memory for tpu_custom_call.1']
    #allocation4 [shape = 's32[2]{0}', space=sflag, size = 0x8, scoped, tag = 'scoped memory for tpu_custom_call.1']
    #allocation5 [shape = 'u8[131072]{0}', space=vmem, size = 0x20000, scoped, tag = 'input window, operand 1']
    #allocation6 [shape = 's32[2]{0}', space=sflag, size = 0x8, scoped, tag = 'scoped memory for tpu_custom_call.1']
    #allocation7 [shape = 'u8[131072]{0}', space=vmem, size = 0x20000, scoped, tag = 'output window, operand 0']
    #allocation8 [shape = 'u8[131072]{0}', space=vmem, size = 0x20000, scoped, tag = 'output window, operand 1']
    #allocation9 [shape = 's32[2]{0}', space=sflag, size = 0x8, scoped, tag = 'scoped memory for tpu_custom_call.1']
    %9 = vsyncpa [#allocation3], 0
    %s10 = scalar_lea.sflag [#allocation3], 1
    %11 = vsyncpa %s10, 0
    %12 = vsyncpa [#allocation6], 0
    %s13 = scalar_lea.sflag [#allocation6], 1
    %14 = vsyncpa %s13, 0
    %15 = vsyncpa [#allocation4], 0
    %s16 = scalar_lea.sflag [#allocation4], 1
    %17 = vsyncpa %s16, 0
    %18 = vsyncpa [#allocation9], 0
    %s19 = scalar_lea.sflag [#allocation9], 1
    %20 = vsyncpa %s19, 0
    loop: start=0, step=1, limit=4
    $region2: #{tpu_custom_call.1} parent=1 // loop_pre_header
      _
    $region3: #{tpu_custom_call.1} parent=1 // loop_header
      %s22 = sphi 0, %s26
      %p23 = scmp.ge.s32.totalorder %s22, 4
      %s29 = sphi 0, %s41
      %s30 = sphi 0, %s37
      %s31 = sphi 0, %s29
      %s32 = sphi 0, %s30
      %s33 = sphi 0, %s31
      %s34 = sphi 0, %s32
      %s46 = sphi 0, %s48
      %s49 = sphi 0, %s46
      %s50 = sphi 0, %s49
      %s66 = sphi 0, %s50
      %s74 = sphi 0, %s76
      %s77 = sphi 0, %s74
      %s78 = sphi 0, %s77
      %s94 = sphi 0, %s78
      %s102 = sphi 0, %s104
      %s105 = sphi 0, %s102
      %s106 = sphi 0, %s105
      %s122 = sphi 0, %s106
      %s130 = sphi 0, %s132
      %s133 = sphi 0, %s130
      %s134 = sphi 0, %s133
      %s150 = sphi 0, %s134
    $region4: #{tpu_custom_call.1} parent=1 // loop_header_branch
      %25 = sbr.rel (%p23) target = $region8
    $region5: #{tpu_custom_call.1} parent=1 // loop_body
      %s27 = ssub.s32 %s22, 1
      %s28 = ssub.s32 %s22, 2
      %s35 = sadd.s32 1, %s30
      %p36 = scmp.ge.s32.totalorder %s35, 2
      %s37 = scalar_select %p36, 0, %s35
      %s38 = sadd.s32 1, %s29
      %s39 = scalar_select %p36, %s38, %s29
      %p40 = scmp.ge.s32.totalorder %s39, 1
      %s41 = scalar_select %p40, 0, %s39
      %s42 = ssub.s32 %s30, %s37
      %s43 = ssub.s32 %s29, %s41
      %s44 = sor.u32 %s42, %s43
      %p45 = scmp.eq.s32.totalorder %s44, 0
      %s47 = sadd.s32 %s46, 1
      %s48 = scalar_select %p45, %s46, %s47
      %p51 = pneg %p45
      %p52 = scmp.eq.s32.totalorder %s22, 1
      %p53 = por %p51, %p52
      %p54 = scmp.ne.s32.totalorder %s46, %s49
      %p55 = scmp.eq.s32.totalorder %s22, 0
      %p56 = por %p54, %p55
      %p57 = scmp.ne.s32.totalorder %s46, %s49
      %p58 = scmp.eq.s32.totalorder %s27, 1
      %p59 = por %p57, %p58
      %p60 = scmp.ne.s32.totalorder %s49, %s50
      %p61 = scmp.eq.s32.totalorder %s27, 0
      %p62 = por %p60, %p61
      %p63 = scmp.ne.s32.totalorder %s49, %s50
      %p64 = scmp.eq.s32.totalorder %s28, 1
      %p65 = por %p63, %p64
      %p67 = scmp.ne.s32.totalorder %s50, %s66
      %p68 = scmp.eq.s32.totalorder %s28, 0
      %p69 = por %p67, %p68
      %s70 = ssub.s32 %s30, %s37
      %s71 = ssub.s32 %s29, %s41
      %s72 = sor.u32 %s70, %s71
      %p73 = scmp.eq.s32.totalorder %s72, 0
      %s75 = sadd.s32 %s74, 1
      %s76 = scalar_select %p73, %s74, %s75
      %p79 = pneg %p73
      %p80 = scmp.eq.s32.totalorder %s22, 1
      %p81 = por %p79, %p80
      %p82 = scmp.ne.s32.totalorder %s74, %s77
      %p83 = scmp.eq.s32.totalorder %s22, 0
      %p84 = por %p82, %p83
      %p85 = scmp.ne.s32.totalorder %s74, %s77
      %p86 = scmp.eq.s32.totalorder %s27, 1
      %p87 = por %p85, %p86
      %p88 = scmp.ne.s32.totalorder %s77, %s78
      %p89 = scmp.eq.s32.totalorder %s27, 0
      %p90 = por %p88, %p89
      %p91 = scmp.ne.s32.totalorder %s77, %s78
      %p92 = scmp.eq.s32.totalorder %s28, 1
      %p93 = por %p91, %p92
      %p95 = scmp.ne.s32.totalorder %s78, %s94
      %p96 = scmp.eq.s32.totalorder %s28, 0
      %p97 = por %p95, %p96
      %s98 = ssub.s32 %s30, %s37
      %s99 = ssub.s32 %s29, %s41
      %s100 = sor.u32 %s98, %s99
      %p101 = scmp.eq.s32.totalorder %s100, 0
      %s103 = sadd.s32 %s102, 1
      %s104 = scalar_select %p101, %s102, %s103
      %p107 = pneg %p101
      %p108 = scmp.eq.s32.totalorder %s22, 1
      %p109 = por %p107, %p108
      %p110 = scmp.ne.s32.totalorder %s102, %s105
      %p111 = scmp.eq.s32.totalorder %s22, 0
      %p112 = por %p110, %p111
      %p113 = scmp.ne.s32.totalorder %s102, %s105
      %p114 = scmp.eq.s32.totalorder %s27, 1
      %p115 = por %p113, %p114
      %p116 = scmp.ne.s32.totalorder %s105, %s106
      %p117 = scmp.eq.s32.totalorder %s27, 0
      %p118 = por %p116, %p117
      %p119 = scmp.ne.s32.totalorder %s105, %s106
      %p120 = scmp.eq.s32.totalorder %s28, 1
      %p121 = por %p119, %p120
      %p123 = scmp.ne.s32.totalorder %s106, %s122
      %p124 = scmp.eq.s32.totalorder %s28, 0
      %p125 = por %p123, %p124
      %s126 = ssub.s32 %s30, %s37
      %s127 = ssub.s32 %s29, %s41
      %s128 = sor.u32 %s126, %s127
      %p129 = scmp.eq.s32.totalorder %s128, 0
      %s131 = sadd.s32 %s130, 1
      %s132 = scalar_select %p129, %s130, %s131
      %p135 = pneg %p129
      %p136 = scmp.eq.s32.totalorder %s22, 1
      %p137 = por %p135, %p136
      %p138 = scmp.ne.s32.totalorder %s130, %s133
      %p139 = scmp.eq.s32.totalorder %s22, 0
      %p140 = por %p138, %p139
      %p141 = scmp.ne.s32.totalorder %s130, %s133
      %p142 = scmp.eq.s32.totalorder %s27, 1
      %p143 = por %p141, %p142
      %p144 = scmp.ne.s32.totalorder %s133, %s134
      %p145 = scmp.eq.s32.totalorder %s27, 0
      %p146 = por %p144, %p145
      %p147 = scmp.ne.s32.totalorder %s133, %s134
      %p148 = scmp.eq.s32.totalorder %s28, 1
      %p149 = por %p147, %p148
      %p151 = scmp.ne.s32.totalorder %s134, %s150
      %p152 = scmp.eq.s32.totalorder %s28, 0
      %p153 = por %p151, %p152
      %p154 = scmp.le.s32.totalorder 1, %s22
      %p155 = scmp.lt.s32.totalorder %s22, 3
      %p156 = pnand %p154, %p155
      %p157 = pneg %p156
      // Predicated region
      $region9: #{tpu_custom_call.1} parent=5 // pred_check
        _
      $region10: #{tpu_custom_call.1} parent=5 // pred_check_branch
        %159 = sbr.rel (%p156) target = $region12
      $region11: #{tpu_custom_call.1} parent=5 // pred_region
        %s160 = ssub.s32 %s22, 1
      $region12: #{tpu_custom_call.1} parent=5 // pred_fallthru
        _
      %p161 = scmp.lt.s32.totalorder %s22, 2
      // Predicated region
      $region13: #{tpu_custom_call.1} parent=5 // pred_check
        %p162 = pneg %p161
      $region14: #{tpu_custom_call.1} parent=5 // pred_check_branch
        %164 = sbr.rel (%p162) target = $region16
      $region15: #{tpu_custom_call.1} parent=5 // pred_region
        // Predicated region
        $region17: #{tpu_custom_call.1} parent=15 // pred_check
          %p165 = pneg %p56
        $region18: #{tpu_custom_call.1} parent=15 // pred_check_branch
          %167 = sbr.rel (%p165) target = $region20
        $region19: #{tpu_custom_call.1} parent=15 // pred_region
          %s168 = sand.u32 %s46, 1
          %s169 = scalar_lea.sflag [#allocation3], %s168
          %s170 = sand.u32 %s46, 1
          %s171 = smul.addr %s170, 128
          %s172 = scalar_lea.vmem [#allocation2], %s171
          %s173 = smul.u32 16, %s29
          %s175 = ssub.s32 2048, 2048
          %176 = vsyncadd %s169, %s175
          %s177 = smul.addr %s30, 16
          %s178 = sadd.s32 %s173, %s177
          %s179 = smul.addr %s178, 128
          %s180 = scalar_lea.hbm %s0, %s179
          %s181 = sshll.u32 %s172, 4
          %s182 = int_to_ptr.vmem [resolvable:$true] %s181
          %187 = dma.hbm_to_vmem [thread:$0]  %s180, 2048, %s182, %s169, 128, 128, 8
        $region20: #{tpu_custom_call.1} parent=15 // pred_fallthru
          _
        // Predicated region
        $region21: #{tpu_custom_call.1} parent=15 // pred_check
          %p188 = pneg %p84
        $region22: #{tpu_custom_call.1} parent=15 // pred_check_branch
          %190 = sbr.rel (%p188) target = $region24
        $region23: #{tpu_custom_call.1} parent=15 // pred_region
          %s191 = sand.u32 %s74, 1
          %s192 = scalar_lea.sflag [#allocation6], %s191
          %s193 = sand.u32 %s74, 1
          %s194 = smul.addr %s193, 128
          %s195 = scalar_lea.vmem [#allocation5], %s194
          %s196 = smul.u32 16, %s29
          %s198 = ssub.s32 2048, 2048
          %199 = vsyncadd %s192, %s198
          %s200 = smul.addr %s30, 16
          %s201 = sadd.s32 %s196, %s200
          %s202 = smul.addr %s201, 128
          %s203 = scalar_lea.hbm %s1, %s202
          %s204 = sshll.u32 %s195, 4
          %s205 = int_to_ptr.vmem [resolvable:$true] %s204
          %210 = dma.hbm_to_vmem [thread:$0]  %s203, 2048, %s205, %s192, 128, 128, 8
        $region24: #{tpu_custom_call.1} parent=15 // pred_fallthru
          _
      $region16: #{tpu_custom_call.1} parent=5 // pred_fallthru
        _
      %p211 = scmp.le.s32.totalorder 1, %s22
      %p212 = scmp.lt.s32.totalorder %s22, 3
      %p213 = pnand %p211, %p212
      %p214 = pneg %p213
      // Predicated region
      $region25: #{tpu_custom_call.1} parent=5 // pred_check
        _
      $region26: #{tpu_custom_call.1} parent=5 // pred_check_branch
        %216 = sbr.rel (%p213) target = $region28
      $region27: #{tpu_custom_call.1} parent=5 // pred_region
        %s217 = ssub.s32 %s22, 1
        %s218 = sand.u32 %s49, 1
        %s219 = scalar_lea.sflag [#allocation3], %s218
        %s220 = sand.u32 %s49, 1
        %s221 = smul.addr %s220, 128
        %s222 = scalar_lea.vmem [#allocation2], %s221
        // Predicated region
        $region29: #{tpu_custom_call.1} parent=27 // pred_check
          %p223 = pneg %p62
        $region30: #{tpu_custom_call.1} parent=27 // pred_check_branch
          %225 = sbr.rel (%p223) target = $region32
        $region31: #{tpu_custom_call.1} parent=27 // pred_region
          %226 = dma.done %s219, 2048
        $region32: #{tpu_custom_call.1} parent=27 // pred_fallthru
          _
        %s227 = sand.u32 %s77, 1
        %s228 = scalar_lea.sflag [#allocation6], %s227
        %s229 = sand.u32 %s77, 1
        %s230 = smul.addr %s229, 128
        %s231 = scalar_lea.vmem [#allocation5], %s230
        // Predicated region
        $region33: #{tpu_custom_call.1} parent=27 // pred_check
          %p232 = pneg %p90
        $region34: #{tpu_custom_call.1} parent=27 // pred_check_branch
          %234 = sbr.rel (%p232) target = $region36
        $region35: #{tpu_custom_call.1} parent=27 // pred_region
          %235 = dma.done %s228, 2048
        $region36: #{tpu_custom_call.1} parent=27 // pred_fallthru
          _
        %s236 = sand.u32 %s49, 1
        %s237 = scalar_lea.sflag [#allocation3], %s236
        %s238 = sand.u32 %s49, 1
        %s239 = smul.addr %s238, 128
        %s240 = scalar_lea.vmem [#allocation2], %s239
        %p241 = pneg %p62
        %p242 = pneg %p59
        %s243 = sand.u32 %s77, 1
        %s244 = scalar_lea.sflag [#allocation6], %s243
        %s245 = sand.u32 %s77, 1
        %s246 = smul.addr %s245, 128
        %s247 = scalar_lea.vmem [#allocation5], %s246
        %p248 = pneg %p90
        %p249 = pneg %p87
        %p250 = pneg %p118
        %p251 = pneg %p115
        %s252 = sand.u32 %s105, 1
        %s253 = scalar_lea.sflag [#allocation4], %s252
        %s254 = sand.u32 %s105, 1
        %s255 = smul.addr %s254, 128
        %s256 = scalar_lea.vmem [#allocation7], %s255
        %p257 = pneg %p146
        %p258 = pneg %p143
        %s259 = sand.u32 %s133, 1
        %s260 = scalar_lea.sflag [#allocation9], %s259
        %s261 = sand.u32 %s133, 1
        %s262 = smul.addr %s261, 128
        %s263 = scalar_lea.vmem [#allocation8], %s262
        %s264 = smul.u32 16, %s31
        %s265 = smul.u32 16, %s31
        %s266 = smul.u32 16, %s31
        %s267 = smul.u32 16, %s31
        %v268 = vlaneseq
        %v269 = vshrl.u32 %v268, 7
        %v270 = vadd.s32 %v269, 8
        %v271 = vadd.s32 %v269, 16
        %v272 = vadd.s32 %v269, 24
        %v273 = vadd.s32 %v269, 32
        %v274 = vadd.s32 %v269, 40
        %v275 = vadd.s32 %v269, 48
        %v276 = vadd.s32 %v269, 56
        %v277 = vadd.s32 %v269, 64
        %v278 = vadd.s32 %v269, 72
        %v279 = vadd.s32 %v269, 80
        %v280 = vadd.s32 %v269, 88
        %v281 = vadd.s32 %v269, 96
        %v282 = vadd.s32 %v269, 104
        %v283 = vadd.s32 %v269, 112
        %v284 = vadd.s32 %v269, 120
        %s285 = smul.u32 %s31, 128
        %v286 = vstv %s285
        %v287 = vadd.s32 %v269, %v286
        %v288 = vadd.s32 %v270, %v286
        %v289 = vadd.s32 %v271, %v286
        %v290 = vadd.s32 %v272, %v286
        %v291 = vadd.s32 %v273, %v286
        %v292 = vadd.s32 %v274, %v286
        %v293 = vadd.s32 %v275, %v286
        %v294 = vadd.s32 %v276, %v286
        %v295 = vadd.s32 %v277, %v286
        %v296 = vadd.s32 %v278, %v286
        %v297 = vadd.s32 %v279, %v286
        %v298 = vadd.s32 %v280, %v286
        %v299 = vadd.s32 %v281, %v286
        %v300 = vadd.s32 %v282, %v286
        %v301 = vadd.s32 %v283, %v286
        %v302 = vadd.s32 %v284, %v286
        %v303 = vlaneseq
        %v304 = vand.u32 %v303, 127
        %v305 = vcvt.s32.f32 %v287
        %v306 = vcvt.s32.f32 %v288
        %v307 = vcvt.s32.f32 %v289
        %v308 = vcvt.s32.f32 %v290
        %v309 = vcvt.s32.f32 %v291
        %v310 = vcvt.s32.f32 %v292
        %v311 = vcvt.s32.f32 %v293
        %v312 = vcvt.s32.f32 %v294
        %v313 = vcvt.s32.f32 %v295
        %v314 = vcvt.s32.f32 %v296
        %v315 = vcvt.s32.f32 %v297
        %v316 = vcvt.s32.f32 %v298
        %v317 = vcvt.s32.f32 %v299
        %v318 = vcvt.s32.f32 %v300
        %v319 = vcvt.s32.f32 %v301
        %v320 = vcvt.s32.f32 %v302
        %v321 = vsub.f32 %v305, 64.0
        %v322 = vsub.f32 %v306, 64.0
        %v323 = vsub.f32 %v307, 64.0
        %v324 = vsub.f32 %v308, 64.0
        %v325 = vsub.f32 %v309, 64.0
        %v326 = vsub.f32 %v310, 64.0
        %v327 = vsub.f32 %v311, 64.0
        %v328 = vsub.f32 %v312, 64.0
        %v329 = vsub.f32 %v313, 64.0
        %v330 = vsub.f32 %v314, 64.0
        %v331 = vsub.f32 %v315, 64.0
        %v332 = vsub.f32 %v316, 64.0
        %v333 = vsub.f32 %v317, 64.0
        %v334 = vsub.f32 %v318, 64.0
        %v335 = vsub.f32 %v319, 64.0
        %v336 = vsub.f32 %v320, 64.0
        %v337 = vmul.f32 %v321, 1.5625e-05
        %v338 = vmul.f32 %v322, 1.5625e-05
        %v339 = vmul.f32 %v323, 1.5625e-05
        %v340 = vmul.f32 %v324, 1.5625e-05
        %v341 = vmul.f32 %v325, 1.5625e-05
        %v342 = vmul.f32 %v326, 1.5625e-05
        %v343 = vmul.f32 %v327, 1.5625e-05
        %v344 = vmul.f32 %v328, 1.5625e-05
        %v345 = vmul.f32 %v329, 1.5625e-05
        %v346 = vmul.f32 %v330, 1.5625e-05
        %v347 = vmul.f32 %v331, 1.5625e-05
        %v348 = vmul.f32 %v332, 1.5625e-05
        %v349 = vmul.f32 %v333, 1.5625e-05
        %v350 = vmul.f32 %v334, 1.5625e-05
        %v351 = vmul.f32 %v335, 1.5625e-05
        %v352 = vmul.f32 %v336, 1.5625e-05
        %v353 = vcvt.s32.f32 %v304
        %v354 = vsub.f32 %v353, 64.0
        %v355 = vmul.f32 %v354, 1.5625e-05
        %v356 = vmul.f32 %v337, %v337
        %v357 = vmul.f32 %v338, %v338
        %v358 = vmul.f32 %v339, %v339
        %v359 = vmul.f32 %v340, %v340
        %v360 = vmul.f32 %v341, %v341
        %v361 = vmul.f32 %v342, %v342
        %v362 = vmul.f32 %v343, %v343
        %v363 = vmul.f32 %v344, %v344
        %v364 = vmul.f32 %v345, %v345
        %v365 = vmul.f32 %v346, %v346
        %v366 = vmul.f32 %v347, %v347
        %v367 = vmul.f32 %v348, %v348
        %v368 = vmul.f32 %v349, %v349
        %v369 = vmul.f32 %v350, %v350
        %v370 = vmul.f32 %v351, %v351
        %v371 = vmul.f32 %v352, %v352
        %v372 = vmul.f32 %v356, -1476312.4
        %v373 = vmul.f32 %v357, -1476312.4
        %v374 = vmul.f32 %v358, -1476312.4
        %v375 = vmul.f32 %v359, -1476312.4
        %v376 = vmul.f32 %v360, -1476312.4
        %v377 = vmul.f32 %v361, -1476312.4
        %v378 = vmul.f32 %v362, -1476312.4
        %v379 = vmul.f32 %v363, -1476312.4
        %v380 = vmul.f32 %v364, -1476312.4
        %v381 = vmul.f32 %v365, -1476312.4
        %v382 = vmul.f32 %v366, -1476312.4
        %v383 = vmul.f32 %v367, -1476312.4
        %v384 = vmul.f32 %v368, -1476312.4
        %v385 = vmul.f32 %v369, -1476312.4
        %v386 = vmul.f32 %v370, -1476312.4
        %v387 = vmul.f32 %v371, -1476312.4
        %v388 = vmul.f32 %v355, %v355
        %v389 = vmul.f32 %v388, -1476312.4
        %v390 = vand.u32 2147483647, %v372
        %vm391 = vcmp.le.f32.partialorder %v390, 0.7853982
        %vm392 = vcmp.lt.s32.totalorder %v372, 0
        %v393 = vand.u32 %v372, 2139095040
        %v394 = vshrl.u32 %v393, 23
        %v395 = vsub.s32 %v394, 127
        %v396 = vand.u32 2147483647, %v372
        %v397 = vand.u32 %v396, 8388607
        %v398 = vor.u32 %v397, 8388608
        %v399 = vsub.s32 0, %v398
        %v400 = vadd.s32 %v395, 1
        %vm401 = vcmp.gt.s32.totalorder %v400, 0
        %v402 = vsel %vm401, %v400, 0
        %v403 = vshrl.u32 %v402, 5
        %v404 = vand.u32 %v402, 31
        %v405 = vsub.s32 32, %v404
        %v406 = vshrl.u32 683565275, %v405
        %v407 = vshll.u32 683565275, %v404
        %v408 = vshrl.u32 2475754826, %v405
        %v409 = vor.u32 %v407, %v408
        %v410 = vshll.u32 2475754826, %v404
        %v411 = vshrl.u32 2131351028, %v405
        %v412 = vor.u32 %v410, %v411
        %v413 = vshll.u32 2131351028, %v404
        %v414 = vshrl.u32 2102212464, %v405
        %v415 = vor.u32 %v413, %v414
        %v416 = vshll.u32 2102212464, %v404
        %v417 = vshrl.u32 920167782, %v405
        %v418 = vor.u32 %v416, %v417
        %v419 = vshll.u32 920167782, %v404
        %v420 = vshrl.u32 1326507024, %v405
        %v421 = vor.u32 %v419, %v420
        %vm422 = vcmp.lt.s32.totalorder %v403, 1
        %vm423 = vcmp.lt.s32.totalorder %v403, 2
        %vm424 = vcmp.lt.s32.totalorder %v403, 3
        %vm425 = vcmp.lt.s32.totalorder %v403, 4
        %v426 = vsel %vm422, %v406, %v409
        %v427 = vsel %vm425, %v415, 2102212464
        %v428 = vsel %vm424, %v412, %v427
        %v429 = vsel %vm423, %v426, %v428
        %v430 = vsel %vm422, %v409, %v412
        %v431 = vsel %vm425, %v418, 920167782
        %v432 = vsel %vm424, %v415, %v431
        %v433 = vsel %vm423, %v430, %v432
        %v434 = vsel %vm422, %v412, %v415
        %v435 = vsel %vm425, %v421, 1326507024
        %v436 = vsel %vm424, %v418, %v435
        %v437 = vsel %vm423, %v434, %v436
        %v438 = vshll.u32 %v398, 8
        %v439 = vmul.u32.u64.compose %v438, %v437
        %v440 = vextract.low.u32 %v439
        %v441 = vextract.high.u32 %v439
        %v442 = vmul.u32.u64.compose %v438, %v433
        %v443 = vextract.low.u32 %v442
        %v444 = vextract.high.u32 %v442
        %v445 = vmul.u32 %v438, %v429
        %v446 = vadd.s32 %v441, %v443
        %vm447 = vc.u32 %v441, %v443
        %v448 = vadd.s32 %v444, 1
        %v449 = vsel %vm447, %v448, %v444
        %v450 = vadd.s32 %v445, %v449
        %v451 = vadd.s32 %v450, 536870912
        %v452 = vshrl.u32 %v451, 30
        %v453 = vshll.u32 %v452, 30
        %v454 = vsub.s32 %v450, %v453
        %vm455 = vcmp.lt.s32.totalorder %v454, 0
        %v456 = vsub.s32 0, %v454
        %v457 = vsel %vm455, %v456, %v454
        %v458 = vclz %v457
        %v459 = vsub.s32 %v458, 2
        %vm460 = vcmp.gt.s32.totalorder 0, %v459
        %v461 = vsel %vm460, 0, %v459
        %v462 = vsub.s32 32, %v461
        %v463 = vshll.u32 %v454, %v461
        %v464 = vshrl.u32 %v446, %v462
        %v465 = vor.u32 %v463, %v464
        %v466 = vsub.s32 4294967266, %v461
        %v467 = vadd.s32 %v466, 127
        %v468 = vshll.u32 %v467, 23
        %v469 = vor.u32 4788187, %v468
        %v470 = vand.u32 2147483647, %v469
        %v472 = vcvt.s32.f32 %v465
        %v473 = vmul.f32 %v472, %v470
        %v474 = vxor.u32 %v473, 2147483648
        %v475 = vsel %vm392, %v474, %v473
        %v476 = vsub.s32 4, %v452
        %v477 = vsel %vm392, %v476, %v452
        %v478 = vsel %vm391, %v372, %v475
        %v479 = vsel %vm391, 0, %v477
        %v480 = vcosq.f32.pop %v478
        %v481 = vsinq.f32.pop %v478
        %vm482 = vweird.f32 %v372
        %v483 = vand.u32 %v479, 3
        %vm484 = vcmp.lt.s32.totalorder %v483, 2
        %vm485 = vcmp.eq.s32.totalorder %v483, 0
        %v486 = vxor.u32 %v481, 2147483648
        %v487 = vsel %vm485, %v480, %v486
        %vm488 = vcmp.eq.s32.totalorder %v483, 2
        %v489 = vxor.u32 %v480, 2147483648
        %v490 = vsel %vm488, %v489, %v481
        %v491 = vsel %vm484, %v487, %v490
        %v492 = vsel %vm482, nan, %v491
        %v493 = vand.u32 2147483647, %v373
        %vm494 = vcmp.le.f32.partialorder %v493, 0.7853982
        %vm495 = vcmp.lt.s32.totalorder %v373, 0
        %v496 = vand.u32 %v373, 2139095040
        %v497 = vshrl.u32 %v496, 23
        %v498 = vsub.s32 %v497, 127
        %v499 = vand.u32 2147483647, %v373
        %v500 = vand.u32 %v499, 8388607
        %v501 = vor.u32 %v500, 8388608
        %v502 = vsub.s32 0, %v501
        %v503 = vadd.s32 %v498, 1
        %vm504 = vcmp.gt.s32.totalorder %v503, 0
        %v505 = vsel %vm504, %v503, 0
        %v506 = vshrl.u32 %v505, 5
        %v507 = vand.u32 %v505, 31
        %v508 = vsub.s32 32, %v507
        %v509 = vshrl.u32 683565275, %v508
        %v510 = vshll.u32 683565275, %v507
        %v511 = vshrl.u32 2475754826, %v508
        %v512 = vor.u32 %v510, %v511
        %v513 = vshll.u32 2475754826, %v507
        %v514 = vshrl.u32 2131351028, %v508
        %v515 = vor.u32 %v513, %v514
        %v516 = vshll.u32 2131351028, %v507
        %v517 = vshrl.u32 2102212464, %v508
        %v518 = vor.u32 %v516, %v517
        %v519 = vshll.u32 2102212464, %v507
        %v520 = vshrl.u32 920167782, %v508
        %v521 = vor.u32 %v519, %v520
        %v522 = vshll.u32 920167782, %v507
        %v523 = vshrl.u32 1326507024, %v508
        %v524 = vor.u32 %v522, %v523
        %vm525 = vcmp.lt.s32.totalorder %v506, 1
        %vm526 = vcmp.lt.s32.totalorder %v506, 2
        %vm527 = vcmp.lt.s32.totalorder %v506, 3
        %vm528 = vcmp.lt.s32.totalorder %v506, 4
        %v529 = vsel %vm525, %v509, %v512
        %v530 = vsel %vm528, %v518, 2102212464
        %v531 = vsel %vm527, %v515, %v530
        %v532 = vsel %vm526, %v529, %v531
        %v533 = vsel %vm525, %v512, %v515
        %v534 = vsel %vm528, %v521, 920167782
        %v535 = vsel %vm527, %v518, %v534
        %v536 = vsel %vm526, %v533, %v535
        %v537 = vsel %vm525, %v515, %v518
        %v538 = vsel %vm528, %v524, 1326507024
        %v539 = vsel %vm527, %v521, %v538
        %v540 = vsel %vm526, %v537, %v539
        %v541 = vshll.u32 %v501, 8
        %v542 = vmul.u32.u64.compose %v541, %v540
        %v543 = vextract.low.u32 %v542
        %v544 = vextract.high.u32 %v542
        %v545 = vmul.u32.u64.compose %v541, %v536
        %v546 = vextract.low.u32 %v545
        %v547 = vextract.high.u32 %v545
        %v548 = vmul.u32 %v541, %v532
        %v549 = vadd.s32 %v544, %v546
        %vm550 = vc.u32 %v544, %v546
        %v551 = vadd.s32 %v547, 1
        %v552 = vsel %vm550, %v551, %v547
        %v553 = vadd.s32 %v548, %v552
        %v554 = vadd.s32 %v553, 536870912
        %v555 = vshrl.u32 %v554, 30
        %v556 = vshll.u32 %v555, 30
        %v557 = vsub.s32 %v553, %v556
        %vm558 = vcmp.lt.s32.totalorder %v557, 0
        %v559 = vsub.s32 0, %v557
        %v560 = vsel %vm558, %v559, %v557
        %v561 = vclz %v560
        %v562 = vsub.s32 %v561, 2
        %vm563 = vcmp.gt.s32.totalorder 0, %v562
        %v564 = vsel %vm563, 0, %v562
        %v565 = vsub.s32 32, %v564
        %v566 = vshll.u32 %v557, %v564
        %v567 = vshrl.u32 %v549, %v565
        %v568 = vor.u32 %v566, %v567
        %v569 = vsub.s32 4294967266, %v564
        %v570 = vadd.s32 %v569, 127
        %v571 = vshll.u32 %v570, 23
        %v572 = vor.u32 4788187, %v571
        %v573 = vand.u32 2147483647, %v572
        %v575 = vcvt.s32.f32 %v568
        %v576 = vmul.f32 %v575, %v573
        %v577 = vxor.u32 %v576, 2147483648
        %v578 = vsel %vm495, %v577, %v576
        %v579 = vsub.s32 4, %v555
        %v580 = vsel %vm495, %v579, %v555
        %v581 = vsel %vm494, %v373, %v578
        %v582 = vsel %vm494, 0, %v580
        %v583 = vcosq.f32.pop %v581
        %v584 = vsinq.f32.pop %v581
        %vm585 = vweird.f32 %v373
        %v586 = vand.u32 %v582, 3
        %vm587 = vcmp.lt.s32.totalorder %v586, 2
        %vm588 = vcmp.eq.s32.totalorder %v586, 0
        %v589 = vxor.u32 %v584, 2147483648
        %v590 = vsel %vm588, %v583, %v589
        %vm591 = vcmp.eq.s32.totalorder %v586, 2
        %v592 = vxor.u32 %v583, 2147483648
        %v593 = vsel %vm591, %v592, %v584
        %v594 = vsel %vm587, %v590, %v593
        %v595 = vsel %vm585, nan, %v594
        %v596 = vand.u32 2147483647, %v374
        %vm597 = vcmp.le.f32.partialorder %v596, 0.7853982
        %vm598 = vcmp.lt.s32.totalorder %v374, 0
        %v599 = vand.u32 %v374, 2139095040
        %v600 = vshrl.u32 %v599, 23
        %v601 = vsub.s32 %v600, 127
        %v602 = vand.u32 2147483647, %v374
        %v603 = vand.u32 %v602, 8388607
        %v604 = vor.u32 %v603, 8388608
        %v605 = vsub.s32 0, %v604
        %v606 = vadd.s32 %v601, 1
        %vm607 = vcmp.gt.s32.totalorder %v606, 0
        %v608 = vsel %vm607, %v606, 0
        %v609 = vshrl.u32 %v608, 5
        %v610 = vand.u32 %v608, 31
        %v611 = vsub.s32 32, %v610
        %v612 = vshrl.u32 683565275, %v611
        %v613 = vshll.u32 683565275, %v610
        %v614 = vshrl.u32 2475754826, %v611
        %v615 = vor.u32 %v613, %v614
        %v616 = vshll.u32 2475754826, %v610
        %v617 = vshrl.u32 2131351028, %v611
        %v618 = vor.u32 %v616, %v617
        %v619 = vshll.u32 2131351028, %v610
        %v620 = vshrl.u32 2102212464, %v611
        %v621 = vor.u32 %v619, %v620
        %v622 = vshll.u32 2102212464, %v610
        %v623 = vshrl.u32 920167782, %v611
        %v624 = vor.u32 %v622, %v623
        %v625 = vshll.u32 920167782, %v610
        %v626 = vshrl.u32 1326507024, %v611
        %v627 = vor.u32 %v625, %v626
        %vm628 = vcmp.lt.s32.totalorder %v609, 1
        %vm629 = vcmp.lt.s32.totalorder %v609, 2
        %vm630 = vcmp.lt.s32.totalorder %v609, 3
        %vm631 = vcmp.lt.s32.totalorder %v609, 4
        %v632 = vsel %vm628, %v612, %v615
        %v633 = vsel %vm631, %v621, 2102212464
        %v634 = vsel %vm630, %v618, %v633
        %v635 = vsel %vm629, %v632, %v634
        %v636 = vsel %vm628, %v615, %v618
        %v637 = vsel %vm631, %v624, 920167782
        %v638 = vsel %vm630, %v621, %v637
        %v639 = vsel %vm629, %v636, %v638
        %v640 = vsel %vm628, %v618, %v621
        %v641 = vsel %vm631, %v627, 1326507024
        %v642 = vsel %vm630, %v624, %v641
        %v643 = vsel %vm629, %v640, %v642
        %v644 = vshll.u32 %v604, 8
        %v645 = vmul.u32.u64.compose %v644, %v643
        %v646 = vextract.low.u32 %v645
        %v647 = vextract.high.u32 %v645
        %v648 = vmul.u32.u64.compose %v644, %v639
        %v649 = vextract.low.u32 %v648
        %v650 = vextract.high.u32 %v648
        %v651 = vmul.u32 %v644, %v635
        %v652 = vadd.s32 %v647, %v649
        %vm653 = vc.u32 %v647, %v649
        %v654 = vadd.s32 %v650, 1
        %v655 = vsel %vm653, %v654, %v650
        %v656 = vadd.s32 %v651, %v655
        %v657 = vadd.s32 %v656, 536870912
        %v658 = vshrl.u32 %v657, 30
        %v659 = vshll.u32 %v658, 30
        %v660 = vsub.s32 %v656, %v659
        %vm661 = vcmp.lt.s32.totalorder %v660, 0
        %v662 = vsub.s32 0, %v660
        %v663 = vsel %vm661, %v662, %v660
        %v664 = vclz %v663
        %v665 = vsub.s32 %v664, 2
        %vm666 = vcmp.gt.s32.totalorder 0, %v665
        %v667 = vsel %vm666, 0, %v665
        %v668 = vsub.s32 32, %v667
        %v669 = vshll.u32 %v660, %v667
        %v670 = vshrl.u32 %v652, %v668
        %v671 = vor.u32 %v669, %v670
        %v672 = vsub.s32 4294967266, %v667
        %v673 = vadd.s32 %v672, 127
        %v674 = vshll.u32 %v673, 23
        %v675 = vor.u32 4788187, %v674
        %v676 = vand.u32 2147483647, %v675
        %v678 = vcvt.s32.f32 %v671
        %v679 = vmul.f32 %v678, %v676
        %v680 = vxor.u32 %v679, 2147483648
        %v681 = vsel %vm598, %v680, %v679
        %v682 = vsub.s32 4, %v658
        %v683 = vsel %vm598, %v682, %v658
        %v684 = vsel %vm597, %v374, %v681
        %v685 = vsel %vm597, 0, %v683
        %v686 = vcosq.f32.pop %v684
        %v687 = vsinq.f32.pop %v684
        %vm688 = vweird.f32 %v374
        %v689 = vand.u32 %v685, 3
        %vm690 = vcmp.lt.s32.totalorder %v689, 2
        %vm691 = vcmp.eq.s32.totalorder %v689, 0
        %v692 = vxor.u32 %v687, 2147483648
        %v693 = vsel %vm691, %v686, %v692
        %vm694 = vcmp.eq.s32.totalorder %v689, 2
        %v695 = vxor.u32 %v686, 2147483648
        %v696 = vsel %vm694, %v695, %v687
        %v697 = vsel %vm690, %v693, %v696
        %v698 = vsel %vm688, nan, %v697
        %v699 = vand.u32 2147483647, %v375
        %vm700 = vcmp.le.f32.partialorder %v699, 0.7853982
        %vm701 = vcmp.lt.s32.totalorder %v375, 0
        %v702 = vand.u32 %v375, 2139095040
        %v703 = vshrl.u32 %v702, 23
        %v704 = vsub.s32 %v703, 127
        %v705 = vand.u32 2147483647, %v375
        %v706 = vand.u32 %v705, 8388607
        %v707 = vor.u32 %v706, 8388608
        %v708 = vsub.s32 0, %v707
        %v709 = vadd.s32 %v704, 1
        %vm710 = vcmp.gt.s32.totalorder %v709, 0
        %v711 = vsel %vm710, %v709, 0
        %v712 = vshrl.u32 %v711, 5
        %v713 = vand.u32 %v711, 31
        %v714 = vsub.s32 32, %v713
        %v715 = vshrl.u32 683565275, %v714
        %v716 = vshll.u32 683565275, %v713
        %v717 = vshrl.u32 2475754826, %v714
        %v718 = vor.u32 %v716, %v717
        %v719 = vshll.u32 2475754826, %v713
        %v720 = vshrl.u32 2131351028, %v714
        %v721 = vor.u32 %v719, %v720
        %v722 = vshll.u32 2131351028, %v713
        %v723 = vshrl.u32 2102212464, %v714
        %v724 = vor.u32 %v722, %v723
        %v725 = vshll.u32 2102212464, %v713
        %v726 = vshrl.u32 920167782, %v714
        %v727 = vor.u32 %v725, %v726
        %v728 = vshll.u32 920167782, %v713
        %v729 = vshrl.u32 1326507024, %v714
        %v730 = vor.u32 %v728, %v729
        %vm731 = vcmp.lt.s32.totalorder %v712, 1
        %vm732 = vcmp.lt.s32.totalorder %v712, 2
        %vm733 = vcmp.lt.s32.totalorder %v712, 3
        %vm734 = vcmp.lt.s32.totalorder %v712, 4
        %v735 = vsel %vm731, %v715, %v718
        %v736 = vsel %vm734, %v724, 2102212464
        %v737 = vsel %vm733, %v721, %v736
        %v738 = vsel %vm732, %v735, %v737
        %v739 = vsel %vm731, %v718, %v721
        %v740 = vsel %vm734, %v727, 920167782
        %v741 = vsel %vm733, %v724, %v740
        %v742 = vsel %vm732, %v739, %v741
        %v743 = vsel %vm731, %v721, %v724
        %v744 = vsel %vm734, %v730, 1326507024
        %v745 = vsel %vm733, %v727, %v744
        %v746 = vsel %vm732, %v743, %v745
        %v747 = vshll.u32 %v707, 8
        %v748 = vmul.u32.u64.compose %v747, %v746
        %v749 = vextract.low.u32 %v748
        %v750 = vextract.high.u32 %v748
        %v751 = vmul.u32.u64.compose %v747, %v742
        %v752 = vextract.low.u32 %v751
        %v753 = vextract.high.u32 %v751
        %v754 = vmul.u32 %v747, %v738
        %v755 = vadd.s32 %v750, %v752
        %vm756 = vc.u32 %v750, %v752
        %v757 = vadd.s32 %v753, 1
        %v758 = vsel %vm756, %v757, %v753
        %v759 = vadd.s32 %v754, %v758
        %v760 = vadd.s32 %v759, 536870912
        %v761 = vshrl.u32 %v760, 30
        %v762 = vshll.u32 %v761, 30
        %v763 = vsub.s32 %v759, %v762
        %vm764 = vcmp.lt.s32.totalorder %v763, 0
        %v765 = vsub.s32 0, %v763
        %v766 = vsel %vm764, %v765, %v763
        %v767 = vclz %v766
        %v768 = vsub.s32 %v767, 2
        %vm769 = vcmp.gt.s32.totalorder 0, %v768
        %v770 = vsel %vm769, 0, %v768
        %v771 = vsub.s32 32, %v770
        %v772 = vshll.u32 %v763, %v770
        %v773 = vshrl.u32 %v755, %v771
        %v774 = vor.u32 %v772, %v773
        %v775 = vsub.s32 4294967266, %v770
        %v776 = vadd.s32 %v775, 127
        %v777 = vshll.u32 %v776, 23
        %v778 = vor.u32 4788187, %v777
        %v779 = vand.u32 2147483647, %v778
        %v781 = vcvt.s32.f32 %v774
        %v782 = vmul.f32 %v781, %v779
        %v783 = vxor.u32 %v782, 2147483648
        %v784 = vsel %vm701, %v783, %v782
        %v785 = vsub.s32 4, %v761
        %v786 = vsel %vm701, %v785, %v761
        %v787 = vsel %vm700, %v375, %v784
        %v788 = vsel %vm700, 0, %v786
        %v789 = vcosq.f32.pop %v787
        %v790 = vsinq.f32.pop %v787
        %vm791 = vweird.f32 %v375
        %v792 = vand.u32 %v788, 3
        %vm793 = vcmp.lt.s32.totalorder %v792, 2
        %vm794 = vcmp.eq.s32.totalorder %v792, 0
        %v795 = vxor.u32 %v790, 2147483648
        %v796 = vsel %vm794, %v789, %v795
        %vm797 = vcmp.eq.s32.totalorder %v792, 2
        %v798 = vxor.u32 %v789, 2147483648
        %v799 = vsel %vm797, %v798, %v790
        %v800 = vsel %vm793, %v796, %v799
        %v801 = vsel %vm791, nan, %v800
        %v802 = vand.u32 2147483647, %v376
        %vm803 = vcmp.le.f32.partialorder %v802, 0.7853982
        %vm804 = vcmp.lt.s32.totalorder %v376, 0
        %v805 = vand.u32 %v376, 2139095040
        %v806 = vshrl.u32 %v805, 23
        %v807 = vsub.s32 %v806, 127
        %v808 = vand.u32 2147483647, %v376
        %v809 = vand.u32 %v808, 8388607
        %v810 = vor.u32 %v809, 8388608
        %v811 = vsub.s32 0, %v810
        %v812 = vadd.s32 %v807, 1
        %vm813 = vcmp.gt.s32.totalorder %v812, 0
        %v814 = vsel %vm813, %v812, 0
        %v815 = vshrl.u32 %v814, 5
        %v816 = vand.u32 %v814, 31
        %v817 = vsub.s32 32, %v816
        %v818 = vshrl.u32 683565275, %v817
        %v819 = vshll.u32 683565275, %v816
        %v820 = vshrl.u32 2475754826, %v817
        %v821 = vor.u32 %v819, %v820
        %v822 = vshll.u32 2475754826, %v816
        %v823 = vshrl.u32 2131351028, %v817
        %v824 = vor.u32 %v822, %v823
        %v825 = vshll.u32 2131351028, %v816
        %v826 = vshrl.u32 2102212464, %v817
        %v827 = vor.u32 %v825, %v826
        %v828 = vshll.u32 2102212464, %v816
        %v829 = vshrl.u32 920167782, %v817
        %v830 = vor.u32 %v828, %v829
        %v831 = vshll.u32 920167782, %v816
        %v832 = vshrl.u32 1326507024, %v817
        %v833 = vor.u32 %v831, %v832
        %vm834 = vcmp.lt.s32.totalorder %v815, 1
        %vm835 = vcmp.lt.s32.totalorder %v815, 2
        %vm836 = vcmp.lt.s32.totalorder %v815, 3
        %vm837 = vcmp.lt.s32.totalorder %v815, 4
        %v838 = vsel %vm834, %v818, %v821
        %v839 = vsel %vm837, %v827, 2102212464
        %v840 = vsel %vm836, %v824, %v839
        %v841 = vsel %vm835, %v838, %v840
        %v842 = vsel %vm834, %v821, %v824
        %v843 = vsel %vm837, %v830, 920167782
        %v844 = vsel %vm836, %v827, %v843
        %v845 = vsel %vm835, %v842, %v844
        %v846 = vsel %vm834, %v824, %v827
        %v847 = vsel %vm837, %v833, 1326507024
        %v848 = vsel %vm836, %v830, %v847
        %v849 = vsel %vm835, %v846, %v848
        %v850 = vshll.u32 %v810, 8
        %v851 = vmul.u32.u64.compose %v850, %v849
        %v852 = vextract.low.u32 %v851
        %v853 = vextract.high.u32 %v851
        %v854 = vmul.u32.u64.compose %v850, %v845
        %v855 = vextract.low.u32 %v854
        %v856 = vextract.high.u32 %v854
        %v857 = vmul.u32 %v850, %v841
        %v858 = vadd.s32 %v853, %v855
        %vm859 = vc.u32 %v853, %v855
        %v860 = vadd.s32 %v856, 1
        %v861 = vsel %vm859, %v860, %v856
        %v862 = vadd.s32 %v857, %v861
        %v863 = vadd.s32 %v862, 536870912
        %v864 = vshrl.u32 %v863, 30
        %v865 = vshll.u32 %v864, 30
        %v866 = vsub.s32 %v862, %v865
        %vm867 = vcmp.lt.s32.totalorder %v866, 0
        %v868 = vsub.s32 0, %v866
        %v869 = vsel %vm867, %v868, %v866
        %v870 = vclz %v869
        %v871 = vsub.s32 %v870, 2
        %vm872 = vcmp.gt.s32.totalorder 0, %v871
        %v873 = vsel %vm872, 0, %v871
        %v874 = vsub.s32 32, %v873
        %v875 = vshll.u32 %v866, %v873
        %v876 = vshrl.u32 %v858, %v874
        %v877 = vor.u32 %v875, %v876
        %v878 = vsub.s32 4294967266, %v873
        %v879 = vadd.s32 %v878, 127
        %v880 = vshll.u32 %v879, 23
        %v881 = vor.u32 4788187, %v880
        %v882 = vand.u32 2147483647, %v881
        %v884 = vcvt.s32.f32 %v877
        %v885 = vmul.f32 %v884, %v882
        %v886 = vxor.u32 %v885, 2147483648
        %v887 = vsel %vm804, %v886, %v885
        %v888 = vsub.s32 4, %v864
        %v889 = vsel %vm804, %v888, %v864
        %v890 = vsel %vm803, %v376, %v887
        %v891 = vsel %vm803, 0, %v889
        %v892 = vcosq.f32.pop %v890
        %v893 = vsinq.f32.pop %v890
        %vm894 = vweird.f32 %v376
        %v895 = vand.u32 %v891, 3
        %vm896 = vcmp.lt.s32.totalorder %v895, 2
        %vm897 = vcmp.eq.s32.totalorder %v895, 0
        %v898 = vxor.u32 %v893, 2147483648
        %v899 = vsel %vm897, %v892, %v898
        %vm900 = vcmp.eq.s32.totalorder %v895, 2
        %v901 = vxor.u32 %v892, 2147483648
        %v902 = vsel %vm900, %v901, %v893
        %v903 = vsel %vm896, %v899, %v902
        %v904 = vsel %vm894, nan, %v903
        %v905 = vand.u32 2147483647, %v377
        %vm906 = vcmp.le.f32.partialorder %v905, 0.7853982
        %vm907 = vcmp.lt.s32.totalorder %v377, 0
        %v908 = vand.u32 %v377, 2139095040
        %v909 = vshrl.u32 %v908, 23
        %v910 = vsub.s32 %v909, 127
        %v911 = vand.u32 2147483647, %v377
        %v912 = vand.u32 %v911, 8388607
        %v913 = vor.u32 %v912, 8388608
        %v914 = vsub.s32 0, %v913
        %v915 = vadd.s32 %v910, 1
        %vm916 = vcmp.gt.s32.totalorder %v915, 0
        %v917 = vsel %vm916, %v915, 0
        %v918 = vshrl.u32 %v917, 5
        %v919 = vand.u32 %v917, 31
        %v920 = vsub.s32 32, %v919
        %v921 = vshrl.u32 683565275, %v920
        %v922 = vshll.u32 683565275, %v919
        %v923 = vshrl.u32 2475754826, %v920
        %v924 = vor.u32 %v922, %v923
        %v925 = vshll.u32 2475754826, %v919
        %v926 = vshrl.u32 2131351028, %v920
        %v927 = vor.u32 %v925, %v926
        %v928 = vshll.u32 2131351028, %v919
        %v929 = vshrl.u32 2102212464, %v920
        %v930 = vor.u32 %v928, %v929
        %v931 = vshll.u32 2102212464, %v919
        %v932 = vshrl.u32 920167782, %v920
        %v933 = vor.u32 %v931, %v932
        %v934 = vshll.u32 920167782, %v919
        %v935 = vshrl.u32 1326507024, %v920
        %v936 = vor.u32 %v934, %v935
        %vm937 = vcmp.lt.s32.totalorder %v918, 1
        %vm938 = vcmp.lt.s32.totalorder %v918, 2
        %vm939 = vcmp.lt.s32.totalorder %v918, 3
        %vm940 = vcmp.lt.s32.totalorder %v918, 4
        %v941 = vsel %vm937, %v921, %v924
        %v942 = vsel %vm940, %v930, 2102212464
        %v943 = vsel %vm939, %v927, %v942
        %v944 = vsel %vm938, %v941, %v943
        %v945 = vsel %vm937, %v924, %v927
        %v946 = vsel %vm940, %v933, 920167782
        %v947 = vsel %vm939, %v930, %v946
        %v948 = vsel %vm938, %v945, %v947
        %v949 = vsel %vm937, %v927, %v930
        %v950 = vsel %vm940, %v936, 1326507024
        %v951 = vsel %vm939, %v933, %v950
        %v952 = vsel %vm938, %v949, %v951
        %v953 = vshll.u32 %v913, 8
        %v954 = vmul.u32.u64.compose %v953, %v952
        %v955 = vextract.low.u32 %v954
        %v956 = vextract.high.u32 %v954
        %v957 = vmul.u32.u64.compose %v953, %v948
        %v958 = vextract.low.u32 %v957
        %v959 = vextract.high.u32 %v957
        %v960 = vmul.u32 %v953, %v944
        %v961 = vadd.s32 %v956, %v958
        %vm962 = vc.u32 %v956, %v958
        %v963 = vadd.s32 %v959, 1
        %v964 = vsel %vm962, %v963, %v959
        %v965 = vadd.s32 %v960, %v964
        %v966 = vadd.s32 %v965, 536870912
        %v967 = vshrl.u32 %v966, 30
        %v968 = vshll.u32 %v967, 30
        %v969 = vsub.s32 %v965, %v968
        %vm970 = vcmp.lt.s32.totalorder %v969, 0
        %v971 = vsub.s32 0, %v969
        %v972 = vsel %vm970, %v971, %v969
        %v973 = vclz %v972
        %v974 = vsub.s32 %v973, 2
        %vm975 = vcmp.gt.s32.totalorder 0, %v974
        %v976 = vsel %vm975, 0, %v974
        %v977 = vsub.s32 32, %v976
        %v978 = vshll.u32 %v969, %v976
        %v979 = vshrl.u32 %v961, %v977
        %v980 = vor.u32 %v978, %v979
        %v981 = vsub.s32 4294967266, %v976
        %v982 = vadd.s32 %v981, 127
        %v983 = vshll.u32 %v982, 23
        %v984 = vor.u32 4788187, %v983
        %v985 = vand.u32 2147483647, %v984
        %v987 = vcvt.s32.f32 %v980
        %v988 = vmul.f32 %v987, %v985
        %v989 = vxor.u32 %v988, 2147483648
        %v990 = vsel %vm907, %v989, %v988
        %v991 = vsub.s32 4, %v967
        %v992 = vsel %vm907, %v991, %v967
        %v993 = vsel %vm906, %v377, %v990
        %v994 = vsel %vm906, 0, %v992
        %v995 = vcosq.f32.pop %v993
        %v996 = vsinq.f32.pop %v993
        %vm997 = vweird.f32 %v377
        %v998 = vand.u32 %v994, 3
        %vm999 = vcmp.lt.s32.totalorder %v998, 2
        %vm1000 = vcmp.eq.s32.totalorder %v998, 0
        %v1001 = vxor.u32 %v996, 2147483648
        %v1002 = vsel %vm1000, %v995, %v1001
        %vm1003 = vcmp.eq.s32.totalorder %v998, 2
        %v1004 = vxor.u32 %v995, 2147483648
        %v1005 = vsel %vm1003, %v1004, %v996
        %v1006 = vsel %vm999, %v1002, %v1005
        %v1007 = vsel %vm997, nan, %v1006
        %v1008 = vand.u32 2147483647, %v378
        %vm1009 = vcmp.le.f32.partialorder %v1008, 0.7853982
        %vm1010 = vcmp.lt.s32.totalorder %v378, 0
        %v1011 = vand.u32 %v378, 2139095040
        %v1012 = vshrl.u32 %v1011, 23
        %v1013 = vsub.s32 %v1012, 127
        %v1014 = vand.u32 2147483647, %v378
        %v1015 = vand.u32 %v1014, 8388607
        %v1016 = vor.u32 %v1015, 8388608
        %v1017 = vsub.s32 0, %v1016
        %v1018 = vadd.s32 %v1013, 1
        %vm1019 = vcmp.gt.s32.totalorder %v1018, 0
        %v1020 = vsel %vm1019, %v1018, 0
        %v1021 = vshrl.u32 %v1020, 5
        %v1022 = vand.u32 %v1020, 31
        %v1023 = vsub.s32 32, %v1022
        %v1024 = vshrl.u32 683565275, %v1023
        %v1025 = vshll.u32 683565275, %v1022
        %v1026 = vshrl.u32 2475754826, %v1023
        %v1027 = vor.u32 %v1025, %v1026
        %v1028 = vshll.u32 2475754826, %v1022
        %v1029 = vshrl.u32 2131351028, %v1023
        %v1030 = vor.u32 %v1028, %v1029
        %v1031 = vshll.u32 2131351028, %v1022
        %v1032 = vshrl.u32 2102212464, %v1023
        %v1033 = vor.u32 %v1031, %v1032
        %v1034 = vshll.u32 2102212464, %v1022
        %v1035 = vshrl.u32 920167782, %v1023
        %v1036 = vor.u32 %v1034, %v1035
        %v1037 = vshll.u32 920167782, %v1022
        %v1038 = vshrl.u32 1326507024, %v1023
        %v1039 = vor.u32 %v1037, %v1038
        %vm1040 = vcmp.lt.s32.totalorder %v1021, 1
        %vm1041 = vcmp.lt.s32.totalorder %v1021, 2
        %vm1042 = vcmp.lt.s32.totalorder %v1021, 3
        %vm1043 = vcmp.lt.s32.totalorder %v1021, 4
        %v1044 = vsel %vm1040, %v1024, %v1027
        %v1045 = vsel %vm1043, %v1033, 2102212464
        %v1046 = vsel %vm1042, %v1030, %v1045
        %v1047 = vsel %vm1041, %v1044, %v1046
        %v1048 = vsel %vm1040, %v1027, %v1030
        %v1049 = vsel %vm1043, %v1036, 920167782
        %v1050 = vsel %vm1042, %v1033, %v1049
        %v1051 = vsel %vm1041, %v1048, %v1050
        %v1052 = vsel %vm1040, %v1030, %v1033
        %v1053 = vsel %vm1043, %v1039, 1326507024
        %v1054 = vsel %vm1042, %v1036, %v1053
        %v1055 = vsel %vm1041, %v1052, %v1054
        %v1056 = vshll.u32 %v1016, 8
        %v1057 = vmul.u32.u64.compose %v1056, %v1055
        %v1058 = vextract.low.u32 %v1057
        %v1059 = vextract.high.u32 %v1057
        %v1060 = vmul.u32.u64.compose %v1056, %v1051
        %v1061 = vextract.low.u32 %v1060
        %v1062 = vextract.high.u32 %v1060
        %v1063 = vmul.u32 %v1056, %v1047
        %v1064 = vadd.s32 %v1059, %v1061
        %vm1065 = vc.u32 %v1059, %v1061
        %v1066 = vadd.s32 %v1062, 1
        %v1067 = vsel %vm1065, %v1066, %v1062
        %v1068 = vadd.s32 %v1063, %v1067
        %v1069 = vadd.s32 %v1068, 536870912
        %v1070 = vshrl.u32 %v1069, 30
        %v1071 = vshll.u32 %v1070, 30
        %v1072 = vsub.s32 %v1068, %v1071
        %vm1073 = vcmp.lt.s32.totalorder %v1072, 0
        %v1074 = vsub.s32 0, %v1072
        %v1075 = vsel %vm1073, %v1074, %v1072
        %v1076 = vclz %v1075
        %v1077 = vsub.s32 %v1076, 2
        %vm1078 = vcmp.gt.s32.totalorder 0, %v1077
        %v1079 = vsel %vm1078, 0, %v1077
        %v1080 = vsub.s32 32, %v1079
        %v1081 = vshll.u32 %v1072, %v1079
        %v1082 = vshrl.u32 %v1064, %v1080
        %v1083 = vor.u32 %v1081, %v1082
        %v1084 = vsub.s32 4294967266, %v1079
        %v1085 = vadd.s32 %v1084, 127
        %v1086 = vshll.u32 %v1085, 23
        %v1087 = vor.u32 4788187, %v1086
        %v1088 = vand.u32 2147483647, %v1087
        %v1090 = vcvt.s32.f32 %v1083
        %v1091 = vmul.f32 %v1090, %v1088
        %v1092 = vxor.u32 %v1091, 2147483648
        %v1093 = vsel %vm1010, %v1092, %v1091
        %v1094 = vsub.s32 4, %v1070
        %v1095 = vsel %vm1010, %v1094, %v1070
        %v1096 = vsel %vm1009, %v378, %v1093
        %v1097 = vsel %vm1009, 0, %v1095
        %v1098 = vcosq.f32.pop %v1096
        %v1099 = vsinq.f32.pop %v1096
        %vm1100 = vweird.f32 %v378
        %v1101 = vand.u32 %v1097, 3
        %vm1102 = vcmp.lt.s32.totalorder %v1101, 2
        %vm1103 = vcmp.eq.s32.totalorder %v1101, 0
        %v1104 = vxor.u32 %v1099, 2147483648
        %v1105 = vsel %vm1103, %v1098, %v1104
        %vm1106 = vcmp.eq.s32.totalorder %v1101, 2
        %v1107 = vxor.u32 %v1098, 2147483648
        %v1108 = vsel %vm1106, %v1107, %v1099
        %v1109 = vsel %vm1102, %v1105, %v1108
        %v1110 = vsel %vm1100, nan, %v1109
        %v1111 = vand.u32 2147483647, %v379
        %vm1112 = vcmp.le.f32.partialorder %v1111, 0.7853982
        %vm1113 = vcmp.lt.s32.totalorder %v379, 0
        %v1114 = vand.u32 %v379, 2139095040
        %v1115 = vshrl.u32 %v1114, 23
        %v1116 = vsub.s32 %v1115, 127
        %v1117 = vand.u32 2147483647, %v379
        %v1118 = vand.u32 %v1117, 8388607
        %v1119 = vor.u32 %v1118, 8388608
        %v1120 = vsub.s32 0, %v1119
        %v1121 = vadd.s32 %v1116, 1
        %vm1122 = vcmp.gt.s32.totalorder %v1121, 0
        %v1123 = vsel %vm1122, %v1121, 0
        %v1124 = vshrl.u32 %v1123, 5
        %v1125 = vand.u32 %v1123, 31
        %v1126 = vsub.s32 32, %v1125
        %v1127 = vshrl.u32 683565275, %v1126
        %v1128 = vshll.u32 683565275, %v1125
        %v1129 = vshrl.u32 2475754826, %v1126
        %v1130 = vor.u32 %v1128, %v1129
        %v1131 = vshll.u32 2475754826, %v1125
        %v1132 = vshrl.u32 2131351028, %v1126
        %v1133 = vor.u32 %v1131, %v1132
        %v1134 = vshll.u32 2131351028, %v1125
        %v1135 = vshrl.u32 2102212464, %v1126
        %v1136 = vor.u32 %v1134, %v1135
        %v1137 = vshll.u32 2102212464, %v1125
        %v1138 = vshrl.u32 920167782, %v1126
        %v1139 = vor.u32 %v1137, %v1138
        %v1140 = vshll.u32 920167782, %v1125
        %v1141 = vshrl.u32 1326507024, %v1126
        %v1142 = vor.u32 %v1140, %v1141
        %vm1143 = vcmp.lt.s32.totalorder %v1124, 1
        %vm1144 = vcmp.lt.s32.totalorder %v1124, 2
        %vm1145 = vcmp.lt.s32.totalorder %v1124, 3
        %vm1146 = vcmp.lt.s32.totalorder %v1124, 4
        %v1147 = vsel %vm1143, %v1127, %v1130
        %v1148 = vsel %vm1146, %v1136, 2102212464
        %v1149 = vsel %vm1145, %v1133, %v1148
        %v1150 = vsel %vm1144, %v1147, %v1149
        %v1151 = vsel %vm1143, %v1130, %v1133
        %v1152 = vsel %vm1146, %v1139, 920167782
        %v1153 = vsel %vm1145, %v1136, %v1152
        %v1154 = vsel %vm1144, %v1151, %v1153
        %v1155 = vsel %vm1143, %v1133, %v1136
        %v1156 = vsel %vm1146, %v1142, 1326507024
        %v1157 = vsel %vm1145, %v1139, %v1156
        %v1158 = vsel %vm1144, %v1155, %v1157
        %v1159 = vshll.u32 %v1119, 8
        %v1160 = vmul.u32.u64.compose %v1159, %v1158
        %v1161 = vextract.low.u32 %v1160
        %v1162 = vextract.high.u32 %v1160
        %v1163 = vmul.u32.u64.compose %v1159, %v1154
        %v1164 = vextract.low.u32 %v1163
        %v1165 = vextract.high.u32 %v1163
        %v1166 = vmul.u32 %v1159, %v1150
        %v1167 = vadd.s32 %v1162, %v1164
        %vm1168 = vc.u32 %v1162, %v1164
        %v1169 = vadd.s32 %v1165, 1
        %v1170 = vsel %vm1168, %v1169, %v1165
        %v1171 = vadd.s32 %v1166, %v1170
        %v1172 = vadd.s32 %v1171, 536870912
        %v1173 = vshrl.u32 %v1172, 30
        %v1174 = vshll.u32 %v1173, 30
        %v1175 = vsub.s32 %v1171, %v1174
        %vm1176 = vcmp.lt.s32.totalorder %v1175, 0
        %v1177 = vsub.s32 0, %v1175
        %v1178 = vsel %vm1176, %v1177, %v1175
        %v1179 = vclz %v1178
        %v1180 = vsub.s32 %v1179, 2
        %vm1181 = vcmp.gt.s32.totalorder 0, %v1180
        %v1182 = vsel %vm1181, 0, %v1180
        %v1183 = vsub.s32 32, %v1182
        %v1184 = vshll.u32 %v1175, %v1182
        %v1185 = vshrl.u32 %v1167, %v1183
        %v1186 = vor.u32 %v1184, %v1185
        %v1187 = vsub.s32 4294967266, %v1182
        %v1188 = vadd.s32 %v1187, 127
        %v1189 = vshll.u32 %v1188, 23
        %v1190 = vor.u32 4788187, %v1189
        %v1191 = vand.u32 2147483647, %v1190
        %v1193 = vcvt.s32.f32 %v1186
        %v1194 = vmul.f32 %v1193, %v1191
        %v1195 = vxor.u32 %v1194, 2147483648
        %v1196 = vsel %vm1113, %v1195, %v1194
        %v1197 = vsub.s32 4, %v1173
        %v1198 = vsel %vm1113, %v1197, %v1173
        %v1199 = vsel %vm1112, %v379, %v1196
        %v1200 = vsel %vm1112, 0, %v1198
        %v1201 = vcosq.f32.pop %v1199
        %v1202 = vsinq.f32.pop %v1199
        %vm1203 = vweird.f32 %v379
        %v1204 = vand.u32 %v1200, 3
        %vm1205 = vcmp.lt.s32.totalorder %v1204, 2
        %vm1206 = vcmp.eq.s32.totalorder %v1204, 0
        %v1207 = vxor.u32 %v1202, 2147483648
        %v1208 = vsel %vm1206, %v1201, %v1207
        %vm1209 = vcmp.eq.s32.totalorder %v1204, 2
        %v1210 = vxor.u32 %v1201, 2147483648
        %v1211 = vsel %vm1209, %v1210, %v1202
        %v1212 = vsel %vm1205, %v1208, %v1211
        %v1213 = vsel %vm1203, nan, %v1212
        %v1214 = vand.u32 2147483647, %v380
        %vm1215 = vcmp.le.f32.partialorder %v1214, 0.7853982
        %vm1216 = vcmp.lt.s32.totalorder %v380, 0
        %v1217 = vand.u32 %v380, 2139095040
        %v1218 = vshrl.u32 %v1217, 23
        %v1219 = vsub.s32 %v1218, 127
        %v1220 = vand.u32 2147483647, %v380
        %v1221 = vand.u32 %v1220, 8388607
        %v1222 = vor.u32 %v1221, 8388608
        %v1223 = vsub.s32 0, %v1222
        %v1224 = vadd.s32 %v1219, 1
        %vm1225 = vcmp.gt.s32.totalorder %v1224, 0
        %v1226 = vsel %vm1225, %v1224, 0
        %v1227 = vshrl.u32 %v1226, 5
        %v1228 = vand.u32 %v1226, 31
        %v1229 = vsub.s32 32, %v1228
        %v1230 = vshrl.u32 683565275, %v1229
        %v1231 = vshll.u32 683565275, %v1228
        %v1232 = vshrl.u32 2475754826, %v1229
        %v1233 = vor.u32 %v1231, %v1232
        %v1234 = vshll.u32 2475754826, %v1228
        %v1235 = vshrl.u32 2131351028, %v1229
        %v1236 = vor.u32 %v1234, %v1235
        %v1237 = vshll.u32 2131351028, %v1228
        %v1238 = vshrl.u32 2102212464, %v1229
        %v1239 = vor.u32 %v1237, %v1238
        %v1240 = vshll.u32 2102212464, %v1228
        %v1241 = vshrl.u32 920167782, %v1229
        %v1242 = vor.u32 %v1240, %v1241
        %v1243 = vshll.u32 920167782, %v1228
        %v1244 = vshrl.u32 1326507024, %v1229
        %v1245 = vor.u32 %v1243, %v1244
        %vm1246 = vcmp.lt.s32.totalorder %v1227, 1
        %vm1247 = vcmp.lt.s32.totalorder %v1227, 2
        %vm1248 = vcmp.lt.s32.totalorder %v1227, 3
        %vm1249 = vcmp.lt.s32.totalorder %v1227, 4
        %v1250 = vsel %vm1246, %v1230, %v1233
        %v1251 = vsel %vm1249, %v1239, 2102212464
        %v1252 = vsel %vm1248, %v1236, %v1251
        %v1253 = vsel %vm1247, %v1250, %v1252
        %v1254 = vsel %vm1246, %v1233, %v1236
        %v1255 = vsel %vm1249, %v1242, 920167782
        %v1256 = vsel %vm1248, %v1239, %v1255
        %v1257 = vsel %vm1247, %v1254, %v1256
        %v1258 = vsel %vm1246, %v1236, %v1239
        %v1259 = vsel %vm1249, %v1245, 1326507024
        %v1260 = vsel %vm1248, %v1242, %v1259
        %v1261 = vsel %vm1247, %v1258, %v1260
        %v1262 = vshll.u32 %v1222, 8
        %v1263 = vmul.u32.u64.compose %v1262, %v1261
        %v1264 = vextract.low.u32 %v1263
        %v1265 = vextract.high.u32 %v1263
        %v1266 = vmul.u32.u64.compose %v1262, %v1257
        %v1267 = vextract.low.u32 %v1266
        %v1268 = vextract.high.u32 %v1266
        %v1269 = vmul.u32 %v1262, %v1253
        %v1270 = vadd.s32 %v1265, %v1267
        %vm1271 = vc.u32 %v1265, %v1267
        %v1272 = vadd.s32 %v1268, 1
        %v1273 = vsel %vm1271, %v1272, %v1268
        %v1274 = vadd.s32 %v1269, %v1273
        %v1275 = vadd.s32 %v1274, 536870912
        %v1276 = vshrl.u32 %v1275, 30
        %v1277 = vshll.u32 %v1276, 30
        %v1278 = vsub.s32 %v1274, %v1277
        %vm1279 = vcmp.lt.s32.totalorder %v1278, 0
        %v1280 = vsub.s32 0, %v1278
        %v1281 = vsel %vm1279, %v1280, %v1278
        %v1282 = vclz %v1281
        %v1283 = vsub.s32 %v1282, 2
        %vm1284 = vcmp.gt.s32.totalorder 0, %v1283
        %v1285 = vsel %vm1284, 0, %v1283
        %v1286 = vsub.s32 32, %v1285
        %v1287 = vshll.u32 %v1278, %v1285
        %v1288 = vshrl.u32 %v1270, %v1286
        %v1289 = vor.u32 %v1287, %v1288
        %v1290 = vsub.s32 4294967266, %v1285
        %v1291 = vadd.s32 %v1290, 127
        %v1292 = vshll.u32 %v1291, 23
        %v1293 = vor.u32 4788187, %v1292
        %v1294 = vand.u32 2147483647, %v1293
        %v1296 = vcvt.s32.f32 %v1289
        %v1297 = vmul.f32 %v1296, %v1294
        %v1298 = vxor.u32 %v1297, 2147483648
        %v1299 = vsel %vm1216, %v1298, %v1297
        %v1300 = vsub.s32 4, %v1276
        %v1301 = vsel %vm1216, %v1300, %v1276
        %v1302 = vsel %vm1215, %v380, %v1299
        %v1303 = vsel %vm1215, 0, %v1301
        %v1304 = vcosq.f32.pop %v1302
        %v1305 = vsinq.f32.pop %v1302
        %vm1306 = vweird.f32 %v380
        %v1307 = vand.u32 %v1303, 3
        %vm1308 = vcmp.lt.s32.totalorder %v1307, 2
        %vm1309 = vcmp.eq.s32.totalorder %v1307, 0
        %v1310 = vxor.u32 %v1305, 2147483648
        %v1311 = vsel %vm1309, %v1304, %v1310
        %vm1312 = vcmp.eq.s32.totalorder %v1307, 2
        %v1313 = vxor.u32 %v1304, 2147483648
        %v1314 = vsel %vm1312, %v1313, %v1305
        %v1315 = vsel %vm1308, %v1311, %v1314
        %v1316 = vsel %vm1306, nan, %v1315
        %v1317 = vand.u32 2147483647, %v381
        %vm1318 = vcmp.le.f32.partialorder %v1317, 0.7853982
        %vm1319 = vcmp.lt.s32.totalorder %v381, 0
        %v1320 = vand.u32 %v381, 2139095040
        %v1321 = vshrl.u32 %v1320, 23
        %v1322 = vsub.s32 %v1321, 127
        %v1323 = vand.u32 2147483647, %v381
        %v1324 = vand.u32 %v1323, 8388607
        %v1325 = vor.u32 %v1324, 8388608
        %v1326 = vsub.s32 0, %v1325
        %v1327 = vadd.s32 %v1322, 1
        %vm1328 = vcmp.gt.s32.totalorder %v1327, 0
        %v1329 = vsel %vm1328, %v1327, 0
        %v1330 = vshrl.u32 %v1329, 5
        %v1331 = vand.u32 %v1329, 31
        %v1332 = vsub.s32 32, %v1331
        %v1333 = vshrl.u32 683565275, %v1332
        %v1334 = vshll.u32 683565275, %v1331
        %v1335 = vshrl.u32 2475754826, %v1332
        %v1336 = vor.u32 %v1334, %v1335
        %v1337 = vshll.u32 2475754826, %v1331
        %v1338 = vshrl.u32 2131351028, %v1332
        %v1339 = vor.u32 %v1337, %v1338
        %v1340 = vshll.u32 2131351028, %v1331
        %v1341 = vshrl.u32 2102212464, %v1332
        %v1342 = vor.u32 %v1340, %v1341
        %v1343 = vshll.u32 2102212464, %v1331
        %v1344 = vshrl.u32 920167782, %v1332
        %v1345 = vor.u32 %v1343, %v1344
        %v1346 = vshll.u32 920167782, %v1331
        %v1347 = vshrl.u32 1326507024, %v1332
        %v1348 = vor.u32 %v1346, %v1347
        %vm1349 = vcmp.lt.s32.totalorder %v1330, 1
        %vm1350 = vcmp.lt.s32.totalorder %v1330, 2
        %vm1351 = vcmp.lt.s32.totalorder %v1330, 3
        %vm1352 = vcmp.lt.s32.totalorder %v1330, 4
        %v1353 = vsel %vm1349, %v1333, %v1336
        %v1354 = vsel %vm1352, %v1342, 2102212464
        %v1355 = vsel %vm1351, %v1339, %v1354
        %v1356 = vsel %vm1350, %v1353, %v1355
        %v1357 = vsel %vm1349, %v1336, %v1339
        %v1358 = vsel %vm1352, %v1345, 920167782
        %v1359 = vsel %vm1351, %v1342, %v1358
        %v1360 = vsel %vm1350, %v1357, %v1359
        %v1361 = vsel %vm1349, %v1339, %v1342
        %v1362 = vsel %vm1352, %v1348, 1326507024
        %v1363 = vsel %vm1351, %v1345, %v1362
        %v1364 = vsel %vm1350, %v1361, %v1363
        %v1365 = vshll.u32 %v1325, 8
        %v1366 = vmul.u32.u64.compose %v1365, %v1364
        %v1367 = vextract.low.u32 %v1366
        %v1368 = vextract.high.u32 %v1366
        %v1369 = vmul.u32.u64.compose %v1365, %v1360
        %v1370 = vextract.low.u32 %v1369
        %v1371 = vextract.high.u32 %v1369
        %v1372 = vmul.u32 %v1365, %v1356
        %v1373 = vadd.s32 %v1368, %v1370
        %vm1374 = vc.u32 %v1368, %v1370
        %v1375 = vadd.s32 %v1371, 1
        %v1376 = vsel %vm1374, %v1375, %v1371
        %v1377 = vadd.s32 %v1372, %v1376
        %v1378 = vadd.s32 %v1377, 536870912
        %v1379 = vshrl.u32 %v1378, 30
        %v1380 = vshll.u32 %v1379, 30
        %v1381 = vsub.s32 %v1377, %v1380
        %vm1382 = vcmp.lt.s32.totalorder %v1381, 0
        %v1383 = vsub.s32 0, %v1381
        %v1384 = vsel %vm1382, %v1383, %v1381
        %v1385 = vclz %v1384
        %v1386 = vsub.s32 %v1385, 2
        %vm1387 = vcmp.gt.s32.totalorder 0, %v1386
        %v1388 = vsel %vm1387, 0, %v1386
        %v1389 = vsub.s32 32, %v1388
        %v1390 = vshll.u32 %v1381, %v1388
        %v1391 = vshrl.u32 %v1373, %v1389
        %v1392 = vor.u32 %v1390, %v1391
        %v1393 = vsub.s32 4294967266, %v1388
        %v1394 = vadd.s32 %v1393, 127
        %v1395 = vshll.u32 %v1394, 23
        %v1396 = vor.u32 4788187, %v1395
        %v1397 = vand.u32 2147483647, %v1396
        %v1399 = vcvt.s32.f32 %v1392
        %v1400 = vmul.f32 %v1399, %v1397
        %v1401 = vxor.u32 %v1400, 2147483648
        %v1402 = vsel %vm1319, %v1401, %v1400
        %v1403 = vsub.s32 4, %v1379
        %v1404 = vsel %vm1319, %v1403, %v1379
        %v1405 = vsel %vm1318, %v381, %v1402
        %v1406 = vsel %vm1318, 0, %v1404
        %v1407 = vcosq.f32.pop %v1405
        %v1408 = vsinq.f32.pop %v1405
        %vm1409 = vweird.f32 %v381
        %v1410 = vand.u32 %v1406, 3
        %vm1411 = vcmp.lt.s32.totalorder %v1410, 2
        %vm1412 = vcmp.eq.s32.totalorder %v1410, 0
        %v1413 = vxor.u32 %v1408, 2147483648
        %v1414 = vsel %vm1412, %v1407, %v1413
        %vm1415 = vcmp.eq.s32.totalorder %v1410, 2
        %v1416 = vxor.u32 %v1407, 2147483648
        %v1417 = vsel %vm1415, %v1416, %v1408
        %v1418 = vsel %vm1411, %v1414, %v1417
        %v1419 = vsel %vm1409, nan, %v1418
        %v1420 = vand.u32 2147483647, %v382
        %vm1421 = vcmp.le.f32.partialorder %v1420, 0.7853982
        %vm1422 = vcmp.lt.s32.totalorder %v382, 0
        %v1423 = vand.u32 %v382, 2139095040
        %v1424 = vshrl.u32 %v1423, 23
        %v1425 = vsub.s32 %v1424, 127
        %v1426 = vand.u32 2147483647, %v382
        %v1427 = vand.u32 %v1426, 8388607
        %v1428 = vor.u32 %v1427, 8388608
        %v1429 = vsub.s32 0, %v1428
        %v1430 = vadd.s32 %v1425, 1
        %vm1431 = vcmp.gt.s32.totalorder %v1430, 0
        %v1432 = vsel %vm1431, %v1430, 0
        %v1433 = vshrl.u32 %v1432, 5
        %v1434 = vand.u32 %v1432, 31
        %v1435 = vsub.s32 32, %v1434
        %v1436 = vshrl.u32 683565275, %v1435
        %v1437 = vshll.u32 683565275, %v1434
        %v1438 = vshrl.u32 2475754826, %v1435
        %v1439 = vor.u32 %v1437, %v1438
        %v1440 = vshll.u32 2475754826, %v1434
        %v1441 = vshrl.u32 2131351028, %v1435
        %v1442 = vor.u32 %v1440, %v1441
        %v1443 = vshll.u32 2131351028, %v1434
        %v1444 = vshrl.u32 2102212464, %v1435
        %v1445 = vor.u32 %v1443, %v1444
        %v1446 = vshll.u32 2102212464, %v1434
        %v1447 = vshrl.u32 920167782, %v1435
        %v1448 = vor.u32 %v1446, %v1447
        %v1449 = vshll.u32 920167782, %v1434
        %v1450 = vshrl.u32 1326507024, %v1435
        %v1451 = vor.u32 %v1449, %v1450
        %vm1452 = vcmp.lt.s32.totalorder %v1433, 1
        %vm1453 = vcmp.lt.s32.totalorder %v1433, 2
        %vm1454 = vcmp.lt.s32.totalorder %v1433, 3
        %vm1455 = vcmp.lt.s32.totalorder %v1433, 4
        %v1456 = vsel %vm1452, %v1436, %v1439
        %v1457 = vsel %vm1455, %v1445, 2102212464
        %v1458 = vsel %vm1454, %v1442, %v1457
        %v1459 = vsel %vm1453, %v1456, %v1458
        %v1460 = vsel %vm1452, %v1439, %v1442
        %v1461 = vsel %vm1455, %v1448, 920167782
        %v1462 = vsel %vm1454, %v1445, %v1461
        %v1463 = vsel %vm1453, %v1460, %v1462
        %v1464 = vsel %vm1452, %v1442, %v1445
        %v1465 = vsel %vm1455, %v1451, 1326507024
        %v1466 = vsel %vm1454, %v1448, %v1465
        %v1467 = vsel %vm1453, %v1464, %v1466
        %v1468 = vshll.u32 %v1428, 8
        %v1469 = vmul.u32.u64.compose %v1468, %v1467
        %v1470 = vextract.low.u32 %v1469
        %v1471 = vextract.high.u32 %v1469
        %v1472 = vmul.u32.u64.compose %v1468, %v1463
        %v1473 = vextract.low.u32 %v1472
        %v1474 = vextract.high.u32 %v1472
        %v1475 = vmul.u32 %v1468, %v1459
        %v1476 = vadd.s32 %v1471, %v1473
        %vm1477 = vc.u32 %v1471, %v1473
        %v1478 = vadd.s32 %v1474, 1
        %v1479 = vsel %vm1477, %v1478, %v1474
        %v1480 = vadd.s32 %v1475, %v1479
        %v1481 = vadd.s32 %v1480, 536870912
        %v1482 = vshrl.u32 %v1481, 30
        %v1483 = vshll.u32 %v1482, 30
        %v1484 = vsub.s32 %v1480, %v1483
        %vm1485 = vcmp.lt.s32.totalorder %v1484, 0
        %v1486 = vsub.s32 0, %v1484
        %v1487 = vsel %vm1485, %v1486, %v1484
        %v1488 = vclz %v1487
        %v1489 = vsub.s32 %v1488, 2
        %vm1490 = vcmp.gt.s32.totalorder 0, %v1489
        %v1491 = vsel %vm1490, 0, %v1489
        %v1492 = vsub.s32 32, %v1491
        %v1493 = vshll.u32 %v1484, %v1491
        %v1494 = vshrl.u32 %v1476, %v1492
        %v1495 = vor.u32 %v1493, %v1494
        %v1496 = vsub.s32 4294967266, %v1491
        %v1497 = vadd.s32 %v1496, 127
        %v1498 = vshll.u32 %v1497, 23
        %v1499 = vor.u32 4788187, %v1498
        %v1500 = vand.u32 2147483647, %v1499
        %v1502 = vcvt.s32.f32 %v1495
        %v1503 = vmul.f32 %v1502, %v1500
        %v1504 = vxor.u32 %v1503, 2147483648
        %v1505 = vsel %vm1422, %v1504, %v1503
        %v1506 = vsub.s32 4, %v1482
        %v1507 = vsel %vm1422, %v1506, %v1482
        %v1508 = vsel %vm1421, %v382, %v1505
        %v1509 = vsel %vm1421, 0, %v1507
        %v1510 = vcosq.f32.pop %v1508
        %v1511 = vsinq.f32.pop %v1508
        %vm1512 = vweird.f32 %v382
        %v1513 = vand.u32 %v1509, 3
        %vm1514 = vcmp.lt.s32.totalorder %v1513, 2
        %vm1515 = vcmp.eq.s32.totalorder %v1513, 0
        %v1516 = vxor.u32 %v1511, 2147483648
        %v1517 = vsel %vm1515, %v1510, %v1516
        %vm1518 = vcmp.eq.s32.totalorder %v1513, 2
        %v1519 = vxor.u32 %v1510, 2147483648
        %v1520 = vsel %vm1518, %v1519, %v1511
        %v1521 = vsel %vm1514, %v1517, %v1520
        %v1522 = vsel %vm1512, nan, %v1521
        %v1523 = vand.u32 2147483647, %v383
        %vm1524 = vcmp.le.f32.partialorder %v1523, 0.7853982
        %vm1525 = vcmp.lt.s32.totalorder %v383, 0
        %v1526 = vand.u32 %v383, 2139095040
        %v1527 = vshrl.u32 %v1526, 23
        %v1528 = vsub.s32 %v1527, 127
        %v1529 = vand.u32 2147483647, %v383
        %v1530 = vand.u32 %v1529, 8388607
        %v1531 = vor.u32 %v1530, 8388608
        %v1532 = vsub.s32 0, %v1531
        %v1533 = vadd.s32 %v1528, 1
        %vm1534 = vcmp.gt.s32.totalorder %v1533, 0
        %v1535 = vsel %vm1534, %v1533, 0
        %v1536 = vshrl.u32 %v1535, 5
        %v1537 = vand.u32 %v1535, 31
        %v1538 = vsub.s32 32, %v1537
        %v1539 = vshrl.u32 683565275, %v1538
        %v1540 = vshll.u32 683565275, %v1537
        %v1541 = vshrl.u32 2475754826, %v1538
        %v1542 = vor.u32 %v1540, %v1541
        %v1543 = vshll.u32 2475754826, %v1537
        %v1544 = vshrl.u32 2131351028, %v1538
        %v1545 = vor.u32 %v1543, %v1544
        %v1546 = vshll.u32 2131351028, %v1537
        %v1547 = vshrl.u32 2102212464, %v1538
        %v1548 = vor.u32 %v1546, %v1547
        %v1549 = vshll.u32 2102212464, %v1537
        %v1550 = vshrl.u32 920167782, %v1538
        %v1551 = vor.u32 %v1549, %v1550
        %v1552 = vshll.u32 920167782, %v1537
        %v1553 = vshrl.u32 1326507024, %v1538
        %v1554 = vor.u32 %v1552, %v1553
        %vm1555 = vcmp.lt.s32.totalorder %v1536, 1
        %vm1556 = vcmp.lt.s32.totalorder %v1536, 2
        %vm1557 = vcmp.lt.s32.totalorder %v1536, 3
        %vm1558 = vcmp.lt.s32.totalorder %v1536, 4
        %v1559 = vsel %vm1555, %v1539, %v1542
        %v1560 = vsel %vm1558, %v1548, 2102212464
        %v1561 = vsel %vm1557, %v1545, %v1560
        %v1562 = vsel %vm1556, %v1559, %v1561
        %v1563 = vsel %vm1555, %v1542, %v1545
        %v1564 = vsel %vm1558, %v1551, 920167782
        %v1565 = vsel %vm1557, %v1548, %v1564
        %v1566 = vsel %vm1556, %v1563, %v1565
        %v1567 = vsel %vm1555, %v1545, %v1548
        %v1568 = vsel %vm1558, %v1554, 1326507024
        %v1569 = vsel %vm1557, %v1551, %v1568
        %v1570 = vsel %vm1556, %v1567, %v1569
        %v1571 = vshll.u32 %v1531, 8
        %v1572 = vmul.u32.u64.compose %v1571, %v1570
        %v1573 = vextract.low.u32 %v1572
        %v1574 = vextract.high.u32 %v1572
        %v1575 = vmul.u32.u64.compose %v1571, %v1566
        %v1576 = vextract.low.u32 %v1575
        %v1577 = vextract.high.u32 %v1575
        %v1578 = vmul.u32 %v1571, %v1562
        %v1579 = vadd.s32 %v1574, %v1576
        %vm1580 = vc.u32 %v1574, %v1576
        %v1581 = vadd.s32 %v1577, 1
        %v1582 = vsel %vm1580, %v1581, %v1577
        %v1583 = vadd.s32 %v1578, %v1582
        %v1584 = vadd.s32 %v1583, 536870912
        %v1585 = vshrl.u32 %v1584, 30
        %v1586 = vshll.u32 %v1585, 30
        %v1587 = vsub.s32 %v1583, %v1586
        %vm1588 = vcmp.lt.s32.totalorder %v1587, 0
        %v1589 = vsub.s32 0, %v1587
        %v1590 = vsel %vm1588, %v1589, %v1587
        %v1591 = vclz %v1590
        %v1592 = vsub.s32 %v1591, 2
        %vm1593 = vcmp.gt.s32.totalorder 0, %v1592
        %v1594 = vsel %vm1593, 0, %v1592
        %v1595 = vsub.s32 32, %v1594
        %v1596 = vshll.u32 %v1587, %v1594
        %v1597 = vshrl.u32 %v1579, %v1595
        %v1598 = vor.u32 %v1596, %v1597
        %v1599 = vsub.s32 4294967266, %v1594
        %v1600 = vadd.s32 %v1599, 127
        %v1601 = vshll.u32 %v1600, 23
        %v1602 = vor.u32 4788187, %v1601
        %v1603 = vand.u32 2147483647, %v1602
        %v1605 = vcvt.s32.f32 %v1598
        %v1606 = vmul.f32 %v1605, %v1603
        %v1607 = vxor.u32 %v1606, 2147483648
        %v1608 = vsel %vm1525, %v1607, %v1606
        %v1609 = vsub.s32 4, %v1585
        %v1610 = vsel %vm1525, %v1609, %v1585
        %v1611 = vsel %vm1524, %v383, %v1608
        %v1612 = vsel %vm1524, 0, %v1610
        %v1613 = vcosq.f32.pop %v1611
        %v1614 = vsinq.f32.pop %v1611
        %vm1615 = vweird.f32 %v383
        %v1616 = vand.u32 %v1612, 3
        %vm1617 = vcmp.lt.s32.totalorder %v1616, 2
        %vm1618 = vcmp.eq.s32.totalorder %v1616, 0
        %v1619 = vxor.u32 %v1614, 2147483648
        %v1620 = vsel %vm1618, %v1613, %v1619
        %vm1621 = vcmp.eq.s32.totalorder %v1616, 2
        %v1622 = vxor.u32 %v1613, 2147483648
        %v1623 = vsel %vm1621, %v1622, %v1614
        %v1624 = vsel %vm1617, %v1620, %v1623
        %v1625 = vsel %vm1615, nan, %v1624
        %v1626 = vand.u32 2147483647, %v384
        %vm1627 = vcmp.le.f32.partialorder %v1626, 0.7853982
        %vm1628 = vcmp.lt.s32.totalorder %v384, 0
        %v1629 = vand.u32 %v384, 2139095040
        %v1630 = vshrl.u32 %v1629, 23
        %v1631 = vsub.s32 %v1630, 127
        %v1632 = vand.u32 2147483647, %v384
        %v1633 = vand.u32 %v1632, 8388607
        %v1634 = vor.u32 %v1633, 8388608
        %v1635 = vsub.s32 0, %v1634
        %v1636 = vadd.s32 %v1631, 1
        %vm1637 = vcmp.gt.s32.totalorder %v1636, 0
        %v1638 = vsel %vm1637, %v1636, 0
        %v1639 = vshrl.u32 %v1638, 5
        %v1640 = vand.u32 %v1638, 31
        %v1641 = vsub.s32 32, %v1640
        %v1642 = vshrl.u32 683565275, %v1641
        %v1643 = vshll.u32 683565275, %v1640
        %v1644 = vshrl.u32 2475754826, %v1641
        %v1645 = vor.u32 %v1643, %v1644
        %v1646 = vshll.u32 2475754826, %v1640
        %v1647 = vshrl.u32 2131351028, %v1641
        %v1648 = vor.u32 %v1646, %v1647
        %v1649 = vshll.u32 2131351028, %v1640
        %v1650 = vshrl.u32 2102212464, %v1641
        %v1651 = vor.u32 %v1649, %v1650
        %v1652 = vshll.u32 2102212464, %v1640
        %v1653 = vshrl.u32 920167782, %v1641
        %v1654 = vor.u32 %v1652, %v1653
        %v1655 = vshll.u32 920167782, %v1640
        %v1656 = vshrl.u32 1326507024, %v1641
        %v1657 = vor.u32 %v1655, %v1656
        %vm1658 = vcmp.lt.s32.totalorder %v1639, 1
        %vm1659 = vcmp.lt.s32.totalorder %v1639, 2
        %vm1660 = vcmp.lt.s32.totalorder %v1639, 3
        %vm1661 = vcmp.lt.s32.totalorder %v1639, 4
        %v1662 = vsel %vm1658, %v1642, %v1645
        %v1663 = vsel %vm1661, %v1651, 2102212464
        %v1664 = vsel %vm1660, %v1648, %v1663
        %v1665 = vsel %vm1659, %v1662, %v1664
        %v1666 = vsel %vm1658, %v1645, %v1648
        %v1667 = vsel %vm1661, %v1654, 920167782
        %v1668 = vsel %vm1660, %v1651, %v1667
        %v1669 = vsel %vm1659, %v1666, %v1668
        %v1670 = vsel %vm1658, %v1648, %v1651
        %v1671 = vsel %vm1661, %v1657, 1326507024
        %v1672 = vsel %vm1660, %v1654, %v1671
        %v1673 = vsel %vm1659, %v1670, %v1672
        %v1674 = vshll.u32 %v1634, 8
        %v1675 = vmul.u32.u64.compose %v1674, %v1673
        %v1676 = vextract.low.u32 %v1675
        %v1677 = vextract.high.u32 %v1675
        %v1678 = vmul.u32.u64.compose %v1674, %v1669
        %v1679 = vextract.low.u32 %v1678
        %v1680 = vextract.high.u32 %v1678
        %v1681 = vmul.u32 %v1674, %v1665
        %v1682 = vadd.s32 %v1677, %v1679
        %vm1683 = vc.u32 %v1677, %v1679
        %v1684 = vadd.s32 %v1680, 1
        %v1685 = vsel %vm1683, %v1684, %v1680
        %v1686 = vadd.s32 %v1681, %v1685
        %v1687 = vadd.s32 %v1686, 536870912
        %v1688 = vshrl.u32 %v1687, 30
        %v1689 = vshll.u32 %v1688, 30
        %v1690 = vsub.s32 %v1686, %v1689
        %vm1691 = vcmp.lt.s32.totalorder %v1690, 0
        %v1692 = vsub.s32 0, %v1690
        %v1693 = vsel %vm1691, %v1692, %v1690
        %v1694 = vclz %v1693
        %v1695 = vsub.s32 %v1694, 2
        %vm1696 = vcmp.gt.s32.totalorder 0, %v1695
        %v1697 = vsel %vm1696, 0, %v1695
        %v1698 = vsub.s32 32, %v1697
        %v1699 = vshll.u32 %v1690, %v1697
        %v1700 = vshrl.u32 %v1682, %v1698
        %v1701 = vor.u32 %v1699, %v1700
        %v1702 = vsub.s32 4294967266, %v1697
        %v1703 = vadd.s32 %v1702, 127
        %v1704 = vshll.u32 %v1703, 23
        %v1705 = vor.u32 4788187, %v1704
        %v1706 = vand.u32 2147483647, %v1705
        %v1708 = vcvt.s32.f32 %v1701
        %v1709 = vmul.f32 %v1708, %v1706
        %v1710 = vxor.u32 %v1709, 2147483648
        %v1711 = vsel %vm1628, %v1710, %v1709
        %v1712 = vsub.s32 4, %v1688
        %v1713 = vsel %vm1628, %v1712, %v1688
        %v1714 = vsel %vm1627, %v384, %v1711
        %v1715 = vsel %vm1627, 0, %v1713
        %v1716 = vcosq.f32.pop %v1714
        %v1717 = vsinq.f32.pop %v1714
        %vm1718 = vweird.f32 %v384
        %v1719 = vand.u32 %v1715, 3
        %vm1720 = vcmp.lt.s32.totalorder %v1719, 2
        %vm1721 = vcmp.eq.s32.totalorder %v1719, 0
        %v1722 = vxor.u32 %v1717, 2147483648
        %v1723 = vsel %vm1721, %v1716, %v1722
        %vm1724 = vcmp.eq.s32.totalorder %v1719, 2
        %v1725 = vxor.u32 %v1716, 2147483648
        %v1726 = vsel %vm1724, %v1725, %v1717
        %v1727 = vsel %vm1720, %v1723, %v1726
        %v1728 = vsel %vm1718, nan, %v1727
        %v1729 = vand.u32 2147483647, %v385
        %vm1730 = vcmp.le.f32.partialorder %v1729, 0.7853982
        %vm1731 = vcmp.lt.s32.totalorder %v385, 0
        %v1732 = vand.u32 %v385, 2139095040
        %v1733 = vshrl.u32 %v1732, 23
        %v1734 = vsub.s32 %v1733, 127
        %v1735 = vand.u32 2147483647, %v385
        %v1736 = vand.u32 %v1735, 8388607
        %v1737 = vor.u32 %v1736, 8388608
        %v1738 = vsub.s32 0, %v1737
        %v1739 = vadd.s32 %v1734, 1
        %vm1740 = vcmp.gt.s32.totalorder %v1739, 0
        %v1741 = vsel %vm1740, %v1739, 0
        %v1742 = vshrl.u32 %v1741, 5
        %v1743 = vand.u32 %v1741, 31
        %v1744 = vsub.s32 32, %v1743
        %v1745 = vshrl.u32 683565275, %v1744
        %v1746 = vshll.u32 683565275, %v1743
        %v1747 = vshrl.u32 2475754826, %v1744
        %v1748 = vor.u32 %v1746, %v1747
        %v1749 = vshll.u32 2475754826, %v1743
        %v1750 = vshrl.u32 2131351028, %v1744
        %v1751 = vor.u32 %v1749, %v1750
        %v1752 = vshll.u32 2131351028, %v1743
        %v1753 = vshrl.u32 2102212464, %v1744
        %v1754 = vor.u32 %v1752, %v1753
        %v1755 = vshll.u32 2102212464, %v1743
        %v1756 = vshrl.u32 920167782, %v1744
        %v1757 = vor.u32 %v1755, %v1756
        %v1758 = vshll.u32 920167782, %v1743
        %v1759 = vshrl.u32 1326507024, %v1744
        %v1760 = vor.u32 %v1758, %v1759
        %vm1761 = vcmp.lt.s32.totalorder %v1742, 1
        %vm1762 = vcmp.lt.s32.totalorder %v1742, 2
        %vm1763 = vcmp.lt.s32.totalorder %v1742, 3
        %vm1764 = vcmp.lt.s32.totalorder %v1742, 4
        %v1765 = vsel %vm1761, %v1745, %v1748
        %v1766 = vsel %vm1764, %v1754, 2102212464
        %v1767 = vsel %vm1763, %v1751, %v1766
        %v1768 = vsel %vm1762, %v1765, %v1767
        %v1769 = vsel %vm1761, %v1748, %v1751
        %v1770 = vsel %vm1764, %v1757, 920167782
        %v1771 = vsel %vm1763, %v1754, %v1770
        %v1772 = vsel %vm1762, %v1769, %v1771
        %v1773 = vsel %vm1761, %v1751, %v1754
        %v1774 = vsel %vm1764, %v1760, 1326507024
        %v1775 = vsel %vm1763, %v1757, %v1774
        %v1776 = vsel %vm1762, %v1773, %v1775
        %v1777 = vshll.u32 %v1737, 8
        %v1778 = vmul.u32.u64.compose %v1777, %v1776
        %v1779 = vextract.low.u32 %v1778
        %v1780 = vextract.high.u32 %v1778
        %v1781 = vmul.u32.u64.compose %v1777, %v1772
        %v1782 = vextract.low.u32 %v1781
        %v1783 = vextract.high.u32 %v1781
        %v1784 = vmul.u32 %v1777, %v1768
        %v1785 = vadd.s32 %v1780, %v1782
        %vm1786 = vc.u32 %v1780, %v1782
        %v1787 = vadd.s32 %v1783, 1
        %v1788 = vsel %vm1786, %v1787, %v1783
        %v1789 = vadd.s32 %v1784, %v1788
        %v1790 = vadd.s32 %v1789, 536870912
        %v1791 = vshrl.u32 %v1790, 30
        %v1792 = vshll.u32 %v1791, 30
        %v1793 = vsub.s32 %v1789, %v1792
        %vm1794 = vcmp.lt.s32.totalorder %v1793, 0
        %v1795 = vsub.s32 0, %v1793
        %v1796 = vsel %vm1794, %v1795, %v1793
        %v1797 = vclz %v1796
        %v1798 = vsub.s32 %v1797, 2
        %vm1799 = vcmp.gt.s32.totalorder 0, %v1798
        %v1800 = vsel %vm1799, 0, %v1798
        %v1801 = vsub.s32 32, %v1800
        %v1802 = vshll.u32 %v1793, %v1800
        %v1803 = vshrl.u32 %v1785, %v1801
        %v1804 = vor.u32 %v1802, %v1803
        %v1805 = vsub.s32 4294967266, %v1800
        %v1806 = vadd.s32 %v1805, 127
        %v1807 = vshll.u32 %v1806, 23
        %v1808 = vor.u32 4788187, %v1807
        %v1809 = vand.u32 2147483647, %v1808
        %v1811 = vcvt.s32.f32 %v1804
        %v1812 = vmul.f32 %v1811, %v1809
        %v1813 = vxor.u32 %v1812, 2147483648
        %v1814 = vsel %vm1731, %v1813, %v1812
        %v1815 = vsub.s32 4, %v1791
        %v1816 = vsel %vm1731, %v1815, %v1791
        %v1817 = vsel %vm1730, %v385, %v1814
        %v1818 = vsel %vm1730, 0, %v1816
        %v1819 = vcosq.f32.pop %v1817
        %v1820 = vsinq.f32.pop %v1817
        %vm1821 = vweird.f32 %v385
        %v1822 = vand.u32 %v1818, 3
        %vm1823 = vcmp.lt.s32.totalorder %v1822, 2
        %vm1824 = vcmp.eq.s32.totalorder %v1822, 0
        %v1825 = vxor.u32 %v1820, 2147483648
        %v1826 = vsel %vm1824, %v1819, %v1825
        %vm1827 = vcmp.eq.s32.totalorder %v1822, 2
        %v1828 = vxor.u32 %v1819, 2147483648
        %v1829 = vsel %vm1827, %v1828, %v1820
        %v1830 = vsel %vm1823, %v1826, %v1829
        %v1831 = vsel %vm1821, nan, %v1830
        %v1832 = vand.u32 2147483647, %v386
        %vm1833 = vcmp.le.f32.partialorder %v1832, 0.7853982
        %vm1834 = vcmp.lt.s32.totalorder %v386, 0
        %v1835 = vand.u32 %v386, 2139095040
        %v1836 = vshrl.u32 %v1835, 23
        %v1837 = vsub.s32 %v1836, 127
        %v1838 = vand.u32 2147483647, %v386
        %v1839 = vand.u32 %v1838, 8388607
        %v1840 = vor.u32 %v1839, 8388608
        %v1841 = vsub.s32 0, %v1840
        %v1842 = vadd.s32 %v1837, 1
        %vm1843 = vcmp.gt.s32.totalorder %v1842, 0
        %v1844 = vsel %vm1843, %v1842, 0
        %v1845 = vshrl.u32 %v1844, 5
        %v1846 = vand.u32 %v1844, 31
        %v1847 = vsub.s32 32, %v1846
        %v1848 = vshrl.u32 683565275, %v1847
        %v1849 = vshll.u32 683565275, %v1846
        %v1850 = vshrl.u32 2475754826, %v1847
        %v1851 = vor.u32 %v1849, %v1850
        %v1852 = vshll.u32 2475754826, %v1846
        %v1853 = vshrl.u32 2131351028, %v1847
        %v1854 = vor.u32 %v1852, %v1853
        %v1855 = vshll.u32 2131351028, %v1846
        %v1856 = vshrl.u32 2102212464, %v1847
        %v1857 = vor.u32 %v1855, %v1856
        %v1858 = vshll.u32 2102212464, %v1846
        %v1859 = vshrl.u32 920167782, %v1847
        %v1860 = vor.u32 %v1858, %v1859
        %v1861 = vshll.u32 920167782, %v1846
        %v1862 = vshrl.u32 1326507024, %v1847
        %v1863 = vor.u32 %v1861, %v1862
        %vm1864 = vcmp.lt.s32.totalorder %v1845, 1
        %vm1865 = vcmp.lt.s32.totalorder %v1845, 2
        %vm1866 = vcmp.lt.s32.totalorder %v1845, 3
        %vm1867 = vcmp.lt.s32.totalorder %v1845, 4
        %v1868 = vsel %vm1864, %v1848, %v1851
        %v1869 = vsel %vm1867, %v1857, 2102212464
        %v1870 = vsel %vm1866, %v1854, %v1869
        %v1871 = vsel %vm1865, %v1868, %v1870
        %v1872 = vsel %vm1864, %v1851, %v1854
        %v1873 = vsel %vm1867, %v1860, 920167782
        %v1874 = vsel %vm1866, %v1857, %v1873
        %v1875 = vsel %vm1865, %v1872, %v1874
        %v1876 = vsel %vm1864, %v1854, %v1857
        %v1877 = vsel %vm1867, %v1863, 1326507024
        %v1878 = vsel %vm1866, %v1860, %v1877
        %v1879 = vsel %vm1865, %v1876, %v1878
        %v1880 = vshll.u32 %v1840, 8
        %v1881 = vmul.u32.u64.compose %v1880, %v1879
        %v1882 = vextract.low.u32 %v1881
        %v1883 = vextract.high.u32 %v1881
        %v1884 = vmul.u32.u64.compose %v1880, %v1875
        %v1885 = vextract.low.u32 %v1884
        %v1886 = vextract.high.u32 %v1884
        %v1887 = vmul.u32 %v1880, %v1871
        %v1888 = vadd.s32 %v1883, %v1885
        %vm1889 = vc.u32 %v1883, %v1885
        %v1890 = vadd.s32 %v1886, 1
        %v1891 = vsel %vm1889, %v1890, %v1886
        %v1892 = vadd.s32 %v1887, %v1891
        %v1893 = vadd.s32 %v1892, 536870912
        %v1894 = vshrl.u32 %v1893, 30
        %v1895 = vshll.u32 %v1894, 30
        %v1896 = vsub.s32 %v1892, %v1895
        %vm1897 = vcmp.lt.s32.totalorder %v1896, 0
        %v1898 = vsub.s32 0, %v1896
        %v1899 = vsel %vm1897, %v1898, %v1896
        %v1900 = vclz %v1899
        %v1901 = vsub.s32 %v1900, 2
        %vm1902 = vcmp.gt.s32.totalorder 0, %v1901
        %v1903 = vsel %vm1902, 0, %v1901
        %v1904 = vsub.s32 32, %v1903
        %v1905 = vshll.u32 %v1896, %v1903
        %v1906 = vshrl.u32 %v1888, %v1904
        %v1907 = vor.u32 %v1905, %v1906
        %v1908 = vsub.s32 4294967266, %v1903
        %v1909 = vadd.s32 %v1908, 127
        %v1910 = vshll.u32 %v1909, 23
        %v1911 = vor.u32 4788187, %v1910
        %v1912 = vand.u32 2147483647, %v1911
        %v1914 = vcvt.s32.f32 %v1907
        %v1915 = vmul.f32 %v1914, %v1912
        %v1916 = vxor.u32 %v1915, 2147483648
        %v1917 = vsel %vm1834, %v1916, %v1915
        %v1918 = vsub.s32 4, %v1894
        %v1919 = vsel %vm1834, %v1918, %v1894
        %v1920 = vsel %vm1833, %v386, %v1917
        %v1921 = vsel %vm1833, 0, %v1919
        %v1922 = vcosq.f32.pop %v1920
        %v1923 = vsinq.f32.pop %v1920
        %vm1924 = vweird.f32 %v386
        %v1925 = vand.u32 %v1921, 3
        %vm1926 = vcmp.lt.s32.totalorder %v1925, 2
        %vm1927 = vcmp.eq.s32.totalorder %v1925, 0
        %v1928 = vxor.u32 %v1923, 2147483648
        %v1929 = vsel %vm1927, %v1922, %v1928
        %vm1930 = vcmp.eq.s32.totalorder %v1925, 2
        %v1931 = vxor.u32 %v1922, 2147483648
        %v1932 = vsel %vm1930, %v1931, %v1923
        %v1933 = vsel %vm1926, %v1929, %v1932
        %v1934 = vsel %vm1924, nan, %v1933
        %v1935 = vand.u32 2147483647, %v387
        %vm1936 = vcmp.le.f32.partialorder %v1935, 0.7853982
        %vm1937 = vcmp.lt.s32.totalorder %v387, 0
        %v1938 = vand.u32 %v387, 2139095040
        %v1939 = vshrl.u32 %v1938, 23
        %v1940 = vsub.s32 %v1939, 127
        %v1941 = vand.u32 2147483647, %v387
        %v1942 = vand.u32 %v1941, 8388607
        %v1943 = vor.u32 %v1942, 8388608
        %v1944 = vsub.s32 0, %v1943
        %v1945 = vadd.s32 %v1940, 1
        %vm1946 = vcmp.gt.s32.totalorder %v1945, 0
        %v1947 = vsel %vm1946, %v1945, 0
        %v1948 = vshrl.u32 %v1947, 5
        %v1949 = vand.u32 %v1947, 31
        %v1950 = vsub.s32 32, %v1949
        %v1951 = vshrl.u32 683565275, %v1950
        %v1952 = vshll.u32 683565275, %v1949
        %v1953 = vshrl.u32 2475754826, %v1950
        %v1954 = vor.u32 %v1952, %v1953
        %v1955 = vshll.u32 2475754826, %v1949
        %v1956 = vshrl.u32 2131351028, %v1950
        %v1957 = vor.u32 %v1955, %v1956
        %v1958 = vshll.u32 2131351028, %v1949
        %v1959 = vshrl.u32 2102212464, %v1950
        %v1960 = vor.u32 %v1958, %v1959
        %v1961 = vshll.u32 2102212464, %v1949
        %v1962 = vshrl.u32 920167782, %v1950
        %v1963 = vor.u32 %v1961, %v1962
        %v1964 = vshll.u32 920167782, %v1949
        %v1965 = vshrl.u32 1326507024, %v1950
        %v1966 = vor.u32 %v1964, %v1965
        %vm1967 = vcmp.lt.s32.totalorder %v1948, 1
        %vm1968 = vcmp.lt.s32.totalorder %v1948, 2
        %vm1969 = vcmp.lt.s32.totalorder %v1948, 3
        %vm1970 = vcmp.lt.s32.totalorder %v1948, 4
        %v1971 = vsel %vm1967, %v1951, %v1954
        %v1972 = vsel %vm1970, %v1960, 2102212464
        %v1973 = vsel %vm1969, %v1957, %v1972
        %v1974 = vsel %vm1968, %v1971, %v1973
        %v1975 = vsel %vm1967, %v1954, %v1957
        %v1976 = vsel %vm1970, %v1963, 920167782
        %v1977 = vsel %vm1969, %v1960, %v1976
        %v1978 = vsel %vm1968, %v1975, %v1977
        %v1979 = vsel %vm1967, %v1957, %v1960
        %v1980 = vsel %vm1970, %v1966, 1326507024
        %v1981 = vsel %vm1969, %v1963, %v1980
        %v1982 = vsel %vm1968, %v1979, %v1981
        %v1983 = vshll.u32 %v1943, 8
        %v1984 = vmul.u32.u64.compose %v1983, %v1982
        %v1985 = vextract.low.u32 %v1984
        %v1986 = vextract.high.u32 %v1984
        %v1987 = vmul.u32.u64.compose %v1983, %v1978
        %v1988 = vextract.low.u32 %v1987
        %v1989 = vextract.high.u32 %v1987
        %v1990 = vmul.u32 %v1983, %v1974
        %v1991 = vadd.s32 %v1986, %v1988
        %vm1992 = vc.u32 %v1986, %v1988
        %v1993 = vadd.s32 %v1989, 1
        %v1994 = vsel %vm1992, %v1993, %v1989
        %v1995 = vadd.s32 %v1990, %v1994
        %v1996 = vadd.s32 %v1995, 536870912
        %v1997 = vshrl.u32 %v1996, 30
        %v1998 = vshll.u32 %v1997, 30
        %v1999 = vsub.s32 %v1995, %v1998
        %vm2000 = vcmp.lt.s32.totalorder %v1999, 0
        %v2001 = vsub.s32 0, %v1999
        %v2002 = vsel %vm2000, %v2001, %v1999
        %v2003 = vclz %v2002
        %v2004 = vsub.s32 %v2003, 2
        %vm2005 = vcmp.gt.s32.totalorder 0, %v2004
        %v2006 = vsel %vm2005, 0, %v2004
        %v2007 = vsub.s32 32, %v2006
        %v2008 = vshll.u32 %v1999, %v2006
        %v2009 = vshrl.u32 %v1991, %v2007
        %v2010 = vor.u32 %v2008, %v2009
        %v2011 = vsub.s32 4294967266, %v2006
        %v2012 = vadd.s32 %v2011, 127
        %v2013 = vshll.u32 %v2012, 23
        %v2014 = vor.u32 4788187, %v2013
        %v2015 = vand.u32 2147483647, %v2014
        %v2017 = vcvt.s32.f32 %v2010
        %v2018 = vmul.f32 %v2017, %v2015
        %v2019 = vxor.u32 %v2018, 2147483648
        %v2020 = vsel %vm1937, %v2019, %v2018
        %v2021 = vsub.s32 4, %v1997
        %v2022 = vsel %vm1937, %v2021, %v1997
        %v2023 = vsel %vm1936, %v387, %v2020
        %v2024 = vsel %vm1936, 0, %v2022
        %v2025 = vcosq.f32.pop %v2023
        %v2026 = vsinq.f32.pop %v2023
        %vm2027 = vweird.f32 %v387
        %v2028 = vand.u32 %v2024, 3
        %vm2029 = vcmp.lt.s32.totalorder %v2028, 2
        %vm2030 = vcmp.eq.s32.totalorder %v2028, 0
        %v2031 = vxor.u32 %v2026, 2147483648
        %v2032 = vsel %vm2030, %v2025, %v2031
        %vm2033 = vcmp.eq.s32.totalorder %v2028, 2
        %v2034 = vxor.u32 %v2025, 2147483648
        %v2035 = vsel %vm2033, %v2034, %v2026
        %v2036 = vsel %vm2029, %v2032, %v2035
        %v2037 = vsel %vm2027, nan, %v2036
        %v2038 = vand.u32 2147483647, %v372
        %vm2039 = vcmp.le.f32.partialorder %v2038, 0.7853982
        %vm2040 = vcmp.lt.s32.totalorder %v372, 0
        %v2041 = vand.u32 %v372, 2139095040
        %v2042 = vshrl.u32 %v2041, 23
        %v2043 = vsub.s32 %v2042, 127
        %v2044 = vand.u32 2147483647, %v372
        %v2045 = vand.u32 %v2044, 8388607
        %v2046 = vor.u32 %v2045, 8388608
        %v2047 = vsub.s32 0, %v2046
        %v2048 = vadd.s32 %v2043, 1
        %vm2049 = vcmp.gt.s32.totalorder %v2048, 0
        %v2050 = vsel %vm2049, %v2048, 0
        %v2051 = vshrl.u32 %v2050, 5
        %v2052 = vand.u32 %v2050, 31
        %v2053 = vsub.s32 32, %v2052
        %v2054 = vshrl.u32 683565275, %v2053
        %v2055 = vshll.u32 683565275, %v2052
        %v2056 = vshrl.u32 2475754826, %v2053
        %v2057 = vor.u32 %v2055, %v2056
        %v2058 = vshll.u32 2475754826, %v2052
        %v2059 = vshrl.u32 2131351028, %v2053
        %v2060 = vor.u32 %v2058, %v2059
        %v2061 = vshll.u32 2131351028, %v2052
        %v2062 = vshrl.u32 2102212464, %v2053
        %v2063 = vor.u32 %v2061, %v2062
        %v2064 = vshll.u32 2102212464, %v2052
        %v2065 = vshrl.u32 920167782, %v2053
        %v2066 = vor.u32 %v2064, %v2065
        %v2067 = vshll.u32 920167782, %v2052
        %v2068 = vshrl.u32 1326507024, %v2053
        %v2069 = vor.u32 %v2067, %v2068
        %vm2070 = vcmp.lt.s32.totalorder %v2051, 1
        %vm2071 = vcmp.lt.s32.totalorder %v2051, 2
        %vm2072 = vcmp.lt.s32.totalorder %v2051, 3
        %vm2073 = vcmp.lt.s32.totalorder %v2051, 4
        %v2074 = vsel %vm2070, %v2054, %v2057
        %v2075 = vsel %vm2073, %v2063, 2102212464
        %v2076 = vsel %vm2072, %v2060, %v2075
        %v2077 = vsel %vm2071, %v2074, %v2076
        %v2078 = vsel %vm2070, %v2057, %v2060
        %v2079 = vsel %vm2073, %v2066, 920167782
        %v2080 = vsel %vm2072, %v2063, %v2079
        %v2081 = vsel %vm2071, %v2078, %v2080
        %v2082 = vsel %vm2070, %v2060, %v2063
        %v2083 = vsel %vm2073, %v2069, 1326507024
        %v2084 = vsel %vm2072, %v2066, %v2083
        %v2085 = vsel %vm2071, %v2082, %v2084
        %v2086 = vshll.u32 %v2046, 8
        %v2087 = vmul.u32.u64.compose %v2086, %v2085
        %v2088 = vextract.low.u32 %v2087
        %v2089 = vextract.high.u32 %v2087
        %v2090 = vmul.u32.u64.compose %v2086, %v2081
        %v2091 = vextract.low.u32 %v2090
        %v2092 = vextract.high.u32 %v2090
        %v2093 = vmul.u32 %v2086, %v2077
        %v2094 = vadd.s32 %v2089, %v2091
        %vm2095 = vc.u32 %v2089, %v2091
        %v2096 = vadd.s32 %v2092, 1
        %v2097 = vsel %vm2095, %v2096, %v2092
        %v2098 = vadd.s32 %v2093, %v2097
        %v2099 = vadd.s32 %v2098, 536870912
        %v2100 = vshrl.u32 %v2099, 30
        %v2101 = vshll.u32 %v2100, 30
        %v2102 = vsub.s32 %v2098, %v2101
        %vm2103 = vcmp.lt.s32.totalorder %v2102, 0
        %v2104 = vsub.s32 0, %v2102
        %v2105 = vsel %vm2103, %v2104, %v2102
        %v2106 = vclz %v2105
        %v2107 = vsub.s32 %v2106, 2
        %vm2108 = vcmp.gt.s32.totalorder 0, %v2107
        %v2109 = vsel %vm2108, 0, %v2107
        %v2110 = vsub.s32 32, %v2109
        %v2111 = vshll.u32 %v2102, %v2109
        %v2112 = vshrl.u32 %v2094, %v2110
        %v2113 = vor.u32 %v2111, %v2112
        %v2114 = vsub.s32 4294967266, %v2109
        %v2115 = vadd.s32 %v2114, 127
        %v2116 = vshll.u32 %v2115, 23
        %v2117 = vor.u32 4788187, %v2116
        %v2118 = vand.u32 2147483647, %v2117
        %v2120 = vcvt.s32.f32 %v2113
        %v2121 = vmul.f32 %v2120, %v2118
        %v2122 = vxor.u32 %v2121, 2147483648
        %v2123 = vsel %vm2040, %v2122, %v2121
        %v2124 = vsub.s32 4, %v2100
        %v2125 = vsel %vm2040, %v2124, %v2100
        %v2126 = vsel %vm2039, %v372, %v2123
        %v2127 = vsel %vm2039, 0, %v2125
        %v2128 = vcosq.f32.pop %v2126
        %v2129 = vsinq.f32.pop %v2126
        %vm2130 = vweird.f32 %v372
        %v2131 = vadd.s32 %v2127, 3
        %v2132 = vand.u32 %v2131, 3
        %vm2133 = vcmp.lt.s32.totalorder %v2132, 2
        %vm2134 = vcmp.eq.s32.totalorder %v2132, 0
        %v2135 = vxor.u32 %v2129, 2147483648
        %v2136 = vsel %vm2134, %v2128, %v2135
        %vm2137 = vcmp.eq.s32.totalorder %v2132, 2
        %v2138 = vxor.u32 %v2128, 2147483648
        %v2139 = vsel %vm2137, %v2138, %v2129
        %v2140 = vsel %vm2133, %v2136, %v2139
        %v2141 = vsel %vm2130, nan, %v2140
        %v2142 = vand.u32 2147483647, %v373
        %vm2143 = vcmp.le.f32.partialorder %v2142, 0.7853982
        %vm2144 = vcmp.lt.s32.totalorder %v373, 0
        %v2145 = vand.u32 %v373, 2139095040
        %v2146 = vshrl.u32 %v2145, 23
        %v2147 = vsub.s32 %v2146, 127
        %v2148 = vand.u32 2147483647, %v373
        %v2149 = vand.u32 %v2148, 8388607
        %v2150 = vor.u32 %v2149, 8388608
        %v2151 = vsub.s32 0, %v2150
        %v2152 = vadd.s32 %v2147, 1
        %vm2153 = vcmp.gt.s32.totalorder %v2152, 0
        %v2154 = vsel %vm2153, %v2152, 0
        %v2155 = vshrl.u32 %v2154, 5
        %v2156 = vand.u32 %v2154, 31
        %v2157 = vsub.s32 32, %v2156
        %v2158 = vshrl.u32 683565275, %v2157
        %v2159 = vshll.u32 683565275, %v2156
        %v2160 = vshrl.u32 2475754826, %v2157
        %v2161 = vor.u32 %v2159, %v2160
        %v2162 = vshll.u32 2475754826, %v2156
        %v2163 = vshrl.u32 2131351028, %v2157
        %v2164 = vor.u32 %v2162, %v2163
        %v2165 = vshll.u32 2131351028, %v2156
        %v2166 = vshrl.u32 2102212464, %v2157
        %v2167 = vor.u32 %v2165, %v2166
        %v2168 = vshll.u32 2102212464, %v2156
        %v2169 = vshrl.u32 920167782, %v2157
        %v2170 = vor.u32 %v2168, %v2169
        %v2171 = vshll.u32 920167782, %v2156
        %v2172 = vshrl.u32 1326507024, %v2157
        %v2173 = vor.u32 %v2171, %v2172
        %vm2174 = vcmp.lt.s32.totalorder %v2155, 1
        %vm2175 = vcmp.lt.s32.totalorder %v2155, 2
        %vm2176 = vcmp.lt.s32.totalorder %v2155, 3
        %vm2177 = vcmp.lt.s32.totalorder %v2155, 4
        %v2178 = vsel %vm2174, %v2158, %v2161
        %v2179 = vsel %vm2177, %v2167, 2102212464
        %v2180 = vsel %vm2176, %v2164, %v2179
        %v2181 = vsel %vm2175, %v2178, %v2180
        %v2182 = vsel %vm2174, %v2161, %v2164
        %v2183 = vsel %vm2177, %v2170, 920167782
        %v2184 = vsel %vm2176, %v2167, %v2183
        %v2185 = vsel %vm2175, %v2182, %v2184
        %v2186 = vsel %vm2174, %v2164, %v2167
        %v2187 = vsel %vm2177, %v2173, 1326507024
        %v2188 = vsel %vm2176, %v2170, %v2187
        %v2189 = vsel %vm2175, %v2186, %v2188
        %v2190 = vshll.u32 %v2150, 8
        %v2191 = vmul.u32.u64.compose %v2190, %v2189
        %v2192 = vextract.low.u32 %v2191
        %v2193 = vextract.high.u32 %v2191
        %v2194 = vmul.u32.u64.compose %v2190, %v2185
        %v2195 = vextract.low.u32 %v2194
        %v2196 = vextract.high.u32 %v2194
        %v2197 = vmul.u32 %v2190, %v2181
        %v2198 = vadd.s32 %v2193, %v2195
        %vm2199 = vc.u32 %v2193, %v2195
        %v2200 = vadd.s32 %v2196, 1
        %v2201 = vsel %vm2199, %v2200, %v2196
        %v2202 = vadd.s32 %v2197, %v2201
        %v2203 = vadd.s32 %v2202, 536870912
        %v2204 = vshrl.u32 %v2203, 30
        %v2205 = vshll.u32 %v2204, 30
        %v2206 = vsub.s32 %v2202, %v2205
        %vm2207 = vcmp.lt.s32.totalorder %v2206, 0
        %v2208 = vsub.s32 0, %v2206
        %v2209 = vsel %vm2207, %v2208, %v2206
        %v2210 = vclz %v2209
        %v2211 = vsub.s32 %v2210, 2
        %vm2212 = vcmp.gt.s32.totalorder 0, %v2211
        %v2213 = vsel %vm2212, 0, %v2211
        %v2214 = vsub.s32 32, %v2213
        %v2215 = vshll.u32 %v2206, %v2213
        %v2216 = vshrl.u32 %v2198, %v2214
        %v2217 = vor.u32 %v2215, %v2216
        %v2218 = vsub.s32 4294967266, %v2213
        %v2219 = vadd.s32 %v2218, 127
        %v2220 = vshll.u32 %v2219, 23
        %v2221 = vor.u32 4788187, %v2220
        %v2222 = vand.u32 2147483647, %v2221
        %v2224 = vcvt.s32.f32 %v2217
        %v2225 = vmul.f32 %v2224, %v2222
        %v2226 = vxor.u32 %v2225, 2147483648
        %v2227 = vsel %vm2144, %v2226, %v2225
        %v2228 = vsub.s32 4, %v2204
        %v2229 = vsel %vm2144, %v2228, %v2204
        %v2230 = vsel %vm2143, %v373, %v2227
        %v2231 = vsel %vm2143, 0, %v2229
        %v2232 = vcosq.f32.pop %v2230
        %v2233 = vsinq.f32.pop %v2230
        %vm2234 = vweird.f32 %v373
        %v2235 = vadd.s32 %v2231, 3
        %v2236 = vand.u32 %v2235, 3
        %vm2237 = vcmp.lt.s32.totalorder %v2236, 2
        %vm2238 = vcmp.eq.s32.totalorder %v2236, 0
        %v2239 = vxor.u32 %v2233, 2147483648
        %v2240 = vsel %vm2238, %v2232, %v2239
        %vm2241 = vcmp.eq.s32.totalorder %v2236, 2
        %v2242 = vxor.u32 %v2232, 2147483648
        %v2243 = vsel %vm2241, %v2242, %v2233
        %v2244 = vsel %vm2237, %v2240, %v2243
        %v2245 = vsel %vm2234, nan, %v2244
        %v2246 = vand.u32 2147483647, %v374
        %vm2247 = vcmp.le.f32.partialorder %v2246, 0.7853982
        %vm2248 = vcmp.lt.s32.totalorder %v374, 0
        %v2249 = vand.u32 %v374, 2139095040
        %v2250 = vshrl.u32 %v2249, 23
        %v2251 = vsub.s32 %v2250, 127
        %v2252 = vand.u32 2147483647, %v374
        %v2253 = vand.u32 %v2252, 8388607
        %v2254 = vor.u32 %v2253, 8388608
        %v2255 = vsub.s32 0, %v2254
        %v2256 = vadd.s32 %v2251, 1
        %vm2257 = vcmp.gt.s32.totalorder %v2256, 0
        %v2258 = vsel %vm2257, %v2256, 0
        %v2259 = vshrl.u32 %v2258, 5
        %v2260 = vand.u32 %v2258, 31
        %v2261 = vsub.s32 32, %v2260
        %v2262 = vshrl.u32 683565275, %v2261
        %v2263 = vshll.u32 683565275, %v2260
        %v2264 = vshrl.u32 2475754826, %v2261
        %v2265 = vor.u32 %v2263, %v2264
        %v2266 = vshll.u32 2475754826, %v2260
        %v2267 = vshrl.u32 2131351028, %v2261
        %v2268 = vor.u32 %v2266, %v2267
        %v2269 = vshll.u32 2131351028, %v2260
        %v2270 = vshrl.u32 2102212464, %v2261
        %v2271 = vor.u32 %v2269, %v2270
        %v2272 = vshll.u32 2102212464, %v2260
        %v2273 = vshrl.u32 920167782, %v2261
        %v2274 = vor.u32 %v2272, %v2273
        %v2275 = vshll.u32 920167782, %v2260
        %v2276 = vshrl.u32 1326507024, %v2261
        %v2277 = vor.u32 %v2275, %v2276
        %vm2278 = vcmp.lt.s32.totalorder %v2259, 1
        %vm2279 = vcmp.lt.s32.totalorder %v2259, 2
        %vm2280 = vcmp.lt.s32.totalorder %v2259, 3
        %vm2281 = vcmp.lt.s32.totalorder %v2259, 4
        %v2282 = vsel %vm2278, %v2262, %v2265
        %v2283 = vsel %vm2281, %v2271, 2102212464
        %v2284 = vsel %vm2280, %v2268, %v2283
        %v2285 = vsel %vm2279, %v2282, %v2284
        %v2286 = vsel %vm2278, %v2265, %v2268
        %v2287 = vsel %vm2281, %v2274, 920167782
        %v2288 = vsel %vm2280, %v2271, %v2287
        %v2289 = vsel %vm2279, %v2286, %v2288
        %v2290 = vsel %vm2278, %v2268, %v2271
        %v2291 = vsel %vm2281, %v2277, 1326507024
        %v2292 = vsel %vm2280, %v2274, %v2291
        %v2293 = vsel %vm2279, %v2290, %v2292
        %v2294 = vshll.u32 %v2254, 8
        %v2295 = vmul.u32.u64.compose %v2294, %v2293
        %v2296 = vextract.low.u32 %v2295
        %v2297 = vextract.high.u32 %v2295
        %v2298 = vmul.u32.u64.compose %v2294, %v2289
        %v2299 = vextract.low.u32 %v2298
        %v2300 = vextract.high.u32 %v2298
        %v2301 = vmul.u32 %v2294, %v2285
        %v2302 = vadd.s32 %v2297, %v2299
        %vm2303 = vc.u32 %v2297, %v2299
        %v2304 = vadd.s32 %v2300, 1
        %v2305 = vsel %vm2303, %v2304, %v2300
        %v2306 = vadd.s32 %v2301, %v2305
        %v2307 = vadd.s32 %v2306, 536870912
        %v2308 = vshrl.u32 %v2307, 30
        %v2309 = vshll.u32 %v2308, 30
        %v2310 = vsub.s32 %v2306, %v2309
        %vm2311 = vcmp.lt.s32.totalorder %v2310, 0
        %v2312 = vsub.s32 0, %v2310
        %v2313 = vsel %vm2311, %v2312, %v2310
        %v2314 = vclz %v2313
        %v2315 = vsub.s32 %v2314, 2
        %vm2316 = vcmp.gt.s32.totalorder 0, %v2315
        %v2317 = vsel %vm2316, 0, %v2315
        %v2318 = vsub.s32 32, %v2317
        %v2319 = vshll.u32 %v2310, %v2317
        %v2320 = vshrl.u32 %v2302, %v2318
        %v2321 = vor.u32 %v2319, %v2320
        %v2322 = vsub.s32 4294967266, %v2317
        %v2323 = vadd.s32 %v2322, 127
        %v2324 = vshll.u32 %v2323, 23
        %v2325 = vor.u32 4788187, %v2324
        %v2326 = vand.u32 2147483647, %v2325
        %v2328 = vcvt.s32.f32 %v2321
        %v2329 = vmul.f32 %v2328, %v2326
        %v2330 = vxor.u32 %v2329, 2147483648
        %v2331 = vsel %vm2248, %v2330, %v2329
        %v2332 = vsub.s32 4, %v2308
        %v2333 = vsel %vm2248, %v2332, %v2308
        %v2334 = vsel %vm2247, %v374, %v2331
        %v2335 = vsel %vm2247, 0, %v2333
        %v2336 = vcosq.f32.pop %v2334
        %v2337 = vsinq.f32.pop %v2334
        %vm2338 = vweird.f32 %v374
        %v2339 = vadd.s32 %v2335, 3
        %v2340 = vand.u32 %v2339, 3
        %vm2341 = vcmp.lt.s32.totalorder %v2340, 2
        %vm2342 = vcmp.eq.s32.totalorder %v2340, 0
        %v2343 = vxor.u32 %v2337, 2147483648
        %v2344 = vsel %vm2342, %v2336, %v2343
        %vm2345 = vcmp.eq.s32.totalorder %v2340, 2
        %v2346 = vxor.u32 %v2336, 2147483648
        %v2347 = vsel %vm2345, %v2346, %v2337
        %v2348 = vsel %vm2341, %v2344, %v2347
        %v2349 = vsel %vm2338, nan, %v2348
        %v2350 = vand.u32 2147483647, %v375
        %vm2351 = vcmp.le.f32.partialorder %v2350, 0.7853982
        %vm2352 = vcmp.lt.s32.totalorder %v375, 0
        %v2353 = vand.u32 %v375, 2139095040
        %v2354 = vshrl.u32 %v2353, 23
        %v2355 = vsub.s32 %v2354, 127
        %v2356 = vand.u32 2147483647, %v375
        %v2357 = vand.u32 %v2356, 8388607
        %v2358 = vor.u32 %v2357, 8388608
        %v2359 = vsub.s32 0, %v2358
        %v2360 = vadd.s32 %v2355, 1
        %vm2361 = vcmp.gt.s32.totalorder %v2360, 0
        %v2362 = vsel %vm2361, %v2360, 0
        %v2363 = vshrl.u32 %v2362, 5
        %v2364 = vand.u32 %v2362, 31
        %v2365 = vsub.s32 32, %v2364
        %v2366 = vshrl.u32 683565275, %v2365
        %v2367 = vshll.u32 683565275, %v2364
        %v2368 = vshrl.u32 2475754826, %v2365
        %v2369 = vor.u32 %v2367, %v2368
        %v2370 = vshll.u32 2475754826, %v2364
        %v2371 = vshrl.u32 2131351028, %v2365
        %v2372 = vor.u32 %v2370, %v2371
        %v2373 = vshll.u32 2131351028, %v2364
        %v2374 = vshrl.u32 2102212464, %v2365
        %v2375 = vor.u32 %v2373, %v2374
        %v2376 = vshll.u32 2102212464, %v2364
        %v2377 = vshrl.u32 920167782, %v2365
        %v2378 = vor.u32 %v2376, %v2377
        %v2379 = vshll.u32 920167782, %v2364
        %v2380 = vshrl.u32 1326507024, %v2365
        %v2381 = vor.u32 %v2379, %v2380
        %vm2382 = vcmp.lt.s32.totalorder %v2363, 1
        %vm2383 = vcmp.lt.s32.totalorder %v2363, 2
        %vm2384 = vcmp.lt.s32.totalorder %v2363, 3
        %vm2385 = vcmp.lt.s32.totalorder %v2363, 4
        %v2386 = vsel %vm2382, %v2366, %v2369
        %v2387 = vsel %vm2385, %v2375, 2102212464
        %v2388 = vsel %vm2384, %v2372, %v2387
        %v2389 = vsel %vm2383, %v2386, %v2388
        %v2390 = vsel %vm2382, %v2369, %v2372
        %v2391 = vsel %vm2385, %v2378, 920167782
        %v2392 = vsel %vm2384, %v2375, %v2391
        %v2393 = vsel %vm2383, %v2390, %v2392
        %v2394 = vsel %vm2382, %v2372, %v2375
        %v2395 = vsel %vm2385, %v2381, 1326507024
        %v2396 = vsel %vm2384, %v2378, %v2395
        %v2397 = vsel %vm2383, %v2394, %v2396
        %v2398 = vshll.u32 %v2358, 8
        %v2399 = vmul.u32.u64.compose %v2398, %v2397
        %v2400 = vextract.low.u32 %v2399
        %v2401 = vextract.high.u32 %v2399
        %v2402 = vmul.u32.u64.compose %v2398, %v2393
        %v2403 = vextract.low.u32 %v2402
        %v2404 = vextract.high.u32 %v2402
        %v2405 = vmul.u32 %v2398, %v2389
        %v2406 = vadd.s32 %v2401, %v2403
        %vm2407 = vc.u32 %v2401, %v2403
        %v2408 = vadd.s32 %v2404, 1
        %v2409 = vsel %vm2407, %v2408, %v2404
        %v2410 = vadd.s32 %v2405, %v2409
        %v2411 = vadd.s32 %v2410, 536870912
        %v2412 = vshrl.u32 %v2411, 30
        %v2413 = vshll.u32 %v2412, 30
        %v2414 = vsub.s32 %v2410, %v2413
        %vm2415 = vcmp.lt.s32.totalorder %v2414, 0
        %v2416 = vsub.s32 0, %v2414
        %v2417 = vsel %vm2415, %v2416, %v2414
        %v2418 = vclz %v2417
        %v2419 = vsub.s32 %v2418, 2
        %vm2420 = vcmp.gt.s32.totalorder 0, %v2419
        %v2421 = vsel %vm2420, 0, %v2419
        %v2422 = vsub.s32 32, %v2421
        %v2423 = vshll.u32 %v2414, %v2421
        %v2424 = vshrl.u32 %v2406, %v2422
        %v2425 = vor.u32 %v2423, %v2424
        %v2426 = vsub.s32 4294967266, %v2421
        %v2427 = vadd.s32 %v2426, 127
        %v2428 = vshll.u32 %v2427, 23
        %v2429 = vor.u32 4788187, %v2428
        %v2430 = vand.u32 2147483647, %v2429
        %v2432 = vcvt.s32.f32 %v2425
        %v2433 = vmul.f32 %v2432, %v2430
        %v2434 = vxor.u32 %v2433, 2147483648
        %v2435 = vsel %vm2352, %v2434, %v2433
        %v2436 = vsub.s32 4, %v2412
        %v2437 = vsel %vm2352, %v2436, %v2412
        %v2438 = vsel %vm2351, %v375, %v2435
        %v2439 = vsel %vm2351, 0, %v2437
        %v2440 = vcosq.f32.pop %v2438
        %v2441 = vsinq.f32.pop %v2438
        %vm2442 = vweird.f32 %v375
        %v2443 = vadd.s32 %v2439, 3
        %v2444 = vand.u32 %v2443, 3
        %vm2445 = vcmp.lt.s32.totalorder %v2444, 2
        %vm2446 = vcmp.eq.s32.totalorder %v2444, 0
        %v2447 = vxor.u32 %v2441, 2147483648
        %v2448 = vsel %vm2446, %v2440, %v2447
        %vm2449 = vcmp.eq.s32.totalorder %v2444, 2
        %v2450 = vxor.u32 %v2440, 2147483648
        %v2451 = vsel %vm2449, %v2450, %v2441
        %v2452 = vsel %vm2445, %v2448, %v2451
        %v2453 = vsel %vm2442, nan, %v2452
        %v2454 = vand.u32 2147483647, %v376
        %vm2455 = vcmp.le.f32.partialorder %v2454, 0.7853982
        %vm2456 = vcmp.lt.s32.totalorder %v376, 0
        %v2457 = vand.u32 %v376, 2139095040
        %v2458 = vshrl.u32 %v2457, 23
        %v2459 = vsub.s32 %v2458, 127
        %v2460 = vand.u32 2147483647, %v376
        %v2461 = vand.u32 %v2460, 8388607
        %v2462 = vor.u32 %v2461, 8388608
        %v2463 = vsub.s32 0, %v2462
        %v2464 = vadd.s32 %v2459, 1
        %vm2465 = vcmp.gt.s32.totalorder %v2464, 0
        %v2466 = vsel %vm2465, %v2464, 0
        %v2467 = vshrl.u32 %v2466, 5
        %v2468 = vand.u32 %v2466, 31
        %v2469 = vsub.s32 32, %v2468
        %v2470 = vshrl.u32 683565275, %v2469
        %v2471 = vshll.u32 683565275, %v2468
        %v2472 = vshrl.u32 2475754826, %v2469
        %v2473 = vor.u32 %v2471, %v2472
        %v2474 = vshll.u32 2475754826, %v2468
        %v2475 = vshrl.u32 2131351028, %v2469
        %v2476 = vor.u32 %v2474, %v2475
        %v2477 = vshll.u32 2131351028, %v2468
        %v2478 = vshrl.u32 2102212464, %v2469
        %v2479 = vor.u32 %v2477, %v2478
        %v2480 = vshll.u32 2102212464, %v2468
        %v2481 = vshrl.u32 920167782, %v2469
        %v2482 = vor.u32 %v2480, %v2481
        %v2483 = vshll.u32 920167782, %v2468
        %v2484 = vshrl.u32 1326507024, %v2469
        %v2485 = vor.u32 %v2483, %v2484
        %vm2486 = vcmp.lt.s32.totalorder %v2467, 1
        %vm2487 = vcmp.lt.s32.totalorder %v2467, 2
        %vm2488 = vcmp.lt.s32.totalorder %v2467, 3
        %vm2489 = vcmp.lt.s32.totalorder %v2467, 4
        %v2490 = vsel %vm2486, %v2470, %v2473
        %v2491 = vsel %vm2489, %v2479, 2102212464
        %v2492 = vsel %vm2488, %v2476, %v2491
        %v2493 = vsel %vm2487, %v2490, %v2492
        %v2494 = vsel %vm2486, %v2473, %v2476
        %v2495 = vsel %vm2489, %v2482, 920167782
        %v2496 = vsel %vm2488, %v2479, %v2495
        %v2497 = vsel %vm2487, %v2494, %v2496
        %v2498 = vsel %vm2486, %v2476, %v2479
        %v2499 = vsel %vm2489, %v2485, 1326507024
        %v2500 = vsel %vm2488, %v2482, %v2499
        %v2501 = vsel %vm2487, %v2498, %v2500
        %v2502 = vshll.u32 %v2462, 8
        %v2503 = vmul.u32.u64.compose %v2502, %v2501
        %v2504 = vextract.low.u32 %v2503
        %v2505 = vextract.high.u32 %v2503
        %v2506 = vmul.u32.u64.compose %v2502, %v2497
        %v2507 = vextract.low.u32 %v2506
        %v2508 = vextract.high.u32 %v2506
        %v2509 = vmul.u32 %v2502, %v2493
        %v2510 = vadd.s32 %v2505, %v2507
        %vm2511 = vc.u32 %v2505, %v2507
        %v2512 = vadd.s32 %v2508, 1
        %v2513 = vsel %vm2511, %v2512, %v2508
        %v2514 = vadd.s32 %v2509, %v2513
        %v2515 = vadd.s32 %v2514, 536870912
        %v2516 = vshrl.u32 %v2515, 30
        %v2517 = vshll.u32 %v2516, 30
        %v2518 = vsub.s32 %v2514, %v2517
        %vm2519 = vcmp.lt.s32.totalorder %v2518, 0
        %v2520 = vsub.s32 0, %v2518
        %v2521 = vsel %vm2519, %v2520, %v2518
        %v2522 = vclz %v2521
        %v2523 = vsub.s32 %v2522, 2
        %vm2524 = vcmp.gt.s32.totalorder 0, %v2523
        %v2525 = vsel %vm2524, 0, %v2523
        %v2526 = vsub.s32 32, %v2525
        %v2527 = vshll.u32 %v2518, %v2525
        %v2528 = vshrl.u32 %v2510, %v2526
        %v2529 = vor.u32 %v2527, %v2528
        %v2530 = vsub.s32 4294967266, %v2525
        %v2531 = vadd.s32 %v2530, 127
        %v2532 = vshll.u32 %v2531, 23
        %v2533 = vor.u32 4788187, %v2532
        %v2534 = vand.u32 2147483647, %v2533
        %v2536 = vcvt.s32.f32 %v2529
        %v2537 = vmul.f32 %v2536, %v2534
        %v2538 = vxor.u32 %v2537, 2147483648
        %v2539 = vsel %vm2456, %v2538, %v2537
        %v2540 = vsub.s32 4, %v2516
        %v2541 = vsel %vm2456, %v2540, %v2516
        %v2542 = vsel %vm2455, %v376, %v2539
        %v2543 = vsel %vm2455, 0, %v2541
        %v2544 = vcosq.f32.pop %v2542
        %v2545 = vsinq.f32.pop %v2542
        %vm2546 = vweird.f32 %v376
        %v2547 = vadd.s32 %v2543, 3
        %v2548 = vand.u32 %v2547, 3
        %vm2549 = vcmp.lt.s32.totalorder %v2548, 2
        %vm2550 = vcmp.eq.s32.totalorder %v2548, 0
        %v2551 = vxor.u32 %v2545, 2147483648
        %v2552 = vsel %vm2550, %v2544, %v2551
        %vm2553 = vcmp.eq.s32.totalorder %v2548, 2
        %v2554 = vxor.u32 %v2544, 2147483648
        %v2555 = vsel %vm2553, %v2554, %v2545
        %v2556 = vsel %vm2549, %v2552, %v2555
        %v2557 = vsel %vm2546, nan, %v2556
        %v2558 = vand.u32 2147483647, %v377
        %vm2559 = vcmp.le.f32.partialorder %v2558, 0.7853982
        %vm2560 = vcmp.lt.s32.totalorder %v377, 0
        %v2561 = vand.u32 %v377, 2139095040
        %v2562 = vshrl.u32 %v2561, 23
        %v2563 = vsub.s32 %v2562, 127
        %v2564 = vand.u32 2147483647, %v377
        %v2565 = vand.u32 %v2564, 8388607
        %v2566 = vor.u32 %v2565, 8388608
        %v2567 = vsub.s32 0, %v2566
        %v2568 = vadd.s32 %v2563, 1
        %vm2569 = vcmp.gt.s32.totalorder %v2568, 0
        %v2570 = vsel %vm2569, %v2568, 0
        %v2571 = vshrl.u32 %v2570, 5
        %v2572 = vand.u32 %v2570, 31
        %v2573 = vsub.s32 32, %v2572
        %v2574 = vshrl.u32 683565275, %v2573
        %v2575 = vshll.u32 683565275, %v2572
        %v2576 = vshrl.u32 2475754826, %v2573
        %v2577 = vor.u32 %v2575, %v2576
        %v2578 = vshll.u32 2475754826, %v2572
        %v2579 = vshrl.u32 2131351028, %v2573
        %v2580 = vor.u32 %v2578, %v2579
        %v2581 = vshll.u32 2131351028, %v2572
        %v2582 = vshrl.u32 2102212464, %v2573
        %v2583 = vor.u32 %v2581, %v2582
        %v2584 = vshll.u32 2102212464, %v2572
        %v2585 = vshrl.u32 920167782, %v2573
        %v2586 = vor.u32 %v2584, %v2585
        %v2587 = vshll.u32 920167782, %v2572
        %v2588 = vshrl.u32 1326507024, %v2573
        %v2589 = vor.u32 %v2587, %v2588
        %vm2590 = vcmp.lt.s32.totalorder %v2571, 1
        %vm2591 = vcmp.lt.s32.totalorder %v2571, 2
        %vm2592 = vcmp.lt.s32.totalorder %v2571, 3
        %vm2593 = vcmp.lt.s32.totalorder %v2571, 4
        %v2594 = vsel %vm2590, %v2574, %v2577
        %v2595 = vsel %vm2593, %v2583, 2102212464
        %v2596 = vsel %vm2592, %v2580, %v2595
        %v2597 = vsel %vm2591, %v2594, %v2596
        %v2598 = vsel %vm2590, %v2577, %v2580
        %v2599 = vsel %vm2593, %v2586, 920167782
        %v2600 = vsel %vm2592, %v2583, %v2599
        %v2601 = vsel %vm2591, %v2598, %v2600
        %v2602 = vsel %vm2590, %v2580, %v2583
        %v2603 = vsel %vm2593, %v2589, 1326507024
        %v2604 = vsel %vm2592, %v2586, %v2603
        %v2605 = vsel %vm2591, %v2602, %v2604
        %v2606 = vshll.u32 %v2566, 8
        %v2607 = vmul.u32.u64.compose %v2606, %v2605
        %v2608 = vextract.low.u32 %v2607
        %v2609 = vextract.high.u32 %v2607
        %v2610 = vmul.u32.u64.compose %v2606, %v2601
        %v2611 = vextract.low.u32 %v2610
        %v2612 = vextract.high.u32 %v2610
        %v2613 = vmul.u32 %v2606, %v2597
        %v2614 = vadd.s32 %v2609, %v2611
        %vm2615 = vc.u32 %v2609, %v2611
        %v2616 = vadd.s32 %v2612, 1
        %v2617 = vsel %vm2615, %v2616, %v2612
        %v2618 = vadd.s32 %v2613, %v2617
        %v2619 = vadd.s32 %v2618, 536870912
        %v2620 = vshrl.u32 %v2619, 30
        %v2621 = vshll.u32 %v2620, 30
        %v2622 = vsub.s32 %v2618, %v2621
        %vm2623 = vcmp.lt.s32.totalorder %v2622, 0
        %v2624 = vsub.s32 0, %v2622
        %v2625 = vsel %vm2623, %v2624, %v2622
        %v2626 = vclz %v2625
        %v2627 = vsub.s32 %v2626, 2
        %vm2628 = vcmp.gt.s32.totalorder 0, %v2627
        %v2629 = vsel %vm2628, 0, %v2627
        %v2630 = vsub.s32 32, %v2629
        %v2631 = vshll.u32 %v2622, %v2629
        %v2632 = vshrl.u32 %v2614, %v2630
        %v2633 = vor.u32 %v2631, %v2632
        %v2634 = vsub.s32 4294967266, %v2629
        %v2635 = vadd.s32 %v2634, 127
        %v2636 = vshll.u32 %v2635, 23
        %v2637 = vor.u32 4788187, %v2636
        %v2638 = vand.u32 2147483647, %v2637
        %v2640 = vcvt.s32.f32 %v2633
        %v2641 = vmul.f32 %v2640, %v2638
        %v2642 = vxor.u32 %v2641, 2147483648
        %v2643 = vsel %vm2560, %v2642, %v2641
        %v2644 = vsub.s32 4, %v2620
        %v2645 = vsel %vm2560, %v2644, %v2620
        %v2646 = vsel %vm2559, %v377, %v2643
        %v2647 = vsel %vm2559, 0, %v2645
        %v2648 = vcosq.f32.pop %v2646
        %v2649 = vsinq.f32.pop %v2646
        %vm2650 = vweird.f32 %v377
        %v2651 = vadd.s32 %v2647, 3
        %v2652 = vand.u32 %v2651, 3
        %vm2653 = vcmp.lt.s32.totalorder %v2652, 2
        %vm2654 = vcmp.eq.s32.totalorder %v2652, 0
        %v2655 = vxor.u32 %v2649, 2147483648
        %v2656 = vsel %vm2654, %v2648, %v2655
        %vm2657 = vcmp.eq.s32.totalorder %v2652, 2
        %v2658 = vxor.u32 %v2648, 2147483648
        %v2659 = vsel %vm2657, %v2658, %v2649
        %v2660 = vsel %vm2653, %v2656, %v2659
        %v2661 = vsel %vm2650, nan, %v2660
        %v2662 = vand.u32 2147483647, %v378
        %vm2663 = vcmp.le.f32.partialorder %v2662, 0.7853982
        %vm2664 = vcmp.lt.s32.totalorder %v378, 0
        %v2665 = vand.u32 %v378, 2139095040
        %v2666 = vshrl.u32 %v2665, 23
        %v2667 = vsub.s32 %v2666, 127
        %v2668 = vand.u32 2147483647, %v378
        %v2669 = vand.u32 %v2668, 8388607
        %v2670 = vor.u32 %v2669, 8388608
        %v2671 = vsub.s32 0, %v2670
        %v2672 = vadd.s32 %v2667, 1
        %vm2673 = vcmp.gt.s32.totalorder %v2672, 0
        %v2674 = vsel %vm2673, %v2672, 0
        %v2675 = vshrl.u32 %v2674, 5
        %v2676 = vand.u32 %v2674, 31
        %v2677 = vsub.s32 32, %v2676
        %v2678 = vshrl.u32 683565275, %v2677
        %v2679 = vshll.u32 683565275, %v2676
        %v2680 = vshrl.u32 2475754826, %v2677
        %v2681 = vor.u32 %v2679, %v2680
        %v2682 = vshll.u32 2475754826, %v2676
        %v2683 = vshrl.u32 2131351028, %v2677
        %v2684 = vor.u32 %v2682, %v2683
        %v2685 = vshll.u32 2131351028, %v2676
        %v2686 = vshrl.u32 2102212464, %v2677
        %v2687 = vor.u32 %v2685, %v2686
        %v2688 = vshll.u32 2102212464, %v2676
        %v2689 = vshrl.u32 920167782, %v2677
        %v2690 = vor.u32 %v2688, %v2689
        %v2691 = vshll.u32 920167782, %v2676
        %v2692 = vshrl.u32 1326507024, %v2677
        %v2693 = vor.u32 %v2691, %v2692
        %vm2694 = vcmp.lt.s32.totalorder %v2675, 1
        %vm2695 = vcmp.lt.s32.totalorder %v2675, 2
        %vm2696 = vcmp.lt.s32.totalorder %v2675, 3
        %vm2697 = vcmp.lt.s32.totalorder %v2675, 4
        %v2698 = vsel %vm2694, %v2678, %v2681
        %v2699 = vsel %vm2697, %v2687, 2102212464
        %v2700 = vsel %vm2696, %v2684, %v2699
        %v2701 = vsel %vm2695, %v2698, %v2700
        %v2702 = vsel %vm2694, %v2681, %v2684
        %v2703 = vsel %vm2697, %v2690, 920167782
        %v2704 = vsel %vm2696, %v2687, %v2703
        %v2705 = vsel %vm2695, %v2702, %v2704
        %v2706 = vsel %vm2694, %v2684, %v2687
        %v2707 = vsel %vm2697, %v2693, 1326507024
        %v2708 = vsel %vm2696, %v2690, %v2707
        %v2709 = vsel %vm2695, %v2706, %v2708
        %v2710 = vshll.u32 %v2670, 8
        %v2711 = vmul.u32.u64.compose %v2710, %v2709
        %v2712 = vextract.low.u32 %v2711
        %v2713 = vextract.high.u32 %v2711
        %v2714 = vmul.u32.u64.compose %v2710, %v2705
        %v2715 = vextract.low.u32 %v2714
        %v2716 = vextract.high.u32 %v2714
        %v2717 = vmul.u32 %v2710, %v2701
        %v2718 = vadd.s32 %v2713, %v2715
        %vm2719 = vc.u32 %v2713, %v2715
        %v2720 = vadd.s32 %v2716, 1
        %v2721 = vsel %vm2719, %v2720, %v2716
        %v2722 = vadd.s32 %v2717, %v2721
        %v2723 = vadd.s32 %v2722, 536870912
        %v2724 = vshrl.u32 %v2723, 30
        %v2725 = vshll.u32 %v2724, 30
        %v2726 = vsub.s32 %v2722, %v2725
        %vm2727 = vcmp.lt.s32.totalorder %v2726, 0
        %v2728 = vsub.s32 0, %v2726
        %v2729 = vsel %vm2727, %v2728, %v2726
        %v2730 = vclz %v2729
        %v2731 = vsub.s32 %v2730, 2
        %vm2732 = vcmp.gt.s32.totalorder 0, %v2731
        %v2733 = vsel %vm2732, 0, %v2731
        %v2734 = vsub.s32 32, %v2733
        %v2735 = vshll.u32 %v2726, %v2733
        %v2736 = vshrl.u32 %v2718, %v2734
        %v2737 = vor.u32 %v2735, %v2736
        %v2738 = vsub.s32 4294967266, %v2733
        %v2739 = vadd.s32 %v2738, 127
        %v2740 = vshll.u32 %v2739, 23
        %v2741 = vor.u32 4788187, %v2740
        %v2742 = vand.u32 2147483647, %v2741
        %v2744 = vcvt.s32.f32 %v2737
        %v2745 = vmul.f32 %v2744, %v2742
        %v2746 = vxor.u32 %v2745, 2147483648
        %v2747 = vsel %vm2664, %v2746, %v2745
        %v2748 = vsub.s32 4, %v2724
        %v2749 = vsel %vm2664, %v2748, %v2724
        %v2750 = vsel %vm2663, %v378, %v2747
        %v2751 = vsel %vm2663, 0, %v2749
        %v2752 = vcosq.f32.pop %v2750
        %v2753 = vsinq.f32.pop %v2750
        %vm2754 = vweird.f32 %v378
        %v2755 = vadd.s32 %v2751, 3
        %v2756 = vand.u32 %v2755, 3
        %vm2757 = vcmp.lt.s32.totalorder %v2756, 2
        %vm2758 = vcmp.eq.s32.totalorder %v2756, 0
        %v2759 = vxor.u32 %v2753, 2147483648
        %v2760 = vsel %vm2758, %v2752, %v2759
        %vm2761 = vcmp.eq.s32.totalorder %v2756, 2
        %v2762 = vxor.u32 %v2752, 2147483648
        %v2763 = vsel %vm2761, %v2762, %v2753
        %v2764 = vsel %vm2757, %v2760, %v2763
        %v2765 = vsel %vm2754, nan, %v2764
        %v2766 = vand.u32 2147483647, %v379
        %vm2767 = vcmp.le.f32.partialorder %v2766, 0.7853982
        %vm2768 = vcmp.lt.s32.totalorder %v379, 0
        %v2769 = vand.u32 %v379, 2139095040
        %v2770 = vshrl.u32 %v2769, 23
        %v2771 = vsub.s32 %v2770, 127
        %v2772 = vand.u32 2147483647, %v379
        %v2773 = vand.u32 %v2772, 8388607
        %v2774 = vor.u32 %v2773, 8388608
        %v2775 = vsub.s32 0, %v2774
        %v2776 = vadd.s32 %v2771, 1
        %vm2777 = vcmp.gt.s32.totalorder %v2776, 0
        %v2778 = vsel %vm2777, %v2776, 0
        %v2779 = vshrl.u32 %v2778, 5
        %v2780 = vand.u32 %v2778, 31
        %v2781 = vsub.s32 32, %v2780
        %v2782 = vshrl.u32 683565275, %v2781
        %v2783 = vshll.u32 683565275, %v2780
        %v2784 = vshrl.u32 2475754826, %v2781
        %v2785 = vor.u32 %v2783, %v2784
        %v2786 = vshll.u32 2475754826, %v2780
        %v2787 = vshrl.u32 2131351028, %v2781
        %v2788 = vor.u32 %v2786, %v2787
        %v2789 = vshll.u32 2131351028, %v2780
        %v2790 = vshrl.u32 2102212464, %v2781
        %v2791 = vor.u32 %v2789, %v2790
        %v2792 = vshll.u32 2102212464, %v2780
        %v2793 = vshrl.u32 920167782, %v2781
        %v2794 = vor.u32 %v2792, %v2793
        %v2795 = vshll.u32 920167782, %v2780
        %v2796 = vshrl.u32 1326507024, %v2781
        %v2797 = vor.u32 %v2795, %v2796
        %vm2798 = vcmp.lt.s32.totalorder %v2779, 1
        %vm2799 = vcmp.lt.s32.totalorder %v2779, 2
        %vm2800 = vcmp.lt.s32.totalorder %v2779, 3
        %vm2801 = vcmp.lt.s32.totalorder %v2779, 4
        %v2802 = vsel %vm2798, %v2782, %v2785
        %v2803 = vsel %vm2801, %v2791, 2102212464
        %v2804 = vsel %vm2800, %v2788, %v2803
        %v2805 = vsel %vm2799, %v2802, %v2804
        %v2806 = vsel %vm2798, %v2785, %v2788
        %v2807 = vsel %vm2801, %v2794, 920167782
        %v2808 = vsel %vm2800, %v2791, %v2807
        %v2809 = vsel %vm2799, %v2806, %v2808
        %v2810 = vsel %vm2798, %v2788, %v2791
        %v2811 = vsel %vm2801, %v2797, 1326507024
        %v2812 = vsel %vm2800, %v2794, %v2811
        %v2813 = vsel %vm2799, %v2810, %v2812
        %v2814 = vshll.u32 %v2774, 8
        %v2815 = vmul.u32.u64.compose %v2814, %v2813
        %v2816 = vextract.low.u32 %v2815
        %v2817 = vextract.high.u32 %v2815
        %v2818 = vmul.u32.u64.compose %v2814, %v2809
        %v2819 = vextract.low.u32 %v2818
        %v2820 = vextract.high.u32 %v2818
        %v2821 = vmul.u32 %v2814, %v2805
        %v2822 = vadd.s32 %v2817, %v2819
        %vm2823 = vc.u32 %v2817, %v2819
        %v2824 = vadd.s32 %v2820, 1
        %v2825 = vsel %vm2823, %v2824, %v2820
        %v2826 = vadd.s32 %v2821, %v2825
        %v2827 = vadd.s32 %v2826, 536870912
        %v2828 = vshrl.u32 %v2827, 30
        %v2829 = vshll.u32 %v2828, 30
        %v2830 = vsub.s32 %v2826, %v2829
        %vm2831 = vcmp.lt.s32.totalorder %v2830, 0
        %v2832 = vsub.s32 0, %v2830
        %v2833 = vsel %vm2831, %v2832, %v2830
        %v2834 = vclz %v2833
        %v2835 = vsub.s32 %v2834, 2
        %vm2836 = vcmp.gt.s32.totalorder 0, %v2835
        %v2837 = vsel %vm2836, 0, %v2835
        %v2838 = vsub.s32 32, %v2837
        %v2839 = vshll.u32 %v2830, %v2837
        %v2840 = vshrl.u32 %v2822, %v2838
        %v2841 = vor.u32 %v2839, %v2840
        %v2842 = vsub.s32 4294967266, %v2837
        %v2843 = vadd.s32 %v2842, 127
        %v2844 = vshll.u32 %v2843, 23
        %v2845 = vor.u32 4788187, %v2844
        %v2846 = vand.u32 2147483647, %v2845
        %v2848 = vcvt.s32.f32 %v2841
        %v2849 = vmul.f32 %v2848, %v2846
        %v2850 = vxor.u32 %v2849, 2147483648
        %v2851 = vsel %vm2768, %v2850, %v2849
        %v2852 = vsub.s32 4, %v2828
        %v2853 = vsel %vm2768, %v2852, %v2828
        %v2854 = vsel %vm2767, %v379, %v2851
        %v2855 = vsel %vm2767, 0, %v2853
        %v2856 = vcosq.f32.pop %v2854
        %v2857 = vsinq.f32.pop %v2854
        %vm2858 = vweird.f32 %v379
        %v2859 = vadd.s32 %v2855, 3
        %v2860 = vand.u32 %v2859, 3
        %vm2861 = vcmp.lt.s32.totalorder %v2860, 2
        %vm2862 = vcmp.eq.s32.totalorder %v2860, 0
        %v2863 = vxor.u32 %v2857, 2147483648
        %v2864 = vsel %vm2862, %v2856, %v2863
        %vm2865 = vcmp.eq.s32.totalorder %v2860, 2
        %v2866 = vxor.u32 %v2856, 2147483648
        %v2867 = vsel %vm2865, %v2866, %v2857
        %v2868 = vsel %vm2861, %v2864, %v2867
        %v2869 = vsel %vm2858, nan, %v2868
        %v2870 = vand.u32 2147483647, %v380
        %vm2871 = vcmp.le.f32.partialorder %v2870, 0.7853982
        %vm2872 = vcmp.lt.s32.totalorder %v380, 0
        %v2873 = vand.u32 %v380, 2139095040
        %v2874 = vshrl.u32 %v2873, 23
        %v2875 = vsub.s32 %v2874, 127
        %v2876 = vand.u32 2147483647, %v380
        %v2877 = vand.u32 %v2876, 8388607
        %v2878 = vor.u32 %v2877, 8388608
        %v2879 = vsub.s32 0, %v2878
        %v2880 = vadd.s32 %v2875, 1
        %vm2881 = vcmp.gt.s32.totalorder %v2880, 0
        %v2882 = vsel %vm2881, %v2880, 0
        %v2883 = vshrl.u32 %v2882, 5
        %v2884 = vand.u32 %v2882, 31
        %v2885 = vsub.s32 32, %v2884
        %v2886 = vshrl.u32 683565275, %v2885
        %v2887 = vshll.u32 683565275, %v2884
        %v2888 = vshrl.u32 2475754826, %v2885
        %v2889 = vor.u32 %v2887, %v2888
        %v2890 = vshll.u32 2475754826, %v2884
        %v2891 = vshrl.u32 2131351028, %v2885
        %v2892 = vor.u32 %v2890, %v2891
        %v2893 = vshll.u32 2131351028, %v2884
        %v2894 = vshrl.u32 2102212464, %v2885
        %v2895 = vor.u32 %v2893, %v2894
        %v2896 = vshll.u32 2102212464, %v2884
        %v2897 = vshrl.u32 920167782, %v2885
        %v2898 = vor.u32 %v2896, %v2897
        %v2899 = vshll.u32 920167782, %v2884
        %v2900 = vshrl.u32 1326507024, %v2885
        %v2901 = vor.u32 %v2899, %v2900
        %vm2902 = vcmp.lt.s32.totalorder %v2883, 1
        %vm2903 = vcmp.lt.s32.totalorder %v2883, 2
        %vm2904 = vcmp.lt.s32.totalorder %v2883, 3
        %vm2905 = vcmp.lt.s32.totalorder %v2883, 4
        %v2906 = vsel %vm2902, %v2886, %v2889
        %v2907 = vsel %vm2905, %v2895, 2102212464
        %v2908 = vsel %vm2904, %v2892, %v2907
        %v2909 = vsel %vm2903, %v2906, %v2908
        %v2910 = vsel %vm2902, %v2889, %v2892
        %v2911 = vsel %vm2905, %v2898, 920167782
        %v2912 = vsel %vm2904, %v2895, %v2911
        %v2913 = vsel %vm2903, %v2910, %v2912
        %v2914 = vsel %vm2902, %v2892, %v2895
        %v2915 = vsel %vm2905, %v2901, 1326507024
        %v2916 = vsel %vm2904, %v2898, %v2915
        %v2917 = vsel %vm2903, %v2914, %v2916
        %v2918 = vshll.u32 %v2878, 8
        %v2919 = vmul.u32.u64.compose %v2918, %v2917
        %v2920 = vextract.low.u32 %v2919
        %v2921 = vextract.high.u32 %v2919
        %v2922 = vmul.u32.u64.compose %v2918, %v2913
        %v2923 = vextract.low.u32 %v2922
        %v2924 = vextract.high.u32 %v2922
        %v2925 = vmul.u32 %v2918, %v2909
        %v2926 = vadd.s32 %v2921, %v2923
        %vm2927 = vc.u32 %v2921, %v2923
        %v2928 = vadd.s32 %v2924, 1
        %v2929 = vsel %vm2927, %v2928, %v2924
        %v2930 = vadd.s32 %v2925, %v2929
        %v2931 = vadd.s32 %v2930, 536870912
        %v2932 = vshrl.u32 %v2931, 30
        %v2933 = vshll.u32 %v2932, 30
        %v2934 = vsub.s32 %v2930, %v2933
        %vm2935 = vcmp.lt.s32.totalorder %v2934, 0
        %v2936 = vsub.s32 0, %v2934
        %v2937 = vsel %vm2935, %v2936, %v2934
        %v2938 = vclz %v2937
        %v2939 = vsub.s32 %v2938, 2
        %vm2940 = vcmp.gt.s32.totalorder 0, %v2939
        %v2941 = vsel %vm2940, 0, %v2939
        %v2942 = vsub.s32 32, %v2941
        %v2943 = vshll.u32 %v2934, %v2941
        %v2944 = vshrl.u32 %v2926, %v2942
        %v2945 = vor.u32 %v2943, %v2944
        %v2946 = vsub.s32 4294967266, %v2941
        %v2947 = vadd.s32 %v2946, 127
        %v2948 = vshll.u32 %v2947, 23
        %v2949 = vor.u32 4788187, %v2948
        %v2950 = vand.u32 2147483647, %v2949
        %v2952 = vcvt.s32.f32 %v2945
        %v2953 = vmul.f32 %v2952, %v2950
        %v2954 = vxor.u32 %v2953, 2147483648
        %v2955 = vsel %vm2872, %v2954, %v2953
        %v2956 = vsub.s32 4, %v2932
        %v2957 = vsel %vm2872, %v2956, %v2932
        %v2958 = vsel %vm2871, %v380, %v2955
        %v2959 = vsel %vm2871, 0, %v2957
        %v2960 = vcosq.f32.pop %v2958
        %v2961 = vsinq.f32.pop %v2958
        %vm2962 = vweird.f32 %v380
        %v2963 = vadd.s32 %v2959, 3
        %v2964 = vand.u32 %v2963, 3
        %vm2965 = vcmp.lt.s32.totalorder %v2964, 2
        %vm2966 = vcmp.eq.s32.totalorder %v2964, 0
        %v2967 = vxor.u32 %v2961, 2147483648
        %v2968 = vsel %vm2966, %v2960, %v2967
        %vm2969 = vcmp.eq.s32.totalorder %v2964, 2
        %v2970 = vxor.u32 %v2960, 2147483648
        %v2971 = vsel %vm2969, %v2970, %v2961
        %v2972 = vsel %vm2965, %v2968, %v2971
        %v2973 = vsel %vm2962, nan, %v2972
        %v2974 = vand.u32 2147483647, %v381
        %vm2975 = vcmp.le.f32.partialorder %v2974, 0.7853982
        %vm2976 = vcmp.lt.s32.totalorder %v381, 0
        %v2977 = vand.u32 %v381, 2139095040
        %v2978 = vshrl.u32 %v2977, 23
        %v2979 = vsub.s32 %v2978, 127
        %v2980 = vand.u32 2147483647, %v381
        %v2981 = vand.u32 %v2980, 8388607
        %v2982 = vor.u32 %v2981, 8388608
        %v2983 = vsub.s32 0, %v2982
        %v2984 = vadd.s32 %v2979, 1
        %vm2985 = vcmp.gt.s32.totalorder %v2984, 0
        %v2986 = vsel %vm2985, %v2984, 0
        %v2987 = vshrl.u32 %v2986, 5
        %v2988 = vand.u32 %v2986, 31
        %v2989 = vsub.s32 32, %v2988
        %v2990 = vshrl.u32 683565275, %v2989
        %v2991 = vshll.u32 683565275, %v2988
        %v2992 = vshrl.u32 2475754826, %v2989
        %v2993 = vor.u32 %v2991, %v2992
        %v2994 = vshll.u32 2475754826, %v2988
        %v2995 = vshrl.u32 2131351028, %v2989
        %v2996 = vor.u32 %v2994, %v2995
        %v2997 = vshll.u32 2131351028, %v2988
        %v2998 = vshrl.u32 2102212464, %v2989
        %v2999 = vor.u32 %v2997, %v2998
        %v3000 = vshll.u32 2102212464, %v2988
        %v3001 = vshrl.u32 920167782, %v2989
        %v3002 = vor.u32 %v3000, %v3001
        %v3003 = vshll.u32 920167782, %v2988
        %v3004 = vshrl.u32 1326507024, %v2989
        %v3005 = vor.u32 %v3003, %v3004
        %vm3006 = vcmp.lt.s32.totalorder %v2987, 1
        %vm3007 = vcmp.lt.s32.totalorder %v2987, 2
        %vm3008 = vcmp.lt.s32.totalorder %v2987, 3
        %vm3009 = vcmp.lt.s32.totalorder %v2987, 4
        %v3010 = vsel %vm3006, %v2990, %v2993
        %v3011 = vsel %vm3009, %v2999, 2102212464
        %v3012 = vsel %vm3008, %v2996, %v3011
        %v3013 = vsel %vm3007, %v3010, %v3012
        %v3014 = vsel %vm3006, %v2993, %v2996
        %v3015 = vsel %vm3009, %v3002, 920167782
        %v3016 = vsel %vm3008, %v2999, %v3015
        %v3017 = vsel %vm3007, %v3014, %v3016
        %v3018 = vsel %vm3006, %v2996, %v2999
        %v3019 = vsel %vm3009, %v3005, 1326507024
        %v3020 = vsel %vm3008, %v3002, %v3019
        %v3021 = vsel %vm3007, %v3018, %v3020
        %v3022 = vshll.u32 %v2982, 8
        %v3023 = vmul.u32.u64.compose %v3022, %v3021
        %v3024 = vextract.low.u32 %v3023
        %v3025 = vextract.high.u32 %v3023
        %v3026 = vmul.u32.u64.compose %v3022, %v3017
        %v3027 = vextract.low.u32 %v3026
        %v3028 = vextract.high.u32 %v3026
        %v3029 = vmul.u32 %v3022, %v3013
        %v3030 = vadd.s32 %v3025, %v3027
        %vm3031 = vc.u32 %v3025, %v3027
        %v3032 = vadd.s32 %v3028, 1
        %v3033 = vsel %vm3031, %v3032, %v3028
        %v3034 = vadd.s32 %v3029, %v3033
        %v3035 = vadd.s32 %v3034, 536870912
        %v3036 = vshrl.u32 %v3035, 30
        %v3037 = vshll.u32 %v3036, 30
        %v3038 = vsub.s32 %v3034, %v3037
        %vm3039 = vcmp.lt.s32.totalorder %v3038, 0
        %v3040 = vsub.s32 0, %v3038
        %v3041 = vsel %vm3039, %v3040, %v3038
        %v3042 = vclz %v3041
        %v3043 = vsub.s32 %v3042, 2
        %vm3044 = vcmp.gt.s32.totalorder 0, %v3043
        %v3045 = vsel %vm3044, 0, %v3043
        %v3046 = vsub.s32 32, %v3045
        %v3047 = vshll.u32 %v3038, %v3045
        %v3048 = vshrl.u32 %v3030, %v3046
        %v3049 = vor.u32 %v3047, %v3048
        %v3050 = vsub.s32 4294967266, %v3045
        %v3051 = vadd.s32 %v3050, 127
        %v3052 = vshll.u32 %v3051, 23
        %v3053 = vor.u32 4788187, %v3052
        %v3054 = vand.u32 2147483647, %v3053
        %v3056 = vcvt.s32.f32 %v3049
        %v3057 = vmul.f32 %v3056, %v3054
        %v3058 = vxor.u32 %v3057, 2147483648
        %v3059 = vsel %vm2976, %v3058, %v3057
        %v3060 = vsub.s32 4, %v3036
        %v3061 = vsel %vm2976, %v3060, %v3036
        %v3062 = vsel %vm2975, %v381, %v3059
        %v3063 = vsel %vm2975, 0, %v3061
        %v3064 = vcosq.f32.pop %v3062
        %v3065 = vsinq.f32.pop %v3062
        %vm3066 = vweird.f32 %v381
        %v3067 = vadd.s32 %v3063, 3
        %v3068 = vand.u32 %v3067, 3
        %vm3069 = vcmp.lt.s32.totalorder %v3068, 2
        %vm3070 = vcmp.eq.s32.totalorder %v3068, 0
        %v3071 = vxor.u32 %v3065, 2147483648
        %v3072 = vsel %vm3070, %v3064, %v3071
        %vm3073 = vcmp.eq.s32.totalorder %v3068, 2
        %v3074 = vxor.u32 %v3064, 2147483648
        %v3075 = vsel %vm3073, %v3074, %v3065
        %v3076 = vsel %vm3069, %v3072, %v3075
        %v3077 = vsel %vm3066, nan, %v3076
        %v3078 = vand.u32 2147483647, %v382
        %vm3079 = vcmp.le.f32.partialorder %v3078, 0.7853982
        %vm3080 = vcmp.lt.s32.totalorder %v382, 0
        %v3081 = vand.u32 %v382, 2139095040
        %v3082 = vshrl.u32 %v3081, 23
        %v3083 = vsub.s32 %v3082, 127
        %v3084 = vand.u32 2147483647, %v382
        %v3085 = vand.u32 %v3084, 8388607
        %v3086 = vor.u32 %v3085, 8388608
        %v3087 = vsub.s32 0, %v3086
        %v3088 = vadd.s32 %v3083, 1
        %vm3089 = vcmp.gt.s32.totalorder %v3088, 0
        %v3090 = vsel %vm3089, %v3088, 0
        %v3091 = vshrl.u32 %v3090, 5
        %v3092 = vand.u32 %v3090, 31
        %v3093 = vsub.s32 32, %v3092
        %v3094 = vshrl.u32 683565275, %v3093
        %v3095 = vshll.u32 683565275, %v3092
        %v3096 = vshrl.u32 2475754826, %v3093
        %v3097 = vor.u32 %v3095, %v3096
        %v3098 = vshll.u32 2475754826, %v3092
        %v3099 = vshrl.u32 2131351028, %v3093
        %v3100 = vor.u32 %v3098, %v3099
        %v3101 = vshll.u32 2131351028, %v3092
        %v3102 = vshrl.u32 2102212464, %v3093
        %v3103 = vor.u32 %v3101, %v3102
        %v3104 = vshll.u32 2102212464, %v3092
        %v3105 = vshrl.u32 920167782, %v3093
        %v3106 = vor.u32 %v3104, %v3105
        %v3107 = vshll.u32 920167782, %v3092
        %v3108 = vshrl.u32 1326507024, %v3093
        %v3109 = vor.u32 %v3107, %v3108
        %vm3110 = vcmp.lt.s32.totalorder %v3091, 1
        %vm3111 = vcmp.lt.s32.totalorder %v3091, 2
        %vm3112 = vcmp.lt.s32.totalorder %v3091, 3
        %vm3113 = vcmp.lt.s32.totalorder %v3091, 4
        %v3114 = vsel %vm3110, %v3094, %v3097
        %v3115 = vsel %vm3113, %v3103, 2102212464
        %v3116 = vsel %vm3112, %v3100, %v3115
        %v3117 = vsel %vm3111, %v3114, %v3116
        %v3118 = vsel %vm3110, %v3097, %v3100
        %v3119 = vsel %vm3113, %v3106, 920167782
        %v3120 = vsel %vm3112, %v3103, %v3119
        %v3121 = vsel %vm3111, %v3118, %v3120
        %v3122 = vsel %vm3110, %v3100, %v3103
        %v3123 = vsel %vm3113, %v3109, 1326507024
        %v3124 = vsel %vm3112, %v3106, %v3123
        %v3125 = vsel %vm3111, %v3122, %v3124
        %v3126 = vshll.u32 %v3086, 8
        %v3127 = vmul.u32.u64.compose %v3126, %v3125
        %v3128 = vextract.low.u32 %v3127
        %v3129 = vextract.high.u32 %v3127
        %v3130 = vmul.u32.u64.compose %v3126, %v3121
        %v3131 = vextract.low.u32 %v3130
        %v3132 = vextract.high.u32 %v3130
        %v3133 = vmul.u32 %v3126, %v3117
        %v3134 = vadd.s32 %v3129, %v3131
        %vm3135 = vc.u32 %v3129, %v3131
        %v3136 = vadd.s32 %v3132, 1
        %v3137 = vsel %vm3135, %v3136, %v3132
        %v3138 = vadd.s32 %v3133, %v3137
        %v3139 = vadd.s32 %v3138, 536870912
        %v3140 = vshrl.u32 %v3139, 30
        %v3141 = vshll.u32 %v3140, 30
        %v3142 = vsub.s32 %v3138, %v3141
        %vm3143 = vcmp.lt.s32.totalorder %v3142, 0
        %v3144 = vsub.s32 0, %v3142
        %v3145 = vsel %vm3143, %v3144, %v3142
        %v3146 = vclz %v3145
        %v3147 = vsub.s32 %v3146, 2
        %vm3148 = vcmp.gt.s32.totalorder 0, %v3147
        %v3149 = vsel %vm3148, 0, %v3147
        %v3150 = vsub.s32 32, %v3149
        %v3151 = vshll.u32 %v3142, %v3149
        %v3152 = vshrl.u32 %v3134, %v3150
        %v3153 = vor.u32 %v3151, %v3152
        %v3154 = vsub.s32 4294967266, %v3149
        %v3155 = vadd.s32 %v3154, 127
        %v3156 = vshll.u32 %v3155, 23
        %v3157 = vor.u32 4788187, %v3156
        %v3158 = vand.u32 2147483647, %v3157
        %v3160 = vcvt.s32.f32 %v3153
        %v3161 = vmul.f32 %v3160, %v3158
        %v3162 = vxor.u32 %v3161, 2147483648
        %v3163 = vsel %vm3080, %v3162, %v3161
        %v3164 = vsub.s32 4, %v3140
        %v3165 = vsel %vm3080, %v3164, %v3140
        %v3166 = vsel %vm3079, %v382, %v3163
        %v3167 = vsel %vm3079, 0, %v3165
        %v3168 = vcosq.f32.pop %v3166
        %v3169 = vsinq.f32.pop %v3166
        %vm3170 = vweird.f32 %v382
        %v3171 = vadd.s32 %v3167, 3
        %v3172 = vand.u32 %v3171, 3
        %vm3173 = vcmp.lt.s32.totalorder %v3172, 2
        %vm3174 = vcmp.eq.s32.totalorder %v3172, 0
        %v3175 = vxor.u32 %v3169, 2147483648
        %v3176 = vsel %vm3174, %v3168, %v3175
        %vm3177 = vcmp.eq.s32.totalorder %v3172, 2
        %v3178 = vxor.u32 %v3168, 2147483648
        %v3179 = vsel %vm3177, %v3178, %v3169
        %v3180 = vsel %vm3173, %v3176, %v3179
        %v3181 = vsel %vm3170, nan, %v3180
        %v3182 = vand.u32 2147483647, %v383
        %vm3183 = vcmp.le.f32.partialorder %v3182, 0.7853982
        %vm3184 = vcmp.lt.s32.totalorder %v383, 0
        %v3185 = vand.u32 %v383, 2139095040
        %v3186 = vshrl.u32 %v3185, 23
        %v3187 = vsub.s32 %v3186, 127
        %v3188 = vand.u32 2147483647, %v383
        %v3189 = vand.u32 %v3188, 8388607
        %v3190 = vor.u32 %v3189, 8388608
        %v3191 = vsub.s32 0, %v3190
        %v3192 = vadd.s32 %v3187, 1
        %vm3193 = vcmp.gt.s32.totalorder %v3192, 0
        %v3194 = vsel %vm3193, %v3192, 0
        %v3195 = vshrl.u32 %v3194, 5
        %v3196 = vand.u32 %v3194, 31
        %v3197 = vsub.s32 32, %v3196
        %v3198 = vshrl.u32 683565275, %v3197
        %v3199 = vshll.u32 683565275, %v3196
        %v3200 = vshrl.u32 2475754826, %v3197
        %v3201 = vor.u32 %v3199, %v3200
        %v3202 = vshll.u32 2475754826, %v3196
        %v3203 = vshrl.u32 2131351028, %v3197
        %v3204 = vor.u32 %v3202, %v3203
        %v3205 = vshll.u32 2131351028, %v3196
        %v3206 = vshrl.u32 2102212464, %v3197
        %v3207 = vor.u32 %v3205, %v3206
        %v3208 = vshll.u32 2102212464, %v3196
        %v3209 = vshrl.u32 920167782, %v3197
        %v3210 = vor.u32 %v3208, %v3209
        %v3211 = vshll.u32 920167782, %v3196
        %v3212 = vshrl.u32 1326507024, %v3197
        %v3213 = vor.u32 %v3211, %v3212
        %vm3214 = vcmp.lt.s32.totalorder %v3195, 1
        %vm3215 = vcmp.lt.s32.totalorder %v3195, 2
        %vm3216 = vcmp.lt.s32.totalorder %v3195, 3
        %vm3217 = vcmp.lt.s32.totalorder %v3195, 4
        %v3218 = vsel %vm3214, %v3198, %v3201
        %v3219 = vsel %vm3217, %v3207, 2102212464
        %v3220 = vsel %vm3216, %v3204, %v3219
        %v3221 = vsel %vm3215, %v3218, %v3220
        %v3222 = vsel %vm3214, %v3201, %v3204
        %v3223 = vsel %vm3217, %v3210, 920167782
        %v3224 = vsel %vm3216, %v3207, %v3223
        %v3225 = vsel %vm3215, %v3222, %v3224
        %v3226 = vsel %vm3214, %v3204, %v3207
        %v3227 = vsel %vm3217, %v3213, 1326507024
        %v3228 = vsel %vm3216, %v3210, %v3227
        %v3229 = vsel %vm3215, %v3226, %v3228
        %v3230 = vshll.u32 %v3190, 8
        %v3231 = vmul.u32.u64.compose %v3230, %v3229
        %v3232 = vextract.low.u32 %v3231
        %v3233 = vextract.high.u32 %v3231
        %v3234 = vmul.u32.u64.compose %v3230, %v3225
        %v3235 = vextract.low.u32 %v3234
        %v3236 = vextract.high.u32 %v3234
        %v3237 = vmul.u32 %v3230, %v3221
        %v3238 = vadd.s32 %v3233, %v3235
        %vm3239 = vc.u32 %v3233, %v3235
        %v3240 = vadd.s32 %v3236, 1
        %v3241 = vsel %vm3239, %v3240, %v3236
        %v3242 = vadd.s32 %v3237, %v3241
        %v3243 = vadd.s32 %v3242, 536870912
        %v3244 = vshrl.u32 %v3243, 30
        %v3245 = vshll.u32 %v3244, 30
        %v3246 = vsub.s32 %v3242, %v3245
        %vm3247 = vcmp.lt.s32.totalorder %v3246, 0
        %v3248 = vsub.s32 0, %v3246
        %v3249 = vsel %vm3247, %v3248, %v3246
        %v3250 = vclz %v3249
        %v3251 = vsub.s32 %v3250, 2
        %vm3252 = vcmp.gt.s32.totalorder 0, %v3251
        %v3253 = vsel %vm3252, 0, %v3251
        %v3254 = vsub.s32 32, %v3253
        %v3255 = vshll.u32 %v3246, %v3253
        %v3256 = vshrl.u32 %v3238, %v3254
        %v3257 = vor.u32 %v3255, %v3256
        %v3258 = vsub.s32 4294967266, %v3253
        %v3259 = vadd.s32 %v3258, 127
        %v3260 = vshll.u32 %v3259, 23
        %v3261 = vor.u32 4788187, %v3260
        %v3262 = vand.u32 2147483647, %v3261
        %v3264 = vcvt.s32.f32 %v3257
        %v3265 = vmul.f32 %v3264, %v3262
        %v3266 = vxor.u32 %v3265, 2147483648
        %v3267 = vsel %vm3184, %v3266, %v3265
        %v3268 = vsub.s32 4, %v3244
        %v3269 = vsel %vm3184, %v3268, %v3244
        %v3270 = vsel %vm3183, %v383, %v3267
        %v3271 = vsel %vm3183, 0, %v3269
        %v3272 = vcosq.f32.pop %v3270
        %v3273 = vsinq.f32.pop %v3270
        %vm3274 = vweird.f32 %v383
        %v3275 = vadd.s32 %v3271, 3
        %v3276 = vand.u32 %v3275, 3
        %vm3277 = vcmp.lt.s32.totalorder %v3276, 2
        %vm3278 = vcmp.eq.s32.totalorder %v3276, 0
        %v3279 = vxor.u32 %v3273, 2147483648
        %v3280 = vsel %vm3278, %v3272, %v3279
        %vm3281 = vcmp.eq.s32.totalorder %v3276, 2
        %v3282 = vxor.u32 %v3272, 2147483648
        %v3283 = vsel %vm3281, %v3282, %v3273
        %v3284 = vsel %vm3277, %v3280, %v3283
        %v3285 = vsel %vm3274, nan, %v3284
        %v3286 = vand.u32 2147483647, %v384
        %vm3287 = vcmp.le.f32.partialorder %v3286, 0.7853982
        %vm3288 = vcmp.lt.s32.totalorder %v384, 0
        %v3289 = vand.u32 %v384, 2139095040
        %v3290 = vshrl.u32 %v3289, 23
        %v3291 = vsub.s32 %v3290, 127
        %v3292 = vand.u32 2147483647, %v384
        %v3293 = vand.u32 %v3292, 8388607
        %v3294 = vor.u32 %v3293, 8388608
        %v3295 = vsub.s32 0, %v3294
        %v3296 = vadd.s32 %v3291, 1
        %vm3297 = vcmp.gt.s32.totalorder %v3296, 0
        %v3298 = vsel %vm3297, %v3296, 0
        %v3299 = vshrl.u32 %v3298, 5
        %v3300 = vand.u32 %v3298, 31
        %v3301 = vsub.s32 32, %v3300
        %v3302 = vshrl.u32 683565275, %v3301
        %v3303 = vshll.u32 683565275, %v3300
        %v3304 = vshrl.u32 2475754826, %v3301
        %v3305 = vor.u32 %v3303, %v3304
        %v3306 = vshll.u32 2475754826, %v3300
        %v3307 = vshrl.u32 2131351028, %v3301
        %v3308 = vor.u32 %v3306, %v3307
        %v3309 = vshll.u32 2131351028, %v3300
        %v3310 = vshrl.u32 2102212464, %v3301
        %v3311 = vor.u32 %v3309, %v3310
        %v3312 = vshll.u32 2102212464, %v3300
        %v3313 = vshrl.u32 920167782, %v3301
        %v3314 = vor.u32 %v3312, %v3313
        %v3315 = vshll.u32 920167782, %v3300
        %v3316 = vshrl.u32 1326507024, %v3301
        %v3317 = vor.u32 %v3315, %v3316
        %vm3318 = vcmp.lt.s32.totalorder %v3299, 1
        %vm3319 = vcmp.lt.s32.totalorder %v3299, 2
        %vm3320 = vcmp.lt.s32.totalorder %v3299, 3
        %vm3321 = vcmp.lt.s32.totalorder %v3299, 4
        %v3322 = vsel %vm3318, %v3302, %v3305
        %v3323 = vsel %vm3321, %v3311, 2102212464
        %v3324 = vsel %vm3320, %v3308, %v3323
        %v3325 = vsel %vm3319, %v3322, %v3324
        %v3326 = vsel %vm3318, %v3305, %v3308
        %v3327 = vsel %vm3321, %v3314, 920167782
        %v3328 = vsel %vm3320, %v3311, %v3327
        %v3329 = vsel %vm3319, %v3326, %v3328
        %v3330 = vsel %vm3318, %v3308, %v3311
        %v3331 = vsel %vm3321, %v3317, 1326507024
        %v3332 = vsel %vm3320, %v3314, %v3331
        %v3333 = vsel %vm3319, %v3330, %v3332
        %v3334 = vshll.u32 %v3294, 8
        %v3335 = vmul.u32.u64.compose %v3334, %v3333
        %v3336 = vextract.low.u32 %v3335
        %v3337 = vextract.high.u32 %v3335
        %v3338 = vmul.u32.u64.compose %v3334, %v3329
        %v3339 = vextract.low.u32 %v3338
        %v3340 = vextract.high.u32 %v3338
        %v3341 = vmul.u32 %v3334, %v3325
        %v3342 = vadd.s32 %v3337, %v3339
        %vm3343 = vc.u32 %v3337, %v3339
        %v3344 = vadd.s32 %v3340, 1
        %v3345 = vsel %vm3343, %v3344, %v3340
        %v3346 = vadd.s32 %v3341, %v3345
        %v3347 = vadd.s32 %v3346, 536870912
        %v3348 = vshrl.u32 %v3347, 30
        %v3349 = vshll.u32 %v3348, 30
        %v3350 = vsub.s32 %v3346, %v3349
        %vm3351 = vcmp.lt.s32.totalorder %v3350, 0
        %v3352 = vsub.s32 0, %v3350
        %v3353 = vsel %vm3351, %v3352, %v3350
        %v3354 = vclz %v3353
        %v3355 = vsub.s32 %v3354, 2
        %vm3356 = vcmp.gt.s32.totalorder 0, %v3355
        %v3357 = vsel %vm3356, 0, %v3355
        %v3358 = vsub.s32 32, %v3357
        %v3359 = vshll.u32 %v3350, %v3357
        %v3360 = vshrl.u32 %v3342, %v3358
        %v3361 = vor.u32 %v3359, %v3360
        %v3362 = vsub.s32 4294967266, %v3357
        %v3363 = vadd.s32 %v3362, 127
        %v3364 = vshll.u32 %v3363, 23
        %v3365 = vor.u32 4788187, %v3364
        %v3366 = vand.u32 2147483647, %v3365
        %v3368 = vcvt.s32.f32 %v3361
        %v3369 = vmul.f32 %v3368, %v3366
        %v3370 = vxor.u32 %v3369, 2147483648
        %v3371 = vsel %vm3288, %v3370, %v3369
        %v3372 = vsub.s32 4, %v3348
        %v3373 = vsel %vm3288, %v3372, %v3348
        %v3374 = vsel %vm3287, %v384, %v3371
        %v3375 = vsel %vm3287, 0, %v3373
        %v3376 = vcosq.f32.pop %v3374
        %v3377 = vsinq.f32.pop %v3374
        %vm3378 = vweird.f32 %v384
        %v3379 = vadd.s32 %v3375, 3
        %v3380 = vand.u32 %v3379, 3
        %vm3381 = vcmp.lt.s32.totalorder %v3380, 2
        %vm3382 = vcmp.eq.s32.totalorder %v3380, 0
        %v3383 = vxor.u32 %v3377, 2147483648
        %v3384 = vsel %vm3382, %v3376, %v3383
        %vm3385 = vcmp.eq.s32.totalorder %v3380, 2
        %v3386 = vxor.u32 %v3376, 2147483648
        %v3387 = vsel %vm3385, %v3386, %v3377
        %v3388 = vsel %vm3381, %v3384, %v3387
        %v3389 = vsel %vm3378, nan, %v3388
        %v3390 = vand.u32 2147483647, %v385
        %vm3391 = vcmp.le.f32.partialorder %v3390, 0.7853982
        %vm3392 = vcmp.lt.s32.totalorder %v385, 0
        %v3393 = vand.u32 %v385, 2139095040
        %v3394 = vshrl.u32 %v3393, 23
        %v3395 = vsub.s32 %v3394, 127
        %v3396 = vand.u32 2147483647, %v385
        %v3397 = vand.u32 %v3396, 8388607
        %v3398 = vor.u32 %v3397, 8388608
        %v3399 = vsub.s32 0, %v3398
        %v3400 = vadd.s32 %v3395, 1
        %vm3401 = vcmp.gt.s32.totalorder %v3400, 0
        %v3402 = vsel %vm3401, %v3400, 0
        %v3403 = vshrl.u32 %v3402, 5
        %v3404 = vand.u32 %v3402, 31
        %v3405 = vsub.s32 32, %v3404
        %v3406 = vshrl.u32 683565275, %v3405
        %v3407 = vshll.u32 683565275, %v3404
        %v3408 = vshrl.u32 2475754826, %v3405
        %v3409 = vor.u32 %v3407, %v3408
        %v3410 = vshll.u32 2475754826, %v3404
        %v3411 = vshrl.u32 2131351028, %v3405
        %v3412 = vor.u32 %v3410, %v3411
        %v3413 = vshll.u32 2131351028, %v3404
        %v3414 = vshrl.u32 2102212464, %v3405
        %v3415 = vor.u32 %v3413, %v3414
        %v3416 = vshll.u32 2102212464, %v3404
        %v3417 = vshrl.u32 920167782, %v3405
        %v3418 = vor.u32 %v3416, %v3417
        %v3419 = vshll.u32 920167782, %v3404
        %v3420 = vshrl.u32 1326507024, %v3405
        %v3421 = vor.u32 %v3419, %v3420
        %vm3422 = vcmp.lt.s32.totalorder %v3403, 1
        %vm3423 = vcmp.lt.s32.totalorder %v3403, 2
        %vm3424 = vcmp.lt.s32.totalorder %v3403, 3
        %vm3425 = vcmp.lt.s32.totalorder %v3403, 4
        %v3426 = vsel %vm3422, %v3406, %v3409
        %v3427 = vsel %vm3425, %v3415, 2102212464
        %v3428 = vsel %vm3424, %v3412, %v3427
        %v3429 = vsel %vm3423, %v3426, %v3428
        %v3430 = vsel %vm3422, %v3409, %v3412
        %v3431 = vsel %vm3425, %v3418, 920167782
        %v3432 = vsel %vm3424, %v3415, %v3431
        %v3433 = vsel %vm3423, %v3430, %v3432
        %v3434 = vsel %vm3422, %v3412, %v3415
        %v3435 = vsel %vm3425, %v3421, 1326507024
        %v3436 = vsel %vm3424, %v3418, %v3435
        %v3437 = vsel %vm3423, %v3434, %v3436
        %v3438 = vshll.u32 %v3398, 8
        %v3439 = vmul.u32.u64.compose %v3438, %v3437
        %v3440 = vextract.low.u32 %v3439
        %v3441 = vextract.high.u32 %v3439
        %v3442 = vmul.u32.u64.compose %v3438, %v3433
        %v3443 = vextract.low.u32 %v3442
        %v3444 = vextract.high.u32 %v3442
        %v3445 = vmul.u32 %v3438, %v3429
        %v3446 = vadd.s32 %v3441, %v3443
        %vm3447 = vc.u32 %v3441, %v3443
        %v3448 = vadd.s32 %v3444, 1
        %v3449 = vsel %vm3447, %v3448, %v3444
        %v3450 = vadd.s32 %v3445, %v3449
        %v3451 = vadd.s32 %v3450, 536870912
        %v3452 = vshrl.u32 %v3451, 30
        %v3453 = vshll.u32 %v3452, 30
        %v3454 = vsub.s32 %v3450, %v3453
        %vm3455 = vcmp.lt.s32.totalorder %v3454, 0
        %v3456 = vsub.s32 0, %v3454
        %v3457 = vsel %vm3455, %v3456, %v3454
        %v3458 = vclz %v3457
        %v3459 = vsub.s32 %v3458, 2
        %vm3460 = vcmp.gt.s32.totalorder 0, %v3459
        %v3461 = vsel %vm3460, 0, %v3459
        %v3462 = vsub.s32 32, %v3461
        %v3463 = vshll.u32 %v3454, %v3461
        %v3464 = vshrl.u32 %v3446, %v3462
        %v3465 = vor.u32 %v3463, %v3464
        %v3466 = vsub.s32 4294967266, %v3461
        %v3467 = vadd.s32 %v3466, 127
        %v3468 = vshll.u32 %v3467, 23
        %v3469 = vor.u32 4788187, %v3468
        %v3470 = vand.u32 2147483647, %v3469
        %v3472 = vcvt.s32.f32 %v3465
        %v3473 = vmul.f32 %v3472, %v3470
        %v3474 = vxor.u32 %v3473, 2147483648
        %v3475 = vsel %vm3392, %v3474, %v3473
        %v3476 = vsub.s32 4, %v3452
        %v3477 = vsel %vm3392, %v3476, %v3452
        %v3478 = vsel %vm3391, %v385, %v3475
        %v3479 = vsel %vm3391, 0, %v3477
        %v3480 = vcosq.f32.pop %v3478
        %v3481 = vsinq.f32.pop %v3478
        %vm3482 = vweird.f32 %v385
        %v3483 = vadd.s32 %v3479, 3
        %v3484 = vand.u32 %v3483, 3
        %vm3485 = vcmp.lt.s32.totalorder %v3484, 2
        %vm3486 = vcmp.eq.s32.totalorder %v3484, 0
        %v3487 = vxor.u32 %v3481, 2147483648
        %v3488 = vsel %vm3486, %v3480, %v3487
        %vm3489 = vcmp.eq.s32.totalorder %v3484, 2
        %v3490 = vxor.u32 %v3480, 2147483648
        %v3491 = vsel %vm3489, %v3490, %v3481
        %v3492 = vsel %vm3485, %v3488, %v3491
        %v3493 = vsel %vm3482, nan, %v3492
        %v3494 = vand.u32 2147483647, %v386
        %vm3495 = vcmp.le.f32.partialorder %v3494, 0.7853982
        %vm3496 = vcmp.lt.s32.totalorder %v386, 0
        %v3497 = vand.u32 %v386, 2139095040
        %v3498 = vshrl.u32 %v3497, 23
        %v3499 = vsub.s32 %v3498, 127
        %v3500 = vand.u32 2147483647, %v386
        %v3501 = vand.u32 %v3500, 8388607
        %v3502 = vor.u32 %v3501, 8388608
        %v3503 = vsub.s32 0, %v3502
        %v3504 = vadd.s32 %v3499, 1
        %vm3505 = vcmp.gt.s32.totalorder %v3504, 0
        %v3506 = vsel %vm3505, %v3504, 0
        %v3507 = vshrl.u32 %v3506, 5
        %v3508 = vand.u32 %v3506, 31
        %v3509 = vsub.s32 32, %v3508
        %v3510 = vshrl.u32 683565275, %v3509
        %v3511 = vshll.u32 683565275, %v3508
        %v3512 = vshrl.u32 2475754826, %v3509
        %v3513 = vor.u32 %v3511, %v3512
        %v3514 = vshll.u32 2475754826, %v3508
        %v3515 = vshrl.u32 2131351028, %v3509
        %v3516 = vor.u32 %v3514, %v3515
        %v3517 = vshll.u32 2131351028, %v3508
        %v3518 = vshrl.u32 2102212464, %v3509
        %v3519 = vor.u32 %v3517, %v3518
        %v3520 = vshll.u32 2102212464, %v3508
        %v3521 = vshrl.u32 920167782, %v3509
        %v3522 = vor.u32 %v3520, %v3521
        %v3523 = vshll.u32 920167782, %v3508
        %v3524 = vshrl.u32 1326507024, %v3509
        %v3525 = vor.u32 %v3523, %v3524
        %vm3526 = vcmp.lt.s32.totalorder %v3507, 1
        %vm3527 = vcmp.lt.s32.totalorder %v3507, 2
        %vm3528 = vcmp.lt.s32.totalorder %v3507, 3
        %vm3529 = vcmp.lt.s32.totalorder %v3507, 4
        %v3530 = vsel %vm3526, %v3510, %v3513
        %v3531 = vsel %vm3529, %v3519, 2102212464
        %v3532 = vsel %vm3528, %v3516, %v3531
        %v3533 = vsel %vm3527, %v3530, %v3532
        %v3534 = vsel %vm3526, %v3513, %v3516
        %v3535 = vsel %vm3529, %v3522, 920167782
        %v3536 = vsel %vm3528, %v3519, %v3535
        %v3537 = vsel %vm3527, %v3534, %v3536
        %v3538 = vsel %vm3526, %v3516, %v3519
        %v3539 = vsel %vm3529, %v3525, 1326507024
        %v3540 = vsel %vm3528, %v3522, %v3539
        %v3541 = vsel %vm3527, %v3538, %v3540
        %v3542 = vshll.u32 %v3502, 8
        %v3543 = vmul.u32.u64.compose %v3542, %v3541
        %v3544 = vextract.low.u32 %v3543
        %v3545 = vextract.high.u32 %v3543
        %v3546 = vmul.u32.u64.compose %v3542, %v3537
        %v3547 = vextract.low.u32 %v3546
        %v3548 = vextract.high.u32 %v3546
        %v3549 = vmul.u32 %v3542, %v3533
        %v3550 = vadd.s32 %v3545, %v3547
        %vm3551 = vc.u32 %v3545, %v3547
        %v3552 = vadd.s32 %v3548, 1
        %v3553 = vsel %vm3551, %v3552, %v3548
        %v3554 = vadd.s32 %v3549, %v3553
        %v3555 = vadd.s32 %v3554, 536870912
        %v3556 = vshrl.u32 %v3555, 30
        %v3557 = vshll.u32 %v3556, 30
        %v3558 = vsub.s32 %v3554, %v3557
        %vm3559 = vcmp.lt.s32.totalorder %v3558, 0
        %v3560 = vsub.s32 0, %v3558
        %v3561 = vsel %vm3559, %v3560, %v3558
        %v3562 = vclz %v3561
        %v3563 = vsub.s32 %v3562, 2
        %vm3564 = vcmp.gt.s32.totalorder 0, %v3563
        %v3565 = vsel %vm3564, 0, %v3563
        %v3566 = vsub.s32 32, %v3565
        %v3567 = vshll.u32 %v3558, %v3565
        %v3568 = vshrl.u32 %v3550, %v3566
        %v3569 = vor.u32 %v3567, %v3568
        %v3570 = vsub.s32 4294967266, %v3565
        %v3571 = vadd.s32 %v3570, 127
        %v3572 = vshll.u32 %v3571, 23
        %v3573 = vor.u32 4788187, %v3572
        %v3574 = vand.u32 2147483647, %v3573
        %v3576 = vcvt.s32.f32 %v3569
        %v3577 = vmul.f32 %v3576, %v3574
        %v3578 = vxor.u32 %v3577, 2147483648
        %v3579 = vsel %vm3496, %v3578, %v3577
        %v3580 = vsub.s32 4, %v3556
        %v3581 = vsel %vm3496, %v3580, %v3556
        %v3582 = vsel %vm3495, %v386, %v3579
        %v3583 = vsel %vm3495, 0, %v3581
        %v3584 = vcosq.f32.pop %v3582
        %v3585 = vsinq.f32.pop %v3582
        %vm3586 = vweird.f32 %v386
        %v3587 = vadd.s32 %v3583, 3
        %v3588 = vand.u32 %v3587, 3
        %vm3589 = vcmp.lt.s32.totalorder %v3588, 2
        %vm3590 = vcmp.eq.s32.totalorder %v3588, 0
        %v3591 = vxor.u32 %v3585, 2147483648
        %v3592 = vsel %vm3590, %v3584, %v3591
        %vm3593 = vcmp.eq.s32.totalorder %v3588, 2
        %v3594 = vxor.u32 %v3584, 2147483648
        %v3595 = vsel %vm3593, %v3594, %v3585
        %v3596 = vsel %vm3589, %v3592, %v3595
        %v3597 = vsel %vm3586, nan, %v3596
        %v3598 = vand.u32 2147483647, %v387
        %vm3599 = vcmp.le.f32.partialorder %v3598, 0.7853982
        %vm3600 = vcmp.lt.s32.totalorder %v387, 0
        %v3601 = vand.u32 %v387, 2139095040
        %v3602 = vshrl.u32 %v3601, 23
        %v3603 = vsub.s32 %v3602, 127
        %v3604 = vand.u32 2147483647, %v387
        %v3605 = vand.u32 %v3604, 8388607
        %v3606 = vor.u32 %v3605, 8388608
        %v3607 = vsub.s32 0, %v3606
        %v3608 = vadd.s32 %v3603, 1
        %vm3609 = vcmp.gt.s32.totalorder %v3608, 0
        %v3610 = vsel %vm3609, %v3608, 0
        %v3611 = vshrl.u32 %v3610, 5
        %v3612 = vand.u32 %v3610, 31
        %v3613 = vsub.s32 32, %v3612
        %v3614 = vshrl.u32 683565275, %v3613
        %v3615 = vshll.u32 683565275, %v3612
        %v3616 = vshrl.u32 2475754826, %v3613
        %v3617 = vor.u32 %v3615, %v3616
        %v3618 = vshll.u32 2475754826, %v3612
        %v3619 = vshrl.u32 2131351028, %v3613
        %v3620 = vor.u32 %v3618, %v3619
        %v3621 = vshll.u32 2131351028, %v3612
        %v3622 = vshrl.u32 2102212464, %v3613
        %v3623 = vor.u32 %v3621, %v3622
        %v3624 = vshll.u32 2102212464, %v3612
        %v3625 = vshrl.u32 920167782, %v3613
        %v3626 = vor.u32 %v3624, %v3625
        %v3627 = vshll.u32 920167782, %v3612
        %v3628 = vshrl.u32 1326507024, %v3613
        %v3629 = vor.u32 %v3627, %v3628
        %vm3630 = vcmp.lt.s32.totalorder %v3611, 1
        %vm3631 = vcmp.lt.s32.totalorder %v3611, 2
        %vm3632 = vcmp.lt.s32.totalorder %v3611, 3
        %vm3633 = vcmp.lt.s32.totalorder %v3611, 4
        %v3634 = vsel %vm3630, %v3614, %v3617
        %v3635 = vsel %vm3633, %v3623, 2102212464
        %v3636 = vsel %vm3632, %v3620, %v3635
        %v3637 = vsel %vm3631, %v3634, %v3636
        %v3638 = vsel %vm3630, %v3617, %v3620
        %v3639 = vsel %vm3633, %v3626, 920167782
        %v3640 = vsel %vm3632, %v3623, %v3639
        %v3641 = vsel %vm3631, %v3638, %v3640
        %v3642 = vsel %vm3630, %v3620, %v3623
        %v3643 = vsel %vm3633, %v3629, 1326507024
        %v3644 = vsel %vm3632, %v3626, %v3643
        %v3645 = vsel %vm3631, %v3642, %v3644
        %v3646 = vshll.u32 %v3606, 8
        %v3647 = vmul.u32.u64.compose %v3646, %v3645
        %v3648 = vextract.low.u32 %v3647
        %v3649 = vextract.high.u32 %v3647
        %v3650 = vmul.u32.u64.compose %v3646, %v3641
        %v3651 = vextract.low.u32 %v3650
        %v3652 = vextract.high.u32 %v3650
        %v3653 = vmul.u32 %v3646, %v3637
        %v3654 = vadd.s32 %v3649, %v3651
        %vm3655 = vc.u32 %v3649, %v3651
        %v3656 = vadd.s32 %v3652, 1
        %v3657 = vsel %vm3655, %v3656, %v3652
        %v3658 = vadd.s32 %v3653, %v3657
        %v3659 = vadd.s32 %v3658, 536870912
        %v3660 = vshrl.u32 %v3659, 30
        %v3661 = vshll.u32 %v3660, 30
        %v3662 = vsub.s32 %v3658, %v3661
        %vm3663 = vcmp.lt.s32.totalorder %v3662, 0
        %v3664 = vsub.s32 0, %v3662
        %v3665 = vsel %vm3663, %v3664, %v3662
        %v3666 = vclz %v3665
        %v3667 = vsub.s32 %v3666, 2
        %vm3668 = vcmp.gt.s32.totalorder 0, %v3667
        %v3669 = vsel %vm3668, 0, %v3667
        %v3670 = vsub.s32 32, %v3669
        %v3671 = vshll.u32 %v3662, %v3669
        %v3672 = vshrl.u32 %v3654, %v3670
        %v3673 = vor.u32 %v3671, %v3672
        %v3674 = vsub.s32 4294967266, %v3669
        %v3675 = vadd.s32 %v3674, 127
        %v3676 = vshll.u32 %v3675, 23
        %v3677 = vor.u32 4788187, %v3676
        %v3678 = vand.u32 2147483647, %v3677
        %v3680 = vcvt.s32.f32 %v3673
        %v3681 = vmul.f32 %v3680, %v3678
        %v3682 = vxor.u32 %v3681, 2147483648
        %v3683 = vsel %vm3600, %v3682, %v3681
        %v3684 = vsub.s32 4, %v3660
        %v3685 = vsel %vm3600, %v3684, %v3660
        %v3686 = vsel %vm3599, %v387, %v3683
        %v3687 = vsel %vm3599, 0, %v3685
        %v3688 = vcosq.f32.pop %v3686
        %v3689 = vsinq.f32.pop %v3686
        %vm3690 = vweird.f32 %v387
        %v3691 = vadd.s32 %v3687, 3
        %v3692 = vand.u32 %v3691, 3
        %vm3693 = vcmp.lt.s32.totalorder %v3692, 2
        %vm3694 = vcmp.eq.s32.totalorder %v3692, 0
        %v3695 = vxor.u32 %v3689, 2147483648
        %v3696 = vsel %vm3694, %v3688, %v3695
        %vm3697 = vcmp.eq.s32.totalorder %v3692, 2
        %v3698 = vxor.u32 %v3688, 2147483648
        %v3699 = vsel %vm3697, %v3698, %v3689
        %v3700 = vsel %vm3693, %v3696, %v3699
        %v3701 = vsel %vm3690, nan, %v3700
        %v3702 = vand.u32 2147483647, %v389
        %vm3703 = vcmp.le.f32.partialorder %v3702, 0.7853982
        %vm3704 = vcmp.lt.s32.totalorder %v389, 0
        %v3705 = vand.u32 %v389, 2139095040
        %v3706 = vshrl.u32 %v3705, 23
        %v3707 = vsub.s32 %v3706, 127
        %v3708 = vand.u32 2147483647, %v389
        %v3709 = vand.u32 %v3708, 8388607
        %v3710 = vor.u32 %v3709, 8388608
        %v3711 = vsub.s32 0, %v3710
        %v3712 = vadd.s32 %v3707, 1
        %vm3713 = vcmp.gt.s32.totalorder %v3712, 0
        %v3714 = vsel %vm3713, %v3712, 0
        %v3715 = vshrl.u32 %v3714, 5
        %v3716 = vand.u32 %v3714, 31
        %v3717 = vsub.s32 32, %v3716
        %v3718 = vshrl.u32 683565275, %v3717
        %v3719 = vshll.u32 683565275, %v3716
        %v3720 = vshrl.u32 2475754826, %v3717
        %v3721 = vor.u32 %v3719, %v3720
        %v3722 = vshll.u32 2475754826, %v3716
        %v3723 = vshrl.u32 2131351028, %v3717
        %v3724 = vor.u32 %v3722, %v3723
        %v3725 = vshll.u32 2131351028, %v3716
        %v3726 = vshrl.u32 2102212464, %v3717
        %v3727 = vor.u32 %v3725, %v3726
        %v3728 = vshll.u32 2102212464, %v3716
        %v3729 = vshrl.u32 920167782, %v3717
        %v3730 = vor.u32 %v3728, %v3729
        %v3731 = vshll.u32 920167782, %v3716
        %v3732 = vshrl.u32 1326507024, %v3717
        %v3733 = vor.u32 %v3731, %v3732
        %vm3734 = vcmp.lt.s32.totalorder %v3715, 1
        %vm3735 = vcmp.lt.s32.totalorder %v3715, 2
        %vm3736 = vcmp.lt.s32.totalorder %v3715, 3
        %vm3737 = vcmp.lt.s32.totalorder %v3715, 4
        %v3738 = vsel %vm3734, %v3718, %v3721
        %v3739 = vsel %vm3737, %v3727, 2102212464
        %v3740 = vsel %vm3736, %v3724, %v3739
        %v3741 = vsel %vm3735, %v3738, %v3740
        %v3742 = vsel %vm3734, %v3721, %v3724
        %v3743 = vsel %vm3737, %v3730, 920167782
        %v3744 = vsel %vm3736, %v3727, %v3743
        %v3745 = vsel %vm3735, %v3742, %v3744
        %v3746 = vsel %vm3734, %v3724, %v3727
        %v3747 = vsel %vm3737, %v3733, 1326507024
        %v3748 = vsel %vm3736, %v3730, %v3747
        %v3749 = vsel %vm3735, %v3746, %v3748
        %v3750 = vshll.u32 %v3710, 8
        %v3751 = vmul.u32.u64.compose %v3750, %v3749
        %v3752 = vextract.low.u32 %v3751
        %v3753 = vextract.high.u32 %v3751
        %v3754 = vmul.u32.u64.compose %v3750, %v3745
        %v3755 = vextract.low.u32 %v3754
        %v3756 = vextract.high.u32 %v3754
        %v3757 = vmul.u32 %v3750, %v3741
        %v3758 = vadd.s32 %v3753, %v3755
        %vm3759 = vc.u32 %v3753, %v3755
        %v3760 = vadd.s32 %v3756, 1
        %v3761 = vsel %vm3759, %v3760, %v3756
        %v3762 = vadd.s32 %v3757, %v3761
        %v3763 = vadd.s32 %v3762, 536870912
        %v3764 = vshrl.u32 %v3763, 30
        %v3765 = vshll.u32 %v3764, 30
        %v3766 = vsub.s32 %v3762, %v3765
        %vm3767 = vcmp.lt.s32.totalorder %v3766, 0
        %v3768 = vsub.s32 0, %v3766
        %v3769 = vsel %vm3767, %v3768, %v3766
        %v3770 = vclz %v3769
        %v3771 = vsub.s32 %v3770, 2
        %vm3772 = vcmp.gt.s32.totalorder 0, %v3771
        %v3773 = vsel %vm3772, 0, %v3771
        %v3774 = vsub.s32 32, %v3773
        %v3775 = vshll.u32 %v3766, %v3773
        %v3776 = vshrl.u32 %v3758, %v3774
        %v3777 = vor.u32 %v3775, %v3776
        %v3778 = vsub.s32 4294967266, %v3773
        %v3779 = vadd.s32 %v3778, 127
        %v3780 = vshll.u32 %v3779, 23
        %v3781 = vor.u32 4788187, %v3780
        %v3782 = vand.u32 2147483647, %v3781
        %v3784 = vcvt.s32.f32 %v3777
        %v3785 = vmul.f32 %v3784, %v3782
        %v3786 = vxor.u32 %v3785, 2147483648
        %v3787 = vsel %vm3704, %v3786, %v3785
        %v3788 = vsub.s32 4, %v3764
        %v3789 = vsel %vm3704, %v3788, %v3764
        %v3790 = vsel %vm3703, %v389, %v3787
        %v3791 = vsel %vm3703, 0, %v3789
        %v3792 = vcosq.f32.pop %v3790
        %v3793 = vsinq.f32.pop %v3790
        %vm3794 = vweird.f32 %v389
        %v3795 = vand.u32 %v3791, 3
        %vm3796 = vcmp.lt.s32.totalorder %v3795, 2
        %vm3797 = vcmp.eq.s32.totalorder %v3795, 0
        %v3798 = vxor.u32 %v3793, 2147483648
        %v3799 = vsel %vm3797, %v3792, %v3798
        %vm3800 = vcmp.eq.s32.totalorder %v3795, 2
        %v3801 = vxor.u32 %v3792, 2147483648
        %v3802 = vsel %vm3800, %v3801, %v3793
        %v3803 = vsel %vm3796, %v3799, %v3802
        %v3804 = vsel %vm3794, nan, %v3803
        %v3805 = vand.u32 2147483647, %v389
        %vm3806 = vcmp.le.f32.partialorder %v3805, 0.7853982
        %vm3807 = vcmp.lt.s32.totalorder %v389, 0
        %v3808 = vand.u32 %v389, 2139095040
        %v3809 = vshrl.u32 %v3808, 23
        %v3810 = vsub.s32 %v3809, 127
        %v3811 = vand.u32 2147483647, %v389
        %v3812 = vand.u32 %v3811, 8388607
        %v3813 = vor.u32 %v3812, 8388608
        %v3814 = vsub.s32 0, %v3813
        %v3815 = vadd.s32 %v3810, 1
        %vm3816 = vcmp.gt.s32.totalorder %v3815, 0
        %v3817 = vsel %vm3816, %v3815, 0
        %v3818 = vshrl.u32 %v3817, 5
        %v3819 = vand.u32 %v3817, 31
        %v3820 = vsub.s32 32, %v3819
        %v3821 = vshrl.u32 683565275, %v3820
        %v3822 = vshll.u32 683565275, %v3819
        %v3823 = vshrl.u32 2475754826, %v3820
        %v3824 = vor.u32 %v3822, %v3823
        %v3825 = vshll.u32 2475754826, %v3819
        %v3826 = vshrl.u32 2131351028, %v3820
        %v3827 = vor.u32 %v3825, %v3826
        %v3828 = vshll.u32 2131351028, %v3819
        %v3829 = vshrl.u32 2102212464, %v3820
        %v3830 = vor.u32 %v3828, %v3829
        %v3831 = vshll.u32 2102212464, %v3819
        %v3832 = vshrl.u32 920167782, %v3820
        %v3833 = vor.u32 %v3831, %v3832
        %v3834 = vshll.u32 920167782, %v3819
        %v3835 = vshrl.u32 1326507024, %v3820
        %v3836 = vor.u32 %v3834, %v3835
        %vm3837 = vcmp.lt.s32.totalorder %v3818, 1
        %vm3838 = vcmp.lt.s32.totalorder %v3818, 2
        %vm3839 = vcmp.lt.s32.totalorder %v3818, 3
        %vm3840 = vcmp.lt.s32.totalorder %v3818, 4
        %v3841 = vsel %vm3837, %v3821, %v3824
        %v3842 = vsel %vm3840, %v3830, 2102212464
        %v3843 = vsel %vm3839, %v3827, %v3842
        %v3844 = vsel %vm3838, %v3841, %v3843
        %v3845 = vsel %vm3837, %v3824, %v3827
        %v3846 = vsel %vm3840, %v3833, 920167782
        %v3847 = vsel %vm3839, %v3830, %v3846
        %v3848 = vsel %vm3838, %v3845, %v3847
        %v3849 = vsel %vm3837, %v3827, %v3830
        %v3850 = vsel %vm3840, %v3836, 1326507024
        %v3851 = vsel %vm3839, %v3833, %v3850
        %v3852 = vsel %vm3838, %v3849, %v3851
        %v3853 = vshll.u32 %v3813, 8
        %v3854 = vmul.u32.u64.compose %v3853, %v3852
        %v3855 = vextract.low.u32 %v3854
        %v3856 = vextract.high.u32 %v3854
        %v3857 = vmul.u32.u64.compose %v3853, %v3848
        %v3858 = vextract.low.u32 %v3857
        %v3859 = vextract.high.u32 %v3857
        %v3860 = vmul.u32 %v3853, %v3844
        %v3861 = vadd.s32 %v3856, %v3858
        %vm3862 = vc.u32 %v3856, %v3858
        %v3863 = vadd.s32 %v3859, 1
        %v3864 = vsel %vm3862, %v3863, %v3859
        %v3865 = vadd.s32 %v3860, %v3864
        %v3866 = vadd.s32 %v3865, 536870912
        %v3867 = vshrl.u32 %v3866, 30
        %v3868 = vshll.u32 %v3867, 30
        %v3869 = vsub.s32 %v3865, %v3868
        %vm3870 = vcmp.lt.s32.totalorder %v3869, 0
        %v3871 = vsub.s32 0, %v3869
        %v3872 = vsel %vm3870, %v3871, %v3869
        %v3873 = vclz %v3872
        %v3874 = vsub.s32 %v3873, 2
        %vm3875 = vcmp.gt.s32.totalorder 0, %v3874
        %v3876 = vsel %vm3875, 0, %v3874
        %v3877 = vsub.s32 32, %v3876
        %v3878 = vshll.u32 %v3869, %v3876
        %v3879 = vshrl.u32 %v3861, %v3877
        %v3880 = vor.u32 %v3878, %v3879
        %v3881 = vsub.s32 4294967266, %v3876
        %v3882 = vadd.s32 %v3881, 127
        %v3883 = vshll.u32 %v3882, 23
        %v3884 = vor.u32 4788187, %v3883
        %v3885 = vand.u32 2147483647, %v3884
        %v3887 = vcvt.s32.f32 %v3880
        %v3888 = vmul.f32 %v3887, %v3885
        %v3889 = vxor.u32 %v3888, 2147483648
        %v3890 = vsel %vm3807, %v3889, %v3888
        %v3891 = vsub.s32 4, %v3867
        %v3892 = vsel %vm3807, %v3891, %v3867
        %v3893 = vsel %vm3806, %v389, %v3890
        %v3894 = vsel %vm3806, 0, %v3892
        %v3895 = vcosq.f32.pop %v3893
        %v3896 = vsinq.f32.pop %v3893
        %vm3897 = vweird.f32 %v389
        %v3898 = vadd.s32 %v3894, 3
        %v3899 = vand.u32 %v3898, 3
        %vm3900 = vcmp.lt.s32.totalorder %v3899, 2
        %vm3901 = vcmp.eq.s32.totalorder %v3899, 0
        %v3902 = vxor.u32 %v3896, 2147483648
        %v3903 = vsel %vm3901, %v3895, %v3902
        %vm3904 = vcmp.eq.s32.totalorder %v3899, 2
        %v3905 = vxor.u32 %v3895, 2147483648
        %v3906 = vsel %vm3904, %v3905, %v3896
        %v3907 = vsel %vm3900, %v3903, %v3906
        %v3908 = vsel %vm3897, nan, %v3907
        %v3909 = vmul.f32 %v492, %v3804
        %v3910 = vmul.f32 %v595, %v3804
        %v3911 = vmul.f32 %v698, %v3804
        %v3912 = vmul.f32 %v801, %v3804
        %v3913 = vmul.f32 %v904, %v3804
        %v3914 = vmul.f32 %v1007, %v3804
        %v3915 = vmul.f32 %v1110, %v3804
        %v3916 = vmul.f32 %v1213, %v3804
        %v3917 = vmul.f32 %v1316, %v3804
        %v3918 = vmul.f32 %v1419, %v3804
        %v3919 = vmul.f32 %v1522, %v3804
        %v3920 = vmul.f32 %v1625, %v3804
        %v3921 = vmul.f32 %v1728, %v3804
        %v3922 = vmul.f32 %v1831, %v3804
        %v3923 = vmul.f32 %v1934, %v3804
        %v3924 = vmul.f32 %v2037, %v3804
        %v3925 = vmul.f32 %v2141, %v3908
        %v3926 = vmul.f32 %v2245, %v3908
        %v3927 = vmul.f32 %v2349, %v3908
        %v3928 = vmul.f32 %v2453, %v3908
        %v3929 = vmul.f32 %v2557, %v3908
        %v3930 = vmul.f32 %v2661, %v3908
        %v3931 = vmul.f32 %v2765, %v3908
        %v3932 = vmul.f32 %v2869, %v3908
        %v3933 = vmul.f32 %v2973, %v3908
        %v3934 = vmul.f32 %v3077, %v3908
        %v3935 = vmul.f32 %v3181, %v3908
        %v3936 = vmul.f32 %v3285, %v3908
        %v3937 = vmul.f32 %v3389, %v3908
        %v3938 = vmul.f32 %v3493, %v3908
        %v3939 = vmul.f32 %v3597, %v3908
        %v3940 = vmul.f32 %v3701, %v3908
        %v3941 = vsub.f32 %v3909, %v3925
        %v3942 = vsub.f32 %v3910, %v3926
        %v3943 = vsub.f32 %v3911, %v3927
        %v3944 = vsub.f32 %v3912, %v3928
        %v3945 = vsub.f32 %v3913, %v3929
        %v3946 = vsub.f32 %v3914, %v3930
        %v3947 = vsub.f32 %v3915, %v3931
        %v3948 = vsub.f32 %v3916, %v3932
        %v3949 = vsub.f32 %v3917, %v3933
        %v3950 = vsub.f32 %v3918, %v3934
        %v3951 = vsub.f32 %v3919, %v3935
        %v3952 = vsub.f32 %v3920, %v3936
        %v3953 = vsub.f32 %v3921, %v3937
        %v3954 = vsub.f32 %v3922, %v3938
        %v3955 = vsub.f32 %v3923, %v3939
        %v3956 = vsub.f32 %v3924, %v3940
        %v3957 = vmul.f32 %v2141, %v3804
        %v3958 = vmul.f32 %v2245, %v3804
        %v3959 = vmul.f32 %v2349, %v3804
        %v3960 = vmul.f32 %v2453, %v3804
        %v3961 = vmul.f32 %v2557, %v3804
        %v3962 = vmul.f32 %v2661, %v3804
        %v3963 = vmul.f32 %v2765, %v3804
        %v3964 = vmul.f32 %v2869, %v3804
        %v3965 = vmul.f32 %v2973, %v3804
        %v3966 = vmul.f32 %v3077, %v3804
        %v3967 = vmul.f32 %v3181, %v3804
        %v3968 = vmul.f32 %v3285, %v3804
        %v3969 = vmul.f32 %v3389, %v3804
        %v3970 = vmul.f32 %v3493, %v3804
        %v3971 = vmul.f32 %v3597, %v3804
        %v3972 = vmul.f32 %v3701, %v3804
        %v3973 = vmul.f32 %v492, %v3908
        %v3974 = vmul.f32 %v595, %v3908
        %v3975 = vmul.f32 %v698, %v3908
        %v3976 = vmul.f32 %v801, %v3908
        %v3977 = vmul.f32 %v904, %v3908
        %v3978 = vmul.f32 %v1007, %v3908
        %v3979 = vmul.f32 %v1110, %v3908
        %v3980 = vmul.f32 %v1213, %v3908
        %v3981 = vmul.f32 %v1316, %v3908
        %v3982 = vmul.f32 %v1419, %v3908
        %v3983 = vmul.f32 %v1522, %v3908
        %v3984 = vmul.f32 %v1625, %v3908
        %v3985 = vmul.f32 %v1728, %v3908
        %v3986 = vmul.f32 %v1831, %v3908
        %v3987 = vmul.f32 %v1934, %v3908
        %v3988 = vmul.f32 %v2037, %v3908
        %v3989 = vadd.f32 %v3957, %v3973
        %v3990 = vadd.f32 %v3958, %v3974
        %v3991 = vadd.f32 %v3959, %v3975
        %v3992 = vadd.f32 %v3960, %v3976
        %v3993 = vadd.f32 %v3961, %v3977
        %v3994 = vadd.f32 %v3962, %v3978
        %v3995 = vadd.f32 %v3963, %v3979
        %v3996 = vadd.f32 %v3964, %v3980
        %v3997 = vadd.f32 %v3965, %v3981
        %v3998 = vadd.f32 %v3966, %v3982
        %v3999 = vadd.f32 %v3967, %v3983
        %v4000 = vadd.f32 %v3968, %v3984
        %v4001 = vadd.f32 %v3969, %v3985
        %v4002 = vadd.f32 %v3970, %v3986
        %v4003 = vadd.f32 %v3971, %v3987
        %v4004 = vadd.f32 %v3972, %v3988
        %v4005 = vld [vmem:[%s222] sm:$0xff]
        %v4006 = vld [vmem:[%s222 + $0x8] sm:$0xff]
        %v4007 = vld [vmem:[%s222 + $0x10] sm:$0xff]
        %v4008 = vld [vmem:[%s222 + $0x18] sm:$0xff]
        %v4009 = vld [vmem:[%s222 + $0x20] sm:$0xff]
        %v4010 = vld [vmem:[%s222 + $0x28] sm:$0xff]
        %v4011 = vld [vmem:[%s222 + $0x30] sm:$0xff]
        %v4012 = vld [vmem:[%s222 + $0x38] sm:$0xff]
        %v4013 = vld [vmem:[%s222 + $0x40] sm:$0xff]
        %v4014 = vld [vmem:[%s222 + $0x48] sm:$0xff]
        %v4015 = vld [vmem:[%s222 + $0x50] sm:$0xff]
        %v4016 = vld [vmem:[%s222 + $0x58] sm:$0xff]
        %v4017 = vld [vmem:[%s222 + $0x60] sm:$0xff]
        %v4018 = vld [vmem:[%s222 + $0x68] sm:$0xff]
        %v4019 = vld [vmem:[%s222 + $0x70] sm:$0xff]
        %v4020 = vld [vmem:[%s222 + $0x78] sm:$0xff]
        %v4021 = vld [vmem:[%s231] sm:$0xff]
        %v4022 = vld [vmem:[%s231 + $0x8] sm:$0xff]
        %v4023 = vld [vmem:[%s231 + $0x10] sm:$0xff]
        %v4024 = vld [vmem:[%s231 + $0x18] sm:$0xff]
        %v4025 = vld [vmem:[%s231 + $0x20] sm:$0xff]
        %v4026 = vld [vmem:[%s231 + $0x28] sm:$0xff]
        %v4027 = vld [vmem:[%s231 + $0x30] sm:$0xff]
        %v4028 = vld [vmem:[%s231 + $0x38] sm:$0xff]
        %v4029 = vld [vmem:[%s231 + $0x40] sm:$0xff]
        %v4030 = vld [vmem:[%s231 + $0x48] sm:$0xff]
        %v4031 = vld [vmem:[%s231 + $0x50] sm:$0xff]
        %v4032 = vld [vmem:[%s231 + $0x58] sm:$0xff]
        %v4033 = vld [vmem:[%s231 + $0x60] sm:$0xff]
        %v4034 = vld [vmem:[%s231 + $0x68] sm:$0xff]
        %v4035 = vld [vmem:[%s231 + $0x70] sm:$0xff]
        %v4036 = vld [vmem:[%s231 + $0x78] sm:$0xff]
        %v4037 = vmul.f32 %v4005, %v3941
        %v4038 = vmul.f32 %v4006, %v3942
        %v4039 = vmul.f32 %v4007, %v3943
        %v4040 = vmul.f32 %v4008, %v3944
        %v4041 = vmul.f32 %v4009, %v3945
        %v4042 = vmul.f32 %v4010, %v3946
        %v4043 = vmul.f32 %v4011, %v3947
        %v4044 = vmul.f32 %v4012, %v3948
        %v4045 = vmul.f32 %v4013, %v3949
        %v4046 = vmul.f32 %v4014, %v3950
        %v4047 = vmul.f32 %v4015, %v3951
        %v4048 = vmul.f32 %v4016, %v3952
        %v4049 = vmul.f32 %v4017, %v3953
        %v4050 = vmul.f32 %v4018, %v3954
        %v4051 = vmul.f32 %v4019, %v3955
        %v4052 = vmul.f32 %v4020, %v3956
        %v4053 = vmul.f32 %v4021, %v3989
        %v4054 = vmul.f32 %v4022, %v3990
        %v4055 = vmul.f32 %v4023, %v3991
        %v4056 = vmul.f32 %v4024, %v3992
        %v4057 = vmul.f32 %v4025, %v3993
        %v4058 = vmul.f32 %v4026, %v3994
        %v4059 = vmul.f32 %v4027, %v3995
        %v4060 = vmul.f32 %v4028, %v3996
        %v4061 = vmul.f32 %v4029, %v3997
        %v4062 = vmul.f32 %v4030, %v3998
        %v4063 = vmul.f32 %v4031, %v3999
        %v4064 = vmul.f32 %v4032, %v4000
        %v4065 = vmul.f32 %v4033, %v4001
        %v4066 = vmul.f32 %v4034, %v4002
        %v4067 = vmul.f32 %v4035, %v4003
        %v4068 = vmul.f32 %v4036, %v4004
        %v4069 = vsub.f32 %v4037, %v4053
        %v4070 = vsub.f32 %v4038, %v4054
        %v4071 = vsub.f32 %v4039, %v4055
        %v4072 = vsub.f32 %v4040, %v4056
        %v4073 = vsub.f32 %v4041, %v4057
        %v4074 = vsub.f32 %v4042, %v4058
        %v4075 = vsub.f32 %v4043, %v4059
        %v4076 = vsub.f32 %v4044, %v4060
        %v4077 = vsub.f32 %v4045, %v4061
        %v4078 = vsub.f32 %v4046, %v4062
        %v4079 = vsub.f32 %v4047, %v4063
        %v4080 = vsub.f32 %v4048, %v4064
        %v4081 = vsub.f32 %v4049, %v4065
        %v4082 = vsub.f32 %v4050, %v4066
        %v4083 = vsub.f32 %v4051, %v4067
        %v4084 = vsub.f32 %v4052, %v4068
        %4085 = vst [vmem:[%s256] sm:$0xff] %v4069
        %4086 = vst [vmem:[%s256 + $0x8] sm:$0xff] %v4070
        %4087 = vst [vmem:[%s256 + $0x10] sm:$0xff] %v4071
        %4088 = vst [vmem:[%s256 + $0x18] sm:$0xff] %v4072
        %4089 = vst [vmem:[%s256 + $0x20] sm:$0xff] %v4073
        %4090 = vst [vmem:[%s256 + $0x28] sm:$0xff] %v4074
        %4091 = vst [vmem:[%s256 + $0x30] sm:$0xff] %v4075
        %4092 = vst [vmem:[%s256 + $0x38] sm:$0xff] %v4076
        %4093 = vst [vmem:[%s256 + $0x40] sm:$0xff] %v4077
        %4094 = vst [vmem:[%s256 + $0x48] sm:$0xff] %v4078
        %4095 = vst [vmem:[%s256 + $0x50] sm:$0xff] %v4079
        %4096 = vst [vmem:[%s256 + $0x58] sm:$0xff] %v4080
        %4097 = vst [vmem:[%s256 + $0x60] sm:$0xff] %v4081
        %4098 = vst [vmem:[%s256 + $0x68] sm:$0xff] %v4082
        %4099 = vst [vmem:[%s256 + $0x70] sm:$0xff] %v4083
        %4100 = vst [vmem:[%s256 + $0x78] sm:$0xff] %v4084
        %v4101 = vmul.f32 %v4005, %v3989
        %v4102 = vmul.f32 %v4006, %v3990
        %v4103 = vmul.f32 %v4007, %v3991
        %v4104 = vmul.f32 %v4008, %v3992
        %v4105 = vmul.f32 %v4009, %v3993
        %v4106 = vmul.f32 %v4010, %v3994
        %v4107 = vmul.f32 %v4011, %v3995
        %v4108 = vmul.f32 %v4012, %v3996
        %v4109 = vmul.f32 %v4013, %v3997
        %v4110 = vmul.f32 %v4014, %v3998
        %v4111 = vmul.f32 %v4015, %v3999
        %v4112 = vmul.f32 %v4016, %v4000
        %v4113 = vmul.f32 %v4017, %v4001
        %v4114 = vmul.f32 %v4018, %v4002
        %v4115 = vmul.f32 %v4019, %v4003
        %v4116 = vmul.f32 %v4020, %v4004
        %v4117 = vmul.f32 %v4021, %v3941
        %v4118 = vmul.f32 %v4022, %v3942
        %v4119 = vmul.f32 %v4023, %v3943
        %v4120 = vmul.f32 %v4024, %v3944
        %v4121 = vmul.f32 %v4025, %v3945
        %v4122 = vmul.f32 %v4026, %v3946
        %v4123 = vmul.f32 %v4027, %v3947
        %v4124 = vmul.f32 %v4028, %v3948
        %v4125 = vmul.f32 %v4029, %v3949
        %v4126 = vmul.f32 %v4030, %v3950
        %v4127 = vmul.f32 %v4031, %v3951
        %v4128 = vmul.f32 %v4032, %v3952
        %v4129 = vmul.f32 %v4033, %v3953
        %v4130 = vmul.f32 %v4034, %v3954
        %v4131 = vmul.f32 %v4035, %v3955
        %v4132 = vmul.f32 %v4036, %v3956
        %v4133 = vadd.f32 %v4101, %v4117
        %v4134 = vadd.f32 %v4102, %v4118
        %v4135 = vadd.f32 %v4103, %v4119
        %v4136 = vadd.f32 %v4104, %v4120
        %v4137 = vadd.f32 %v4105, %v4121
        %v4138 = vadd.f32 %v4106, %v4122
        %v4139 = vadd.f32 %v4107, %v4123
        %v4140 = vadd.f32 %v4108, %v4124
        %v4141 = vadd.f32 %v4109, %v4125
        %v4142 = vadd.f32 %v4110, %v4126
        %v4143 = vadd.f32 %v4111, %v4127
        %v4144 = vadd.f32 %v4112, %v4128
        %v4145 = vadd.f32 %v4113, %v4129
        %v4146 = vadd.f32 %v4114, %v4130
        %v4147 = vadd.f32 %v4115, %v4131
        %v4148 = vadd.f32 %v4116, %v4132
        %4149 = vst [vmem:[%s263] sm:$0xff] %v4133
        %4150 = vst [vmem:[%s263 + $0x8] sm:$0xff] %v4134
        %4151 = vst [vmem:[%s263 + $0x10] sm:$0xff] %v4135
        %4152 = vst [vmem:[%s263 + $0x18] sm:$0xff] %v4136
        %4153 = vst [vmem:[%s263 + $0x20] sm:$0xff] %v4137
        %4154 = vst [vmem:[%s263 + $0x28] sm:$0xff] %v4138
        %4155 = vst [vmem:[%s263 + $0x30] sm:$0xff] %v4139
        %4156 = vst [vmem:[%s263 + $0x38] sm:$0xff] %v4140
        %4157 = vst [vmem:[%s263 + $0x40] sm:$0xff] %v4141
        %4158 = vst [vmem:[%s263 + $0x48] sm:$0xff] %v4142
        %4159 = vst [vmem:[%s263 + $0x50] sm:$0xff] %v4143
        %4160 = vst [vmem:[%s263 + $0x58] sm:$0xff] %v4144
        %4161 = vst [vmem:[%s263 + $0x60] sm:$0xff] %v4145
        %4162 = vst [vmem:[%s263 + $0x68] sm:$0xff] %v4146
        %4163 = vst [vmem:[%s263 + $0x70] sm:$0xff] %v4147
        %4164 = vst [vmem:[%s263 + $0x78] sm:$0xff] %v4148
        %s4165 = sand.u32 %s105, 1
        %s4166 = scalar_lea.sflag [#allocation4], %s4165
        %s4167 = sand.u32 %s105, 1
        %s4168 = smul.addr %s4167, 128
        %s4169 = scalar_lea.vmem [#allocation7], %s4168
        %s4170 = sand.u32 %s133, 1
        %s4171 = scalar_lea.sflag [#allocation9], %s4170
        %s4172 = sand.u32 %s133, 1
        %s4173 = smul.addr %s4172, 128
        %s4174 = scalar_lea.vmem [#allocation8], %s4173
        // Predicated region
        $region37: #{tpu_custom_call.1} parent=27 // pred_check
          %p4175 = pneg %p115
        $region38: #{tpu_custom_call.1} parent=27 // pred_check_branch
          %4177 = sbr.rel (%p4175) target = $region40
        $region39: #{tpu_custom_call.1} parent=27 // pred_region
          %s4178 = smul.u32 16, %s31
          %s4180 = ssub.s32 2048, 2048
          %4181 = vsyncadd %s4166, %s4180
          %s4182 = smul.addr %s32, 16
          %s4183 = sadd.s32 %s4178, %s4182
          %s4184 = smul.addr %s4183, 128
          %s4185 = scalar_lea.hbm %s2, %s4184
          %s4186 = sshll.u32 %s4169, 4
          %s4187 = int_to_ptr.vmem [resolvable:$true] %s4186
          %4192 = dma.vmem_to_hbm [thread:$0]  %s4187, 2048, %s4185, %s4166, 128, 128, 8
        $region40: #{tpu_custom_call.1} parent=27 // pred_fallthru
          _
        // Predicated region
        $region41: #{tpu_custom_call.1} parent=27 // pred_check
          %p4193 = pneg %p143
        $region42: #{tpu_custom_call.1} parent=27 // pred_check_branch
          %4195 = sbr.rel (%p4193) target = $region44
        $region43: #{tpu_custom_call.1} parent=27 // pred_region
          %s4196 = smul.u32 16, %s31
          %s4198 = ssub.s32 2048, 2048
          %4199 = vsyncadd %s4171, %s4198
          %s4200 = smul.addr %s32, 16
          %s4201 = sadd.s32 %s4196, %s4200
          %s4202 = smul.addr %s4201, 128
          %s4203 = scalar_lea.hbm %s3, %s4202
          %s4204 = sshll.u32 %s4174, 4
          %s4205 = int_to_ptr.vmem [resolvable:$true] %s4204
          %4210 = dma.vmem_to_hbm [thread:$0]  %s4205, 2048, %s4203, %s4171, 128, 128, 8
        $region44: #{tpu_custom_call.1} parent=27 // pred_fallthru
          _
      $region28: #{tpu_custom_call.1} parent=5 // pred_fallthru
        _
      %p4211 = scmp.le.s32.totalorder 2, %s22
      // Predicated region
      $region45: #{tpu_custom_call.1} parent=5 // pred_check
        %p4212 = pneg %p4211
      $region46: #{tpu_custom_call.1} parent=5 // pred_check_branch
        %4214 = sbr.rel (%p4212) target = $region48
      $region47: #{tpu_custom_call.1} parent=5 // pred_region
        %s4215 = ssub.s32 %s22, 2
        // Predicated region
        $region49: #{tpu_custom_call.1} parent=47 // pred_check
          %p4216 = pneg %p121
        $region50: #{tpu_custom_call.1} parent=47 // pred_check_branch
          %4218 = sbr.rel (%p4216) target = $region52
        $region51: #{tpu_custom_call.1} parent=47 // pred_region
          %s4219 = sand.u32 %s106, 1
          %s4220 = scalar_lea.sflag [#allocation4], %s4219
          %s4221 = sand.u32 %s106, 1
          %s4222 = smul.addr %s4221, 128
          %s4223 = scalar_lea.vmem [#allocation7], %s4222
          %4224 = dma.done %s4220, 2048
        $region52: #{tpu_custom_call.1} parent=47 // pred_fallthru
          _
        // Predicated region
        $region53: #{tpu_custom_call.1} parent=47 // pred_check
          %p4225 = pneg %p149
        $region54: #{tpu_custom_call.1} parent=47 // pred_check_branch
          %4227 = sbr.rel (%p4225) target = $region56
        $region55: #{tpu_custom_call.1} parent=47 // pred_region
          %s4228 = sand.u32 %s134, 1
          %s4229 = scalar_lea.sflag [#allocation9], %s4228
          %s4230 = sand.u32 %s134, 1
          %s4231 = smul.addr %s4230, 128
          %s4232 = scalar_lea.vmem [#allocation8], %s4231
          %4233 = dma.done %s4229, 2048
        $region56: #{tpu_custom_call.1} parent=47 // pred_fallthru
          _
      $region48: #{tpu_custom_call.1} parent=5 // pred_fallthru
        _
    $region6: #{tpu_custom_call.1} parent=1 // loop_footer
      %s26 = sadd.s32 1, %s22
    $region7: #{tpu_custom_call.1} parent=1 // loop_footer_branch
      %21 = sbr.rel target = $region3
    $region8: #{tpu_custom_call.1} parent=1 // loop_exit
      _
    %4234 = vsyncpa [#allocation3], 1
    %s4235 = scalar_lea.sflag [#allocation3], 1
    %4236 = vsyncpa %s4235, 1
    %4237 = vsyncpa [#allocation6], 1
    %s4238 = scalar_lea.sflag [#allocation6], 1
    %4239 = vsyncpa %s4238, 1
    %4240 = vsyncpa [#allocation4], 1
    %s4241 = scalar_lea.sflag [#allocation4], 1
    %4242 = vsyncpa %s4241, 1
    %4243 = vsyncpa [#allocation9], 1
    %s4244 = scalar_lea.sflag [#allocation9], 1
    %4245 = vsyncpa %s4244, 1

</llo_original>
